<compile_context>
chip_gen: v6e
topology: v6e:2x2x1
jax: 0.10.0
libtpu: 0.0.40
codegen_flags: <defaults>
</compile_context>

<pallas_src>
import functools

import jax
import jax.numpy as jnp
import numpy as np
from jax import lax
from jax.experimental import pallas as pl
from jax.experimental.pallas import tpu as pltpu

NEG_SLOPE = 0.01               # nn.LeakyReLU default negative_slope
BN_EPS = 1e-5                  # nn.BatchNorm1d default eps
LANE = 128                     # TPU vreg lane width
MAX_GRAPHS_PER_STEP = 16       # Bg: multiple of 8; Bg*N = 128 rows at N = 8
VMEM_LIMIT = 48 * 1024 * 1024  # under v7x's 64 MiB physical; v5e/v6e have 128 MiB


def _leaky(x):
    return jnp.where(x > 0, x, NEG_SLOPE * x)


def _round_up(n, m):
    return ((n + m - 1) // m) * m


def _pad_axis(x, axis, target):
    pad = target - x.shape[axis]
    if pad <= 0:
        return x
    widths = [(0, 0)] * x.ndim
    widths[axis] = (0, pad)
    return jnp.pad(x, widths)


def _pick_graph_block(batch):
    """Graphs per grid step (Bg) and padded batch size."""
    if batch <= MAX_GRAPHS_PER_STEP:
        return batch, batch                      # single full-batch step
    return MAX_GRAPHS_PER_STEP, _round_up(batch, MAX_GRAPHS_PER_STEP)


# --------------------------------------------------------------------------
# Fused graph kernel: init Linear + n_conv GCN layers + mean pool + LeakyReLU.
# One grid step handles Bg graphs; adj / features stay VMEM-resident across
# all conv layers.  All weight matmuls run on the flattened (Bg*N, F) view.
# --------------------------------------------------------------------------
def _graph_kernel(node_ref, adj_ref, w0_ref, b0_ref, cw_ref, cb_ref, o_ref,
                  *, n_conv, mxu_dtype):
    bg, n, _ = node_ref.shape
    fp = o_ref.shape[-1]

    adj = adj_ref[...]                                     # (Bg, N, N) f32
    # Degree normalization, computed once and reordered off the MXU path:
    #   diag(1/deg) @ adj @ fea == (adj @ fea) * (1/deg)
    # Precondition (same as the PyTorch module): every node has degree > 0.
    deg = jnp.sum(adj, axis=-1, keepdims=True)             # (Bg, N, 1)
    inv_deg = pl.reciprocal(deg, approx=False)
    # NOTE: approx=True is a free EUP op in production; kept exact here so the
    # BatchNorm-amplified output still meets the 1e-4 test gate.

    adj_m = adj.astype(mxu_dtype)                          # 0/1 exact in bf16
    node = node_ref[...].reshape(bg * n, -1)               # fill MXU rows

    # init_transform on the flattened (Bg*N, Vp) view
    fea = jnp.dot(node.astype(mxu_dtype), w0_ref[...].astype(mxu_dtype),
                  preferred_element_type=jnp.float32) + b0_ref[...]

    for i in range(n_conv):                                # static unroll
        msg = jnp.einsum("gnm,gmf->gnf", adj_m,
                         fea.reshape(bg, n, fp).astype(mxu_dtype),
                         preferred_element_type=jnp.float32) * inv_deg
        fea = _leaky(jnp.dot(msg.reshape(bg * n, fp).astype(mxu_dtype),
                             cw_ref[i].astype(mxu_dtype),
                             preferred_element_type=jnp.float32) + cb_ref[i])

    pooled = jnp.mean(fea.reshape(bg, n, fp), axis=1)      # (Bg, Fp) lane-dense
    o_ref[...] = _leaky(pooled)
    # TODO(synk): for production graph sizes, tile the (N, N) adjacency over a
    # node (row) reduction grid axis with an f32 accumulator + pl.when
    # init/finalize so blocks fit v7x's 64 MiB VMEM.


def graph_forward(node_mat, adj_mat, w0, b0, conv_w, conv_b, *, bg, mxu_dtype):
    b_pad, n, vp = node_mat.shape
    fp = w0.shape[1]
    n_conv = conv_w.shape[0]
    assert b_pad % bg == 0
    return pl.pallas_call(
        functools.partial(_graph_kernel, n_conv=n_conv, mxu_dtype=mxu_dtype),
        out_shape=jax.ShapeDtypeStruct((b_pad, fp), jnp.float32),
        grid=(b_pad // bg,),
        in_specs=[
            pl.BlockSpec((bg, n, vp), lambda g: (g, 0, 0)),
            pl.BlockSpec((bg, n, n), lambda g: (g, 0, 0)),
            pl.BlockSpec((vp, fp), lambda g: (0, 0)),
            pl.BlockSpec((1, fp), lambda g: (0, 0)),
            pl.BlockSpec((n_conv, fp, fp), lambda g: (0, 0, 0)),
            pl.BlockSpec((n_conv, 1, fp), lambda g: (0, 0, 0)),
        ],
        out_specs=pl.BlockSpec((bg, fp), lambda g: (g, 0)),
        compiler_params=pltpu.CompilerParams(
            dimension_semantics=("parallel",),     # v7x: >=2 steps -> both TCs
            vmem_limit_bytes=VMEM_LIMIT,
        ),
    )(node_mat, adj_mat, w0, b0, conv_w, conv_b)


# --------------------------------------------------------------------------
# Fused MLP-head kernel: pooled_to_hidden Linear + BatchNorm1d (batch stats)
# + LeakyReLU + (n_hidden - 1) Linear+LeakyReLU layers + output Linear.
# Single grid step on a (B, Hp) VMEM-resident block; all dims 128-padded so
# every operand and the (B, Op) output are lane-dense.
# --------------------------------------------------------------------------
def _head_kernel(pooled_ref, w1_ref, b1_ref, g_ref, bt_ref, *rest, n_extra):
    if n_extra > 0:
        hw_ref, hb_ref, wo_ref, bo_ref, o_ref = rest
    else:
        wo_ref, bo_ref, o_ref = rest

    h = jnp.dot(pooled_ref[...], w1_ref[...],
                preferred_element_type=jnp.float32) + b1_ref[...]

    # BatchNorm1d: training-mode batch statistics (biased variance).
    mean = jnp.mean(h, axis=0, keepdims=True)
    var = jnp.mean((h - mean) ** 2, axis=0, keepdims=True)
    h = (h - mean) * lax.rsqrt(var + BN_EPS) * g_ref[...] + bt_ref[...]
    h = _leaky(h)
    # nn.Dropout(p=0.0) is the identity; no RNG needed.

    for i in range(n_extra):                               # static unroll
        h = _leaky(jnp.dot(h, hw_ref[i],
                           preferred_element_type=jnp.float32) + hb_ref[i])

    o_ref[...] = jnp.dot(h, wo_ref[...],
                         preferred_element_type=jnp.float32) + bo_ref[...]


def head_forward(pooled, w1, b1, gamma, beta, hid_w, hid_b, w_out, b_out):
    b, fp = pooled.shape
    hp = w1.shape[1]
    op = w_out.shape[1]
    n_extra = 0 if hid_w is None else hid_w.shape[0]

    def full(shape):
        nd = len(shape)
        return pl.BlockSpec(shape, lambda i, _nd=nd: (0,) * _nd)

    args = [pooled, w1, b1, gamma, beta]
    in_specs = [full((b, fp)), full((fp, hp)), full((1, hp)),
                full((1, hp)), full((1, hp))]
    if n_extra > 0:
        args += [hid_w, hid_b]
        in_specs += [full((n_extra, hp, hp)), full((n_extra, 1, hp))]
    args += [w_out, b_out]
    in_specs += [full((hp, op)), full((1, op))]

    return pl.pallas_call(
        functools.partial(_head_kernel, n_extra=n_extra),
        out_shape=jax.ShapeDtypeStruct((b, op), jnp.float32),
        grid=(1,),
        in_specs=in_specs,
        out_specs=full((b, op)),
        compiler_params=pltpu.CompilerParams(
            dimension_semantics=("arbitrary",),
            vmem_limit_bytes=VMEM_LIMIT,
        ),
    )(*args)


# --------------------------------------------------------------------------
# Parameter init (mimics nn.Linear U(-1/sqrt(fan_in), 1/sqrt(fan_in)))
# --------------------------------------------------------------------------
def init_params(key, node_vec_len, node_fea_len, hidden_fea_len,
                n_conv, n_hidden, n_outputs):
    def lin(k, fan_in, fan_out):
        k1, k2 = jax.random.split(k)
        bound = 1.0 / float(np.sqrt(fan_in))
        w = jax.random.uniform(k1, (fan_in, fan_out), jnp.float32, -bound, bound)
        b = jax.random.uniform(k2, (fan_out,), jnp.float32, -bound, bound)
        return w, b

    keys = jax.random.split(key, 3 + n_conv + max(n_hidden - 1, 0))
    p = {}
    p["init"] = lin(keys[0], node_vec_len, node_fea_len)
    p["conv"] = [lin(keys[1 + i], node_fea_len, node_fea_len) for i in range(n_conv)]
    p["pooled_to_hidden"] = lin(keys[1 + n_conv], node_fea_len, hidden_fea_len)
    p["bn"] = (jnp.ones((hidden_fea_len,), jnp.float32),
               jnp.zeros((hidden_fea_len,), jnp.float32))
    p["hidden"] = [lin(keys[2 + n_conv + i], hidden_fea_len, hidden_fea_len)
                   for i in range(n_hidden - 1)]
    p["out"] = lin(keys[-1], hidden_fea_len, n_outputs)
    return p


# --------------------------------------------------------------------------
# ChemGCN forward: lane-dense padding in the wrapper + exactly two pallas_calls.
# --------------------------------------------------------------------------
def chemgcn_forward(params, node_mat, adj_mat, *, mxu_dtype=jnp.float32):
    batch, n_nodes, v = node_mat.shape
    w0, b0 = params["init"]
    f = w0.shape[1]
    vp, fp = _round_up(v, LANE), _round_up(f, LANE)

    # ---- graph-side params / inputs, zero-padded lane-dense ----
    node_p = _pad_axis(node_mat, 2, vp)
    w0_p = _pad_axis(_pad_axis(w0, 0, vp), 1, fp)
    b0_p = _pad_axis(b0, 0, fp).reshape(1, fp)
    conv_w = jnp.stack([w for (w, _) in params["conv"]])
    conv_b = jnp.stack([b for (_, b) in params["conv"]])
    conv_w_p = _pad_axis(_pad_axis(conv_w, 1, fp), 2, fp)
    conv_b_p = _pad_axis(conv_b, 1, fp).reshape(-1, 1, fp)

    # ---- batch blocking: Bg graphs per grid step ----
    bg, b_pad = _pick_graph_block(batch)
    if b_pad > batch:
        # dummy graphs: zero features, self-loop adjacency (degree 1 -> finite)
        node_p = jnp.concatenate(
            [node_p, jnp.zeros((b_pad - batch, n_nodes, vp), node_p.dtype)], 0)
        eye = jnp.broadcast_to(jnp.eye(n_nodes, dtype=adj_mat.dtype),
                               (b_pad - batch, n_nodes, n_nodes))
        adj_p = jnp.concatenate([adj_mat, eye], 0)
    else:
        adj_p = adj_mat

    pooled_full = graph_forward(node_p, adj_p, w0_p, b0_p, conv_w_p, conv_b_p,
                                bg=bg, mxu_dtype=mxu_dtype)       # (B_pad, Fp)
    pooled = pooled_full[:batch]                                  # real graphs only
    neural_fingerprints = lax.stop_gradient(pooled[:, :f])        # clone().detach()

    # ---- head params, zero-padded lane-dense ----
    w1, b1 = params["pooled_to_hidden"]
    h = w1.shape[1]
    hp = _round_up(h, LANE)
    gamma, beta = params["bn"]
    w_out, b_out = params["out"]
    o = w_out.shape[1]
    op = _round_up(o, LANE)

    w1_p = _pad_axis(_pad_axis(w1, 0, fp), 1, hp)
    b1_p = _pad_axis(b1, 0, hp).reshape(1, hp)
    gamma_p = _pad_axis(gamma, 0, hp).reshape(1, hp)
    beta_p = _pad_axis(beta, 0, hp).reshape(1, hp)
    if params["hidden"]:
        hid_w = jnp.stack([w for (w, _) in params["hidden"]])
        hid_b = jnp.stack([b for (_, b) in params["hidden"]])
        hid_w_p = _pad_axis(_pad_axis(hid_w, 1, hp), 2, hp)
        hid_b_p = _pad_axis(hid_b, 1, hp).reshape(-1, 1, hp)
    else:
        hid_w_p, hid_b_p = None, None
    w_out_p = _pad_axis(_pad_axis(w_out, 0, hp), 1, op)
    b_out_p = _pad_axis(b_out, 0, op).reshape(1, op)

    out_full = head_forward(pooled, w1_p, b1_p, gamma_p, beta_p,
                            hid_w_p, hid_b_p, w_out_p, b_out_p)   # (B, Op)
    return out_full[:, :o], neural_fingerprints


# --------------------------------------------------------------------------
# Pure-JAX reference (mirrors the PyTorch module)
# --------------------------------------------------------------------------
def reference_forward(params, node_mat, adj_mat):
    w0, b0 = params["init"]
    fea = node_mat @ w0 + b0
    for (w, b) in params["conv"]:
        deg = adj_mat.sum(-1, keepdims=True)
        fea = _leaky(((adj_mat / deg) @ fea) @ w + b)
    pooled = _leaky(fea.mean(axis=1))
    nf = pooled
    w1, b1 = params["pooled_to_hidden"]
    h = pooled @ w1 + b1
    gamma, beta = params["bn"]
    mean = jnp.mean(h, axis=0, keepdims=True)
    var = jnp.mean((h - mean) ** 2, axis=0, keepdims=True)
    h = _leaky((h - mean) / jnp.sqrt(var + BN_EPS) * gamma + beta)
    for (w, b) in params["hidden"]:
        h = _leaky(h @ w + b)
    w_out, b_out = params["out"]
    return h @ w_out + b_out, nf


if __name__ == "__main__":
    # B = 32 so the graph grid is (2,) with Bg = 16 -> both v7x TCs get a step.
    B, N = 32, 8
    node_vec_len = 16
    node_fea_len = 32
    hidden_fea_len = 32
    n_conv, n_hidden, n_outputs = 2, 2, 1

    key = jax.random.PRNGKey(0)
    k_node, k_adj, k_param = jax.random.split(key, 3)

    node_mat = jax.random.normal(k_node, (B, N, node_vec_len), jnp.float32)
    # Random symmetric adjacency with self-loops (degree >= 1 everywhere)
    rand_adj = (jax.random.uniform(k_adj, (B, N, N)) > 0.5).astype(jnp.float32)
    adj_mat = jnp.clip(rand_adj + jnp.swapaxes(rand_adj, -1, -2)
                       + jnp.eye(N, dtype=jnp.float32)[None], 0.0, 1.0)

    params = init_params(k_param, node_vec_len, node_fea_len, hidden_fea_len,
                         n_conv, n_hidden, n_outputs)

    ref_out, ref_fp = reference_forward(params, node_mat, adj_mat)

    # f32-MXU path: tight correctness gate.
    out, fingerprints = chemgcn_forward(params, node_mat, adj_mat,
                                        mxu_dtype=jnp.float32)
    out = jax.block_until_ready(out)
    fingerprints = jax.block_until_ready(fingerprints)
    np.testing.assert_allclose(np.asarray(out), np.asarray(ref_out),
                               rtol=1e-4, atol=1e-4)
    np.testing.assert_allclose(np.asarray(fingerprints), np.asarray(ref_fp),
                               rtol=1e-4, atol=1e-4)

    # bf16-MXU path (production setting per perf review: bf16-native MXU, half
    # the fea/adj VMEM+DMA).  BatchNorm divides by a small batch-std which
    # amplifies bf16 rounding, so only the pre-BN fingerprints get an
    # elementwise check; the output is sanity-checked for finiteness.
    out16, fp16 = chemgcn_forward(params, node_mat, adj_mat,
                                  mxu_dtype=jnp.bfloat16)
    out16 = jax.block_until_ready(out16)
    fp16 = jax.block_until_ready(fp16)
    np.testing.assert_allclose(np.asarray(fp16), np.asarray(ref_fp),
                               rtol=5e-2, atol=5e-2)
    assert np.all(np.isfinite(np.asarray(out16)))

    print("KERNEL_OK")
</pallas_src>

<mosaic_0001>
module attributes {stable_mosaic.version = 11 : i64} {
  func.func @_graph_kernel(%arg0: i32, %arg1: memref<16x8x128xf32, #tpu.memory_space<vmem>>, %arg2: memref<16x8x8xf32, #tpu.memory_space<vmem>>, %arg3: memref<128x128xf32, #tpu.memory_space<vmem>>, %arg4: memref<1x128xf32, #tpu.memory_space<vmem>>, %arg5: memref<2x128x128xf32, #tpu.memory_space<vmem>>, %arg6: memref<2x1x128xf32, #tpu.memory_space<vmem>>, %arg7: memref<16x128xf32, #tpu.memory_space<vmem>>) attributes {dimension_semantics = [#tpu.dimension_semantics<parallel>], iteration_bounds = array<i64: 2>, scalar_prefetch = 0 : i64, scratch_operands = 0 : i64, tpu.core_type = #tpu.core_type<tc>, window_params = [{transform_indices = @transform_0, window_bounds = array<i64: 16, 8, 128>}, {transform_indices = @transform_1, window_bounds = array<i64: 16, 8, 8>}, {pipeline_mode = #tpu.pipeline_mode<synchronous>, transform_indices = @transform_2, window_bounds = array<i64: 128, 128>}, {pipeline_mode = #tpu.pipeline_mode<synchronous>, transform_indices = @transform_3, window_bounds = array<i64: 1, 128>}, {pipeline_mode = #tpu.pipeline_mode<synchronous>, transform_indices = @transform_4, window_bounds = array<i64: 2, 128, 128>}, {pipeline_mode = #tpu.pipeline_mode<synchronous>, transform_indices = @transform_5, window_bounds = array<i64: 2, 1, 128>}, {transform_indices = @transform_6, window_bounds = array<i64: 16, 128>}]} {
    %c0 = arith.constant 0 : index
    %c0_0 = arith.constant 0 : index
    %c0_1 = arith.constant 0 : index
    %0 = vector.load %arg2[%c0, %c0_0, %c0_1] : memref<16x8x8xf32, #tpu.memory_space<vmem>>, vector<16x8x8xf32>
    %cst = arith.constant dense<0.000000e+00> : vector<16x8xf32>
    %1 = vector.multi_reduction <add>, %0, %cst [2] : vector<16x8x8xf32> to vector<16x8xf32>
    %2 = vector.shape_cast %1 : vector<16x8xf32> to vector<16x8x1xf32>
    %3 = tpu.reciprocal %2 : vector<16x8x1xf32> -> vector<16x8x1xf32>
    %c0_2 = arith.constant 0 : index
    %c0_3 = arith.constant 0 : index
    %c0_4 = arith.constant 0 : index
    %4 = vector.load %arg1[%c0_2, %c0_3, %c0_4] : memref<16x8x128xf32, #tpu.memory_space<vmem>>, vector<16x8x128xf32>
    %5 = vector.shape_cast %4 : vector<16x8x128xf32> to vector<128x128xf32>
    %c0_5 = arith.constant 0 : index
    %c0_6 = arith.constant 0 : index
    %6 = vector.load %arg3[%c0_5, %c0_6] : memref<128x128xf32, #tpu.memory_space<vmem>>, vector<128x128xf32>
    %cst_7 = arith.constant dense<0.000000e+00> : vector<128x128xf32>
    %7 = tpu.matmul %5, %6, %cst_7 {dimension_numbers = #tpu.dot_dimension_numbers<[1], [0], [0], [1], [0, 0, 1, 1], [], []>} : vector<128x128xf32>, vector<128x128xf32>, vector<128x128xf32> -> vector<128x128xf32>
    %c0_8 = arith.constant 0 : index
    %c0_9 = arith.constant 0 : index
    %8 = vector.load %arg4[%c0_8, %c0_9] : memref<1x128xf32, #tpu.memory_space<vmem>>, vector<1x128xf32>
    %9 = vector.broadcast %8 : vector<1x128xf32> to vector<128x128xf32>
    %10 = arith.addf %7, %9 : vector<128x128xf32>
    %11 = vector.shape_cast %10 : vector<128x128xf32> to vector<16x8x128xf32>
    "tpu.trace_start"() <{level = 10 : i32, message = "gnm,gmf->gnf"}> : () -> ()
    %cst_10 = arith.constant dense<0.000000e+00> : vector<16x8x128xf32>
    %12 = tpu.matmul %0, %11, %cst_10 {dimension_numbers = #tpu.dot_dimension_numbers<[2], [1], [1], [2], [0, 0, 0, 1, 1, 2], [0], [0]>} : vector<16x8x8xf32>, vector<16x8x128xf32>, vector<16x8x128xf32> -> vector<16x8x128xf32>
    "tpu.trace_stop"() : () -> ()
    %13 = vector.broadcast %3 : vector<16x8x1xf32> to vector<16x8x128xf32>
    %14 = arith.mulf %12, %13 : vector<16x8x128xf32>
    %15 = vector.shape_cast %14 : vector<16x8x128xf32> to vector<128x128xf32>
    %c0_11 = arith.constant 0 : index
    %c0_12 = arith.constant 0 : index
    %c0_13 = arith.constant 0 : index
    %16 = vector.load %arg5[%c0_11, %c0_12, %c0_13] : memref<2x128x128xf32, #tpu.memory_space<vmem>>, vector<1x128x128xf32>
    %17 = vector.shape_cast %16 : vector<1x128x128xf32> to vector<128x128xf32>
    %cst_14 = arith.constant dense<0.000000e+00> : vector<128x128xf32>
    %18 = tpu.matmul %15, %17, %cst_14 {dimension_numbers = #tpu.dot_dimension_numbers<[1], [0], [0], [1], [0, 0, 1, 1], [], []>} : vector<128x128xf32>, vector<128x128xf32>, vector<128x128xf32> -> vector<128x128xf32>
    %c0_15 = arith.constant 0 : index
    %c0_16 = arith.constant 0 : index
    %c0_17 = arith.constant 0 : index
    %19 = vector.load %arg6[%c0_15, %c0_16, %c0_17] : memref<2x1x128xf32, #tpu.memory_space<vmem>>, vector<1x1x128xf32>
    %20 = vector.shape_cast %19 : vector<1x1x128xf32> to vector<1x128xf32>
    %21 = vector.broadcast %20 : vector<1x128xf32> to vector<128x128xf32>
    %22 = arith.addf %18, %21 : vector<128x128xf32>
    %cst_18 = arith.constant 0.000000e+00 : f32
    %23 = vector.broadcast %cst_18 : f32 to vector<128x128xf32>
    %24 = arith.cmpf ogt, %22, %23 : vector<128x128xf32>
    %cst_19 = arith.constant 0.00999999977 : f32
    %25 = vector.broadcast %cst_19 : f32 to vector<128x128xf32>
    %26 = arith.mulf %25, %22 : vector<128x128xf32>
    %27 = arith.select %24, %22, %26 : vector<128x128xi1>, vector<128x128xf32>
    %28 = vector.shape_cast %27 : vector<128x128xf32> to vector<16x8x128xf32>
    "tpu.trace_start"() <{level = 10 : i32, message = "gnm,gmf->gnf"}> : () -> ()
    %cst_20 = arith.constant dense<0.000000e+00> : vector<16x8x128xf32>
    %29 = tpu.matmul %0, %28, %cst_20 {dimension_numbers = #tpu.dot_dimension_numbers<[2], [1], [1], [2], [0, 0, 0, 1, 1, 2], [0], [0]>} : vector<16x8x8xf32>, vector<16x8x128xf32>, vector<16x8x128xf32> -> vector<16x8x128xf32>
    "tpu.trace_stop"() : () -> ()
    %30 = vector.broadcast %3 : vector<16x8x1xf32> to vector<16x8x128xf32>
    %31 = arith.mulf %29, %30 : vector<16x8x128xf32>
    %32 = vector.shape_cast %31 : vector<16x8x128xf32> to vector<128x128xf32>
    %c1 = arith.constant 1 : index
    %c0_21 = arith.constant 0 : index
    %c0_22 = arith.constant 0 : index
    %33 = vector.load %arg5[%c1, %c0_21, %c0_22] : memref<2x128x128xf32, #tpu.memory_space<vmem>>, vector<1x128x128xf32>
    %34 = vector.shape_cast %33 : vector<1x128x128xf32> to vector<128x128xf32>
    %cst_23 = arith.constant dense<0.000000e+00> : vector<128x128xf32>
    %35 = tpu.matmul %32, %34, %cst_23 {dimension_numbers = #tpu.dot_dimension_numbers<[1], [0], [0], [1], [0, 0, 1, 1], [], []>} : vector<128x128xf32>, vector<128x128xf32>, vector<128x128xf32> -> vector<128x128xf32>
    %c1_24 = arith.constant 1 : index
    %c0_25 = arith.constant 0 : index
    %c0_26 = arith.constant 0 : index
    %36 = vector.load %arg6[%c1_24, %c0_25, %c0_26] : memref<2x1x128xf32, #tpu.memory_space<vmem>>, vector<1x1x128xf32>
    %37 = vector.shape_cast %36 : vector<1x1x128xf32> to vector<1x128xf32>
    %38 = vector.broadcast %37 : vector<1x128xf32> to vector<128x128xf32>
    %39 = arith.addf %35, %38 : vector<128x128xf32>
    %cst_27 = arith.constant 0.000000e+00 : f32
    %40 = vector.broadcast %cst_27 : f32 to vector<128x128xf32>
    %41 = arith.cmpf ogt, %39, %40 : vector<128x128xf32>
    %cst_28 = arith.constant 0.00999999977 : f32
    %42 = vector.broadcast %cst_28 : f32 to vector<128x128xf32>
    %43 = arith.mulf %42, %39 : vector<128x128xf32>
    %44 = arith.select %41, %39, %43 : vector<128x128xi1>, vector<128x128xf32>
    %45 = vector.shape_cast %44 : vector<128x128xf32> to vector<16x8x128xf32>
    %cst_29 = arith.constant dense<0.000000e+00> : vector<16x128xf32>
    %46 = vector.multi_reduction <add>, %45, %cst_29 [1] : vector<16x8x128xf32> to vector<16x128xf32>
    %cst_30 = arith.constant 8.000000e+00 : f32
    %47 = vector.broadcast %cst_30 : f32 to vector<16x128xf32>
    %48 = arith.divf %46, %47 : vector<16x128xf32>
    %cst_31 = arith.constant 0.000000e+00 : f32
    %49 = vector.broadcast %cst_31 : f32 to vector<16x128xf32>
    %50 = arith.cmpf ogt, %48, %49 : vector<16x128xf32>
    %cst_32 = arith.constant 0.00999999977 : f32
    %51 = vector.broadcast %cst_32 : f32 to vector<16x128xf32>
    %52 = arith.mulf %51, %48 : vector<16x128xf32>
    %53 = arith.select %50, %48, %52 : vector<16x128xi1>, vector<16x128xf32>
    %c0_33 = arith.constant 0 : index
    %c0_34 = arith.constant 0 : index
    %54 = vector.load %arg7[%c0_33, %c0_34] : memref<16x128xf32, #tpu.memory_space<vmem>>, vector<16x128xf32>
    tpu.vector_store %arg7[%c0_33, %c0_34], %53 {strides = array<i32>} : memref<16x128xf32, #tpu.memory_space<vmem>>, vector<16x128xf32>,
    return
  }
  func.func @transform_0(%arg0: i32) -> (i32, i32, i32) {
    %c0_i32 = arith.constant 0 : i32
    %c0_i32_0 = arith.constant 0 : i32
    %c0_i32_1 = arith.constant 0 : i32
    return %arg0, %c0_i32, %c0_i32_0 : i32, i32, i32
  }
  func.func @transform_1(%arg0: i32) -> (i32, i32, i32) {
    %c0_i32 = arith.constant 0 : i32
    %c0_i32_0 = arith.constant 0 : i32
    %c0_i32_1 = arith.constant 0 : i32
    return %arg0, %c0_i32, %c0_i32_0 : i32, i32, i32
  }
  func.func @transform_2(%arg0: i32) -> (i32, i32) {
    %c0_i32 = arith.constant 0 : i32
    %c0_i32_0 = arith.constant 0 : i32
    %c0_i32_1 = arith.constant 0 : i32
    return %c0_i32, %c0_i32_0 : i32, i32
  }
  func.func @transform_3(%arg0: i32) -> (i32, i32) {
    %c0_i32 = arith.constant 0 : i32
    %c0_i32_0 = arith.constant 0 : i32
    %c0_i32_1 = arith.constant 0 : i32
    return %c0_i32, %c0_i32_0 : i32, i32
  }
  func.func @transform_4(%arg0: i32) -> (i32, i32, i32) {
    %c0_i32 = arith.constant 0 : i32
    %c0_i32_0 = arith.constant 0 : i32
    %c0_i32_1 = arith.constant 0 : i32
    %c0_i32_2 = arith.constant 0 : i32
    return %c0_i32, %c0_i32_0, %c0_i32_1 : i32, i32, i32
  }
  func.func @transform_5(%arg0: i32) -> (i32, i32, i32) {
    %c0_i32 = arith.constant 0 : i32
    %c0_i32_0 = arith.constant 0 : i32
    %c0_i32_1 = arith.constant 0 : i32
    %c0_i32_2 = arith.constant 0 : i32
    return %c0_i32, %c0_i32_0, %c0_i32_1 : i32, i32, i32
  }
  func.func @transform_6(%arg0: i32) -> (i32, i32) {
    %c0_i32 = arith.constant 0 : i32
    %c0_i32_0 = arith.constant 0 : i32
    return %arg0, %c0_i32 : i32, i32
  }
}

</mosaic_0001>

<llo_original>
// kernel: tpu_custom_call.1
$region0: #{tpu_custom_call.1}
  #allocation0 [shape = 'u32[]', space=smem, size = 0x4, offset = 0x4, fixed_abs, tag = 'smem constant byte address 0x4 - core index']
  #allocation1 [shape = 'u32[144,128]{1,0:T(1,128)}', space=vmem, size = 0x12000, scoped, tag = 'internal scratch']
  %s0 = inlined_call_operand.vmem [shape: f32[32,8,128], index: 0, kind: input, shape index: {}]
  %s1 = inlined_call_operand.vmem [shape: f32[32,8,8], index: 1, kind: input, shape index: {}]
  %s2 = inlined_call_operand.hbm [shape: f32[128,128], index: 2, kind: input, shape index: {}]
  %s3 = inlined_call_operand.vmem [shape: f32[1,128], index: 3, kind: input, shape index: {}]
  %s4 = inlined_call_operand.hbm [shape: f32[2,128,128], index: 4, kind: input, shape index: {}]
  %s5 = inlined_call_operand.vmem [shape: f32[2,1,128], index: 5, kind: input, shape index: {}]
  %s6 = inlined_call_operand.hbm [shape: f32[32,128], index: 6, kind: output, shape index: {}]
  %s7 = sld [smem:[#allocation0]]
  $region65: #{tpu_custom_call.1} parent=0
    _
  %s9 = ssub.s32 1, %s7
  %s10 = scalar_select 0, %s9, %s7
  $region1: #{tpu_custom_call.1} parent=0
    #allocation2 [shape = 'u8[65536]{0}', space=vmem, size = 0x10000, scoped, tag = 'input window, operand 2, single buffered']
    #allocation3 [shape = 's32[2]{0}', space=sflag, size = 0x8, scoped, tag = 'scoped memory for tpu_custom_call.1']
    #allocation4 [shape = 's32[2]{0}', space=sflag, size = 0x8, scoped, tag = 'scoped memory for tpu_custom_call.1']
    #allocation5 [shape = 'u8[131072]{0}', space=vmem, size = 0x20000, scoped, tag = 'input window, operand 4, single buffered']
    #allocation6 [shape = 's32[1]{0}', space=sflag, size = 0x4, scoped, tag = 'scoped memory for tpu_custom_call.1']
    #allocation7 [shape = 'u8[16384]{0}', space=vmem, size = 0x4000, scoped, tag = 'output window, operand 0']
    %11 = vsyncpa [#allocation3], 0
    %12 = vsyncpa [#allocation6], 0
    %13 = vsyncpa [#allocation4], 0
    %s14 = scalar_lea.sflag [#allocation4], 1
    %15 = vsyncpa %s14, 0
    loop: start=0, step=1, limit=4
    $region2: #{tpu_custom_call.1} parent=1 // loop_pre_header
      _
    $region3: #{tpu_custom_call.1} parent=1 // loop_header
      %s17 = sphi 0, %s21
      %p18 = scmp.ge.s32.totalorder %s17, 4
      %s27 = sphi 0, %s29
      %s30 = sphi 0, %s27
      %s31 = sphi 0, %s30
      %s47 = sphi 0, %s31
      %s53 = sphi 0, %s55
      %s56 = sphi 0, %s53
      %s57 = sphi 0, %s56
      %s73 = sphi 0, %s57
      %s77 = sphi 0, %s77
      %s79 = sphi 0, %s77
      %s80 = sphi 0, %s79
      %s94 = sphi 0, %s80
      %s98 = sphi 0, %s98
      %s100 = sphi 0, %s98
      %s101 = sphi 0, %s100
      %s115 = sphi 0, %s101
      %s119 = sphi 0, %s119
      %s121 = sphi 0, %s119
      %s122 = sphi 0, %s121
      %s136 = sphi 0, %s122
      %s140 = sphi 0, %s140
      %s142 = sphi 0, %s140
      %s143 = sphi 0, %s142
      %s157 = sphi 0, %s143
      %s163 = sphi 0, %s165
      %s166 = sphi 0, %s163
      %s167 = sphi 0, %s166
      %s183 = sphi 0, %s167
    $region4: #{tpu_custom_call.1} parent=1 // loop_header_branch
      %20 = sbr.rel (%p18) target = $region8
    $region5: #{tpu_custom_call.1} parent=1 // loop_body
      %s22 = ssub.s32 %s17, 1
      %s23 = ssub.s32 %s17, 2
      %s24 = sadd.s32 %s17, 1
      %s25 = ssub.s32 %s17, %s24
      %p26 = scmp.eq.s32.totalorder %s25, 0
      %s28 = sadd.s32 %s27, 1
      %s29 = scalar_select %p26, %s27, %s28
      %p32 = pneg %p26
      %p33 = scmp.eq.s32.totalorder %s17, 1
      %p34 = por %p32, %p33
      %p35 = scmp.ne.s32.totalorder %s27, %s30
      %p36 = scmp.eq.s32.totalorder %s17, 0
      %p37 = por %p35, %p36
      %p38 = scmp.ne.s32.totalorder %s27, %s30
      %p39 = scmp.eq.s32.totalorder %s22, 1
      %p40 = por %p38, %p39
      %p41 = scmp.ne.s32.totalorder %s30, %s31
      %p42 = scmp.eq.s32.totalorder %s22, 0
      %p43 = por %p41, %p42
      %p44 = scmp.ne.s32.totalorder %s30, %s31
      %p45 = scmp.eq.s32.totalorder %s23, 1
      %p46 = por %p44, %p45
      %p48 = scmp.ne.s32.totalorder %s31, %s47
      %p49 = scmp.eq.s32.totalorder %s23, 0
      %p50 = por %p48, %p49
      %s51 = ssub.s32 %s17, %s24
      %p52 = scmp.eq.s32.totalorder %s51, 0
      %s54 = sadd.s32 %s53, 1
      %s55 = scalar_select %p52, %s53, %s54
      %p58 = pneg %p52
      %p59 = scmp.eq.s32.totalorder %s17, 1
      %p60 = por %p58, %p59
      %p61 = scmp.ne.s32.totalorder %s53, %s56
      %p62 = scmp.eq.s32.totalorder %s17, 0
      %p63 = por %p61, %p62
      %p64 = scmp.ne.s32.totalorder %s53, %s56
      %p65 = scmp.eq.s32.totalorder %s22, 1
      %p66 = por %p64, %p65
      %p67 = scmp.ne.s32.totalorder %s56, %s57
      %p68 = scmp.eq.s32.totalorder %s22, 0
      %p69 = por %p67, %p68
      %p70 = scmp.ne.s32.totalorder %s56, %s57
      %p71 = scmp.eq.s32.totalorder %s23, 1
      %p72 = por %p70, %p71
      %p74 = scmp.ne.s32.totalorder %s57, %s73
      %p75 = scmp.eq.s32.totalorder %s23, 0
      %p76 = por %p74, %p75
      %s78 = sadd.s32 %s77, 1
      %p81 = scmp.eq.s32.totalorder %s17, 1
      %p82 = scmp.ne.s32.totalorder %s77, %s79
      %p83 = scmp.eq.s32.totalorder %s17, 0
      %p84 = por %p82, %p83
      %p85 = scmp.ne.s32.totalorder %s77, %s79
      %p86 = scmp.eq.s32.totalorder %s22, 1
      %p87 = por %p85, %p86
      %p88 = scmp.ne.s32.totalorder %s79, %s80
      %p89 = scmp.eq.s32.totalorder %s22, 0
      %p90 = por %p88, %p89
      %p91 = scmp.ne.s32.totalorder %s79, %s80
      %p92 = scmp.eq.s32.totalorder %s23, 1
      %p93 = por %p91, %p92
      %p95 = scmp.ne.s32.totalorder %s80, %s94
      %p96 = scmp.eq.s32.totalorder %s23, 0
      %p97 = por %p95, %p96
      %s99 = sadd.s32 %s98, 1
      %p102 = scmp.eq.s32.totalorder %s17, 1
      %p103 = scmp.ne.s32.totalorder %s98, %s100
      %p104 = scmp.eq.s32.totalorder %s17, 0
      %p105 = por %p103, %p104
      %p106 = scmp.ne.s32.totalorder %s98, %s100
      %p107 = scmp.eq.s32.totalorder %s22, 1
      %p108 = por %p106, %p107
      %p109 = scmp.ne.s32.totalorder %s100, %s101
      %p110 = scmp.eq.s32.totalorder %s22, 0
      %p111 = por %p109, %p110
      %p112 = scmp.ne.s32.totalorder %s100, %s101
      %p113 = scmp.eq.s32.totalorder %s23, 1
      %p114 = por %p112, %p113
      %p116 = scmp.ne.s32.totalorder %s101, %s115
      %p117 = scmp.eq.s32.totalorder %s23, 0
      %p118 = por %p116, %p117
      %s120 = sadd.s32 %s119, 1
      %p123 = scmp.eq.s32.totalorder %s17, 1
      %p124 = scmp.ne.s32.totalorder %s119, %s121
      %p125 = scmp.eq.s32.totalorder %s17, 0
      %p126 = por %p124, %p125
      %p127 = scmp.ne.s32.totalorder %s119, %s121
      %p128 = scmp.eq.s32.totalorder %s22, 1
      %p129 = por %p127, %p128
      %p130 = scmp.ne.s32.totalorder %s121, %s122
      %p131 = scmp.eq.s32.totalorder %s22, 0
      %p132 = por %p130, %p131
      %p133 = scmp.ne.s32.totalorder %s121, %s122
      %p134 = scmp.eq.s32.totalorder %s23, 1
      %p135 = por %p133, %p134
      %p137 = scmp.ne.s32.totalorder %s122, %s136
      %p138 = scmp.eq.s32.totalorder %s23, 0
      %p139 = por %p137, %p138
      %s141 = sadd.s32 %s140, 1
      %p144 = scmp.eq.s32.totalorder %s17, 1
      %p145 = scmp.ne.s32.totalorder %s140, %s142
      %p146 = scmp.eq.s32.totalorder %s17, 0
      %p147 = por %p145, %p146
      %p148 = scmp.ne.s32.totalorder %s140, %s142
      %p149 = scmp.eq.s32.totalorder %s22, 1
      %p150 = por %p148, %p149
      %p151 = scmp.ne.s32.totalorder %s142, %s143
      %p152 = scmp.eq.s32.totalorder %s22, 0
      %p153 = por %p151, %p152
      %p154 = scmp.ne.s32.totalorder %s142, %s143
      %p155 = scmp.eq.s32.totalorder %s23, 1
      %p156 = por %p154, %p155
      %p158 = scmp.ne.s32.totalorder %s143, %s157
      %p159 = scmp.eq.s32.totalorder %s23, 0
      %p160 = por %p158, %p159
      %s161 = ssub.s32 %s17, %s24
      %p162 = scmp.eq.s32.totalorder %s161, 0
      %s164 = sadd.s32 %s163, 1
      %s165 = scalar_select %p162, %s163, %s164
      %p168 = pneg %p162
      %p169 = scmp.eq.s32.totalorder %s17, 1
      %p170 = por %p168, %p169
      %p171 = scmp.ne.s32.totalorder %s163, %s166
      %p172 = scmp.eq.s32.totalorder %s17, 0
      %p173 = por %p171, %p172
      %p174 = scmp.ne.s32.totalorder %s163, %s166
      %p175 = scmp.eq.s32.totalorder %s22, 1
      %p176 = por %p174, %p175
      %p177 = scmp.ne.s32.totalorder %s166, %s167
      %p178 = scmp.eq.s32.totalorder %s22, 0
      %p179 = por %p177, %p178
      %p180 = scmp.ne.s32.totalorder %s166, %s167
      %p181 = scmp.eq.s32.totalorder %s23, 1
      %p182 = por %p180, %p181
      %p184 = scmp.ne.s32.totalorder %s167, %s183
      %p185 = scmp.eq.s32.totalorder %s23, 0
      %p186 = por %p184, %p185
      %p187 = scmp.le.s32.totalorder 1, %s17
      %p188 = scmp.lt.s32.totalorder %s17, 3
      %p189 = pnand %p187, %p188
      %p190 = pneg %p189
      // Predicated region
      $region9: #{tpu_custom_call.1} parent=5 // pred_check
        _
      $region10: #{tpu_custom_call.1} parent=5 // pred_check_branch
        %192 = sbr.rel (%p189) target = $region12
      $region11: #{tpu_custom_call.1} parent=5 // pred_region
        %s193 = ssub.s32 %s17, 1
        // Predicated region
        $region13: #{tpu_custom_call.1} parent=11 // pred_check
          %p194 = pneg %p90
        $region14: #{tpu_custom_call.1} parent=11 // pred_check_branch
          %196 = sbr.rel (%p194) target = $region16
        $region15: #{tpu_custom_call.1} parent=11 // pred_region
          %s198 = ssub.s32 2048, 2048
          %199 = vsyncadd [#allocation3], %s198
          %s200 = sshll.u32 [#allocation2], 4
          %s201 = int_to_ptr.vmem [resolvable:$true] %s200
          %206 = dma.hbm_to_vmem [thread:$0]  %s2, 2048, %s201, [#allocation3], 128, 128, 8
        $region16: #{tpu_custom_call.1} parent=11 // pred_fallthru
          _
        // Predicated region
        $region17: #{tpu_custom_call.1} parent=11 // pred_check
          %p207 = pneg %p111
        $region18: #{tpu_custom_call.1} parent=11 // pred_check_branch
          %209 = sbr.rel (%p207) target = $region20
        $region19: #{tpu_custom_call.1} parent=11 // pred_region
          _
        $region20: #{tpu_custom_call.1} parent=11 // pred_fallthru
          _
        // Predicated region
        $region21: #{tpu_custom_call.1} parent=11 // pred_check
          %p210 = pneg %p132
        $region22: #{tpu_custom_call.1} parent=11 // pred_check_branch
          %212 = sbr.rel (%p210) target = $region24
        $region23: #{tpu_custom_call.1} parent=11 // pred_region
          %s214 = ssub.s32 4096, 4096
          %215 = vsyncadd [#allocation6], %s214
          %s216 = sshll.u32 [#allocation5], 4
          %s217 = int_to_ptr.vmem [resolvable:$true] %s216
          %222 = dma.hbm_to_vmem [thread:$0]  %s4, 4096, %s217, [#allocation6], 128, 128, 8
        $region24: #{tpu_custom_call.1} parent=11 // pred_fallthru
          _
        // Predicated region
        $region25: #{tpu_custom_call.1} parent=11 // pred_check
          %p223 = pneg %p153
        $region26: #{tpu_custom_call.1} parent=11 // pred_check_branch
          %225 = sbr.rel (%p223) target = $region28
        $region27: #{tpu_custom_call.1} parent=11 // pred_region
          _
        $region28: #{tpu_custom_call.1} parent=11 // pred_fallthru
          _
      $region12: #{tpu_custom_call.1} parent=5 // pred_fallthru
        _
      %p226 = scmp.lt.s32.totalorder %s17, 2
      // Predicated region
      $region29: #{tpu_custom_call.1} parent=5 // pred_check
        %p227 = pneg %p226
      $region30: #{tpu_custom_call.1} parent=5 // pred_check_branch
        %229 = sbr.rel (%p227) target = $region32
      $region31: #{tpu_custom_call.1} parent=5 // pred_region
        // Predicated region
        $region33: #{tpu_custom_call.1} parent=31 // pred_check
          %p230 = pneg %p37
        $region34: #{tpu_custom_call.1} parent=31 // pred_check_branch
          %232 = sbr.rel (%p230) target = $region36
        $region35: #{tpu_custom_call.1} parent=31 // pred_region
          %s233 = smul.u32 16, %s17
          %p234 = scmp.lt.s32.totalorder %s233, 31
          %s235 = scalar_select %p234, %s233, 31
          %s236 = smul.addr %s235, 8
          %s237 = scalar_lea.vmem %s0, %s236
          %s238 = smul.u32 16, %s17
        $region36: #{tpu_custom_call.1} parent=31 // pred_fallthru
          _
        // Predicated region
        $region37: #{tpu_custom_call.1} parent=31 // pred_check
          %p239 = pneg %p63
        $region38: #{tpu_custom_call.1} parent=31 // pred_check_branch
          %241 = sbr.rel (%p239) target = $region40
        $region39: #{tpu_custom_call.1} parent=31 // pred_region
          %s242 = smul.u32 16, %s17
          %p243 = scmp.lt.s32.totalorder %s242, 31
          %s244 = scalar_select %p243, %s242, 31
          %s245 = smul.addr %s244, 8
          %s246 = scalar_lea.vmem %s1, %s245
          %s247 = smul.u32 16, %s17
        $region40: #{tpu_custom_call.1} parent=31 // pred_fallthru
          _
      $region32: #{tpu_custom_call.1} parent=5 // pred_fallthru
        _
      %p248 = scmp.le.s32.totalorder 1, %s17
      %p249 = scmp.lt.s32.totalorder %s17, 3
      %p250 = pnand %p248, %p249
      %p251 = pneg %p250
      // Predicated region
      $region41: #{tpu_custom_call.1} parent=5 // pred_check
        _
      $region42: #{tpu_custom_call.1} parent=5 // pred_check_branch
        %253 = sbr.rel (%p250) target = $region44
      $region43: #{tpu_custom_call.1} parent=5 // pred_region
        %s254 = ssub.s32 %s17, 1
        // Predicated region
        $region45: #{tpu_custom_call.1} parent=43 // pred_check
          %p255 = pneg %p90
        $region46: #{tpu_custom_call.1} parent=43 // pred_check_branch
          %257 = sbr.rel (%p255) target = $region48
        $region47: #{tpu_custom_call.1} parent=43 // pred_region
          %258 = dma.done [#allocation3], 2048
        $region48: #{tpu_custom_call.1} parent=43 // pred_fallthru
          _
        // Predicated region
        $region49: #{tpu_custom_call.1} parent=43 // pred_check
          %p259 = pneg %p132
        $region50: #{tpu_custom_call.1} parent=43 // pred_check_branch
          %261 = sbr.rel (%p259) target = $region52
        $region51: #{tpu_custom_call.1} parent=43 // pred_region
          %262 = dma.done [#allocation6], 4096
        $region52: #{tpu_custom_call.1} parent=43 // pred_fallthru
          _
        %s263 = smul.u32 16, %s22
        %p264 = scmp.lt.s32.totalorder %s263, 31
        %s265 = scalar_select %p264, %s263, 31
        %s266 = smul.addr %s265, 8
        %s267 = scalar_lea.vmem %s0, %s266
        %p268 = pneg %p43
        %p269 = pneg %p40
        %s270 = smul.u32 16, %s22
        %p271 = scmp.lt.s32.totalorder %s270, 31
        %s272 = scalar_select %p271, %s270, 31
        %s273 = smul.addr %s272, 8
        %s274 = scalar_lea.vmem %s1, %s273
        %p275 = pneg %p69
        %p276 = pneg %p66
        %p277 = pneg %p90
        %p278 = pneg %p87
        %p279 = pneg %p111
        %p280 = pneg %p108
        %p281 = pneg %p132
        %p282 = pneg %p129
        %p283 = pneg %p153
        %p284 = pneg %p150
        %p285 = pneg %p179
        %p286 = pneg %p176
        %s287 = sand.u32 %s166, 1
        %s288 = scalar_lea.sflag [#allocation4], %s287
        %s289 = sand.u32 %s166, 1
        %s290 = smul.addr %s289, 16
        %s291 = scalar_lea.vmem [#allocation7], %s290
        %s292 = smul.u32 16, %s22
        %p293 = scmp.lt.s32.totalorder %s292, 31
        %s294 = scalar_select %p293, %s292, 31
        %s295 = smul.addr %s294, 8
        %s296 = scalar_lea.vmem %s0, %s295
        %s297 = smul.u32 16, %s22
        %s298 = smul.u32 16, %s22
        %p299 = scmp.lt.s32.totalorder %s298, 31
        %s300 = scalar_select %p299, %s298, 31
        %s301 = smul.addr %s300, 8
        %s302 = scalar_lea.vmem %s1, %s301
        %s303 = smul.u32 16, %s22
        %s304 = smul.u32 2, %s22
        %v305 = vld [vmem:[%s302] sm:$0xff]
        %v306 = vld [vmem:[%s302 + $0x8] sm:$0xff]
        %v307 = vld [vmem:[%s302 + $0x10] sm:$0xff]
        %v308 = vld [vmem:[%s302 + $0x18] sm:$0xff]
        %v309 = vld [vmem:[%s302 + $0x20] sm:$0xff]
        %v310 = vld [vmem:[%s302 + $0x28] sm:$0xff]
        %v311 = vld [vmem:[%s302 + $0x30] sm:$0xff]
        %v312 = vld [vmem:[%s302 + $0x38] sm:$0xff]
        %v313 = vld [vmem:[%s302 + $0x40] sm:$0xff]
        %v314 = vld [vmem:[%s302 + $0x48] sm:$0xff]
        %v315 = vld [vmem:[%s302 + $0x50] sm:$0xff]
        %v316 = vld [vmem:[%s302 + $0x58] sm:$0xff]
        %v317 = vld [vmem:[%s302 + $0x60] sm:$0xff]
        %v318 = vld [vmem:[%s302 + $0x68] sm:$0xff]
        %v319 = vld [vmem:[%s302 + $0x70] sm:$0xff]
        %v320 = vld [vmem:[%s302 + $0x78] sm:$0xff]
        %vm321 = vcmask 64512
        %v322 = vsel %vm321, %v305, 0.0
        %323 = vadd.xlane.f32.xlu0 %v322
        %v324 = vpop.xlane.xlu0 %323
        %v325 = vsel %vm321, %v306, 0.0
        %326 = vadd.xlane.f32.xlu0 %v325
        %v327 = vpop.xlane.xlu0 %326
        %v328 = vsel %vm321, %v307, 0.0
        %329 = vadd.xlane.f32.xlu0 %v328
        %v330 = vpop.xlane.xlu0 %329
        %v331 = vsel %vm321, %v308, 0.0
        %332 = vadd.xlane.f32.xlu0 %v331
        %v333 = vpop.xlane.xlu0 %332
        %v334 = vsel %vm321, %v309, 0.0
        %335 = vadd.xlane.f32.xlu0 %v334
        %v336 = vpop.xlane.xlu0 %335
        %v337 = vsel %vm321, %v310, 0.0
        %338 = vadd.xlane.f32.xlu0 %v337
        %v339 = vpop.xlane.xlu0 %338
        %v340 = vsel %vm321, %v311, 0.0
        %341 = vadd.xlane.f32.xlu0 %v340
        %v342 = vpop.xlane.xlu0 %341
        %v343 = vsel %vm321, %v312, 0.0
        %344 = vadd.xlane.f32.xlu0 %v343
        %v345 = vpop.xlane.xlu0 %344
        %v346 = vsel %vm321, %v313, 0.0
        %347 = vadd.xlane.f32.xlu0 %v346
        %v348 = vpop.xlane.xlu0 %347
        %v349 = vsel %vm321, %v314, 0.0
        %350 = vadd.xlane.f32.xlu0 %v349
        %v351 = vpop.xlane.xlu0 %350
        %v352 = vsel %vm321, %v315, 0.0
        %353 = vadd.xlane.f32.xlu0 %v352
        %v354 = vpop.xlane.xlu0 %353
        %v355 = vsel %vm321, %v316, 0.0
        %356 = vadd.xlane.f32.xlu0 %v355
        %v357 = vpop.xlane.xlu0 %356
        %v358 = vsel %vm321, %v317, 0.0
        %359 = vadd.xlane.f32.xlu0 %v358
        %v360 = vpop.xlane.xlu0 %359
        %v361 = vsel %vm321, %v318, 0.0
        %362 = vadd.xlane.f32.xlu0 %v361
        %v363 = vpop.xlane.xlu0 %362
        %v364 = vsel %vm321, %v319, 0.0
        %365 = vadd.xlane.f32.xlu0 %v364
        %v366 = vpop.xlane.xlu0 %365
        %v367 = vsel %vm321, %v320, 0.0
        %368 = vadd.xlane.f32.xlu0 %v367
        %v369 = vpop.xlane.xlu0 %368
        %v370 = vrcp.pop %v324
        %v371 = vrcp.pop %v327
        %v372 = vrcp.pop %v330
        %v373 = vrcp.pop %v333
        %v374 = vrcp.pop %v336
        %v375 = vrcp.pop %v339
        %v376 = vrcp.pop %v342
        %v377 = vrcp.pop %v345
        %v378 = vrcp.pop %v348
        %v379 = vrcp.pop %v351
        %v380 = vrcp.pop %v354
        %v381 = vrcp.pop %v357
        %v382 = vrcp.pop %v360
        %v383 = vrcp.pop %v363
        %v384 = vrcp.pop %v366
        %v385 = vrcp.pop %v369
        %v386 = vld [vmem:[%s296] sm:$0xff]
        %v387 = vld [vmem:[%s296 + $0x8] sm:$0xff]
        %v388 = vld [vmem:[%s296 + $0x10] sm:$0xff]
        %v389 = vld [vmem:[%s296 + $0x18] sm:$0xff]
        %v390 = vld [vmem:[%s296 + $0x20] sm:$0xff]
        %v391 = vld [vmem:[%s296 + $0x28] sm:$0xff]
        %v392 = vld [vmem:[%s296 + $0x30] sm:$0xff]
        %v393 = vld [vmem:[%s296 + $0x38] sm:$0xff]
        %v394 = vld [vmem:[%s296 + $0x40] sm:$0xff]
        %v395 = vld [vmem:[%s296 + $0x48] sm:$0xff]
        %v396 = vld [vmem:[%s296 + $0x50] sm:$0xff]
        %v397 = vld [vmem:[%s296 + $0x58] sm:$0xff]
        %v398 = vld [vmem:[%s296 + $0x60] sm:$0xff]
        %v399 = vld [vmem:[%s296 + $0x68] sm:$0xff]
        %v400 = vld [vmem:[%s296 + $0x70] sm:$0xff]
        %v401 = vld [vmem:[%s296 + $0x78] sm:$0xff]
        %v402 = vld [vmem:[#allocation2] sm:$0xff]
        %v403 = vld [vmem:[#allocation2 + $0x8] sm:$0xff]
        %v404 = vld [vmem:[#allocation2 + $0x10] sm:$0xff]
        %v405 = vld [vmem:[#allocation2 + $0x18] sm:$0xff]
        %v406 = vld [vmem:[#allocation2 + $0x20] sm:$0xff]
        %v407 = vld [vmem:[#allocation2 + $0x28] sm:$0xff]
        %v408 = vld [vmem:[#allocation2 + $0x30] sm:$0xff]
        %v409 = vld [vmem:[#allocation2 + $0x38] sm:$0xff]
        %v410 = vld [vmem:[#allocation2 + $0x40] sm:$0xff]
        %v411 = vld [vmem:[#allocation2 + $0x48] sm:$0xff]
        %v412 = vld [vmem:[#allocation2 + $0x50] sm:$0xff]
        %v413 = vld [vmem:[#allocation2 + $0x58] sm:$0xff]
        %v414 = vld [vmem:[#allocation2 + $0x60] sm:$0xff]
        %v415 = vld [vmem:[#allocation2 + $0x68] sm:$0xff]
        %v416 = vld [vmem:[#allocation2 + $0x70] sm:$0xff]
        %v417 = vld [vmem:[#allocation2 + $0x78] sm:$0xff]
        %v418 = vld [vmem:[%s3] sm:$0x1]
        %v420 = vlaneseq
        %v421 = vshrl.u32 %v420, 7
        %v422 = vsub.s32 0, %v421
        %v423 = vrot.slane %v418, %v422
        %425 = vmatprep.subr.mxu0 0.0
        %426 = vmatpush1.msra.mxu0 %v417
        %427 = vmatprep.subr.mxu0 0.0
        %428 = vmatpush1.msra.mxu0 %v416
        %429 = vmatprep.subr.mxu0 0.0
        %430 = vmatpush1.msra.mxu0 %v415
        %431 = vmatprep.subr.mxu0 0.0
        %432 = vmatpush1.msra.mxu0 %v414
        %433 = vmatprep.subr.mxu0 0.0
        %434 = vmatpush1.msra.mxu0 %v413
        %435 = vmatprep.subr.mxu0 0.0
        %436 = vmatpush1.msra.mxu0 %v412
        %437 = vmatprep.subr.mxu0 0.0
        %438 = vmatpush1.msra.mxu0 %v411
        %439 = vmatprep.subr.mxu0 0.0
        %440 = vmatpush1.msra.mxu0 %v410
        %441 = vmatprep.subr.mxu0 0.0
        %442 = vmatpush1.msra.mxu0 %v409
        %443 = vmatprep.subr.mxu0 0.0
        %444 = vmatpush1.msra.mxu0 %v408
        %445 = vmatprep.subr.mxu0 0.0
        %446 = vmatpush1.msra.mxu0 %v407
        %447 = vmatprep.subr.mxu0 0.0
        %448 = vmatpush1.msra.mxu0 %v406
        %449 = vmatprep.subr.mxu0 0.0
        %450 = vmatpush1.msra.mxu0 %v405
        %451 = vmatprep.subr.mxu0 0.0
        %452 = vmatpush1.msra.mxu0 %v404
        %453 = vmatprep.subr.mxu0 0.0
        %454 = vmatpush1.msra.mxu0 %v403
        %455 = vmatprep.subr.mxu0 0.0
        %456 = vmatpush1.msra.mxu0 %v402
        %457 = vmatprep.subr.mxu0 0.0
        %458 = vmatpush2.msra.mxu0 0.0
        %459 = vmatprep.subr.mxu0 0.0
        %460 = vmatpush2.msra.mxu0 0.0
        %461 = vmatprep.subr.mxu0 0.0
        %462 = vmatpush2.msra.mxu0 0.0
        %463 = vmatprep.subr.mxu0 0.0
        %464 = vmatpush2.msra.mxu0 0.0
        %465 = vmatprep.subr.mxu0 0.0
        %466 = vmatpush2.msra.mxu0 0.0
        %467 = vmatprep.subr.mxu0 0.0
        %468 = vmatpush2.msra.mxu0 0.0
        %469 = vmatprep.subr.mxu0 0.0
        %470 = vmatpush2.msra.mxu0 0.0
        %471 = vmatprep.subr.mxu0 0.0
        %472 = vmatpush2.msra.mxu0 0.0
        %473 = vmatprep.subr.mxu0 0.0
        %474 = vmatpush2.msra.mxu0 0.0
        %475 = vmatprep.subr.mxu0 0.0
        %476 = vmatpush2.msra.mxu0 0.0
        %477 = vmatprep.subr.mxu0 0.0
        %478 = vmatpush2.msra.mxu0 0.0
        %479 = vmatprep.subr.mxu0 0.0
        %480 = vmatpush2.msra.mxu0 0.0
        %481 = vmatprep.subr.mxu0 0.0
        %482 = vmatpush2.msra.mxu0 0.0
        %483 = vmatprep.subr.mxu0 0.0
        %484 = vmatpush2.msra.mxu0 0.0
        %485 = vmatprep.subr.mxu0 0.0
        %486 = vmatpush2.msra.mxu0 0.0
        %487 = vmatprep.subr.mxu0 0.0
        %488 = vmatpush2.msra.mxu0 0.0
        %489 = vmatprep.mubr.f32.mxu0 0.0
        %490 = vmatmul.mubr.f32.gmra.mxu0 %v386
        %v491 = vpop.f32.mrf.mxu0
        %v492 = vadd.f32 %v423, %v491
        %v493 = vpop.f32.mrf.mxu0
        %494 = vmatprep.mubr.f32.mxu0 0.0
        %495 = vmatmul.mubr.f32.gmra.mxu0 %v387
        %v496 = vpop.f32.mrf.mxu0
        %v497 = vadd.f32 %v423, %v496
        %v498 = vpop.f32.mrf.mxu0
        %499 = vmatprep.mubr.f32.mxu0 0.0
        %500 = vmatmul.mubr.f32.gmra.mxu0 %v388
        %v501 = vpop.f32.mrf.mxu0
        %v502 = vadd.f32 %v423, %v501
        %v503 = vpop.f32.mrf.mxu0
        %504 = vmatprep.mubr.f32.mxu0 0.0
        %505 = vmatmul.mubr.f32.gmra.mxu0 %v389
        %v506 = vpop.f32.mrf.mxu0
        %v507 = vadd.f32 %v423, %v506
        %v508 = vpop.f32.mrf.mxu0
        %509 = vmatprep.mubr.f32.mxu0 0.0
        %510 = vmatmul.mubr.f32.gmra.mxu0 %v390
        %v511 = vpop.f32.mrf.mxu0
        %v512 = vadd.f32 %v423, %v511
        %v513 = vpop.f32.mrf.mxu0
        %514 = vmatprep.mubr.f32.mxu0 0.0
        %515 = vmatmul.mubr.f32.gmra.mxu0 %v391
        %v516 = vpop.f32.mrf.mxu0
        %v517 = vadd.f32 %v423, %v516
        %v518 = vpop.f32.mrf.mxu0
        %519 = vmatprep.mubr.f32.mxu0 0.0
        %520 = vmatmul.mubr.f32.gmra.mxu0 %v392
        %v521 = vpop.f32.mrf.mxu0
        %v522 = vadd.f32 %v423, %v521
        %v523 = vpop.f32.mrf.mxu0
        %524 = vmatprep.mubr.f32.mxu0 0.0
        %525 = vmatmul.mubr.f32.gmra.mxu0 %v393
        %v526 = vpop.f32.mrf.mxu0
        %v527 = vadd.f32 %v423, %v526
        %v528 = vpop.f32.mrf.mxu0
        %529 = vmatprep.mubr.f32.mxu0 0.0
        %530 = vmatmul.mubr.f32.gmra.mxu0 %v394
        %v531 = vpop.f32.mrf.mxu0
        %v532 = vadd.f32 %v423, %v531
        %v533 = vpop.f32.mrf.mxu0
        %534 = vmatprep.mubr.f32.mxu0 0.0
        %535 = vmatmul.mubr.f32.gmra.mxu0 %v395
        %v536 = vpop.f32.mrf.mxu0
        %v537 = vadd.f32 %v423, %v536
        %v538 = vpop.f32.mrf.mxu0
        %539 = vmatprep.mubr.f32.mxu0 0.0
        %540 = vmatmul.mubr.f32.gmra.mxu0 %v396
        %v541 = vpop.f32.mrf.mxu0
        %v542 = vadd.f32 %v423, %v541
        %v543 = vpop.f32.mrf.mxu0
        %544 = vmatprep.mubr.f32.mxu0 0.0
        %545 = vmatmul.mubr.f32.gmra.mxu0 %v397
        %v546 = vpop.f32.mrf.mxu0
        %v547 = vadd.f32 %v423, %v546
        %v548 = vpop.f32.mrf.mxu0
        %549 = vmatprep.mubr.f32.mxu0 0.0
        %550 = vmatmul.mubr.f32.gmra.mxu0 %v398
        %v551 = vpop.f32.mrf.mxu0
        %v552 = vadd.f32 %v423, %v551
        %v553 = vpop.f32.mrf.mxu0
        %554 = vmatprep.mubr.f32.mxu0 0.0
        %555 = vmatmul.mubr.f32.gmra.mxu0 %v399
        %v556 = vpop.f32.mrf.mxu0
        %v557 = vadd.f32 %v423, %v556
        %v558 = vpop.f32.mrf.mxu0
        %559 = vmatprep.mubr.f32.mxu0 0.0
        %560 = vmatmul.mubr.f32.gmra.mxu0 %v400
        %v561 = vpop.f32.mrf.mxu0
        %v562 = vadd.f32 %v423, %v561
        %v563 = vpop.f32.mrf.mxu0
        %564 = vmatprep.mubr.f32.mxu0 0.0
        %565 = vmatmul.mubr.f32.gmra.mxu0 %v401
        %v566 = vpop.f32.mrf.mxu0
        %v567 = vadd.f32 %v423, %v566
        %v568 = vpop.f32.mrf.mxu0
        %569 = vdwg.mxu0
        %v571 = vsel %vm321, %v305, 0
        %573 = vmatprep.subr.mxu0 0.0
        %574 = vmatpush1.msra.mxu0 0.0
        %575 = vmatprep.subr.mxu0 0.0
        %576 = vmatpush1.msra.mxu0 0.0
        %577 = vmatprep.subr.mxu0 0.0
        %578 = vmatpush1.msra.mxu0 0.0
        %579 = vmatprep.subr.mxu0 0.0
        %580 = vmatpush1.msra.mxu0 0.0
        %581 = vmatprep.subr.mxu0 0.0
        %582 = vmatpush1.msra.mxu0 0.0
        %583 = vmatprep.subr.mxu0 0.0
        %584 = vmatpush1.msra.mxu0 0.0
        %585 = vmatprep.subr.mxu0 0.0
        %586 = vmatpush1.msra.mxu0 0.0
        %587 = vmatprep.subr.mxu0 0.0
        %588 = vmatpush1.msra.mxu0 0.0
        %589 = vmatprep.subr.mxu0 0.0
        %590 = vmatpush1.msra.mxu0 0.0
        %591 = vmatprep.subr.mxu0 0.0
        %592 = vmatpush1.msra.mxu0 0.0
        %593 = vmatprep.subr.mxu0 0.0
        %594 = vmatpush1.msra.mxu0 0.0
        %595 = vmatprep.subr.mxu0 0.0
        %596 = vmatpush1.msra.mxu0 0.0
        %597 = vmatprep.subr.mxu0 0.0
        %598 = vmatpush1.msra.mxu0 0.0
        %599 = vmatprep.subr.mxu0 0.0
        %600 = vmatpush1.msra.mxu0 0.0
        %601 = vmatprep.subr.mxu0 0.0
        %602 = vmatpush1.msra.mxu0 0.0
        %603 = vmatprep.subr.mxu0 0.0
        %604 = vmatpush1.msra.mxu0 %v492
        %605 = vmatprep.subr.mxu0 0.0
        %606 = vmatpush2.msra.mxu0 0.0
        %607 = vmatprep.subr.mxu0 0.0
        %608 = vmatpush2.msra.mxu0 0.0
        %609 = vmatprep.subr.mxu0 0.0
        %610 = vmatpush2.msra.mxu0 0.0
        %611 = vmatprep.subr.mxu0 0.0
        %612 = vmatpush2.msra.mxu0 0.0
        %613 = vmatprep.subr.mxu0 0.0
        %614 = vmatpush2.msra.mxu0 0.0
        %615 = vmatprep.subr.mxu0 0.0
        %616 = vmatpush2.msra.mxu0 0.0
        %617 = vmatprep.subr.mxu0 0.0
        %618 = vmatpush2.msra.mxu0 0.0
        %619 = vmatprep.subr.mxu0 0.0
        %620 = vmatpush2.msra.mxu0 0.0
        %621 = vmatprep.subr.mxu0 0.0
        %622 = vmatpush2.msra.mxu0 0.0
        %623 = vmatprep.subr.mxu0 0.0
        %624 = vmatpush2.msra.mxu0 0.0
        %625 = vmatprep.subr.mxu0 0.0
        %626 = vmatpush2.msra.mxu0 0.0
        %627 = vmatprep.subr.mxu0 0.0
        %628 = vmatpush2.msra.mxu0 0.0
        %629 = vmatprep.subr.mxu0 0.0
        %630 = vmatpush2.msra.mxu0 0.0
        %631 = vmatprep.subr.mxu0 0.0
        %632 = vmatpush2.msra.mxu0 0.0
        %633 = vmatprep.subr.mxu0 0.0
        %634 = vmatpush2.msra.mxu0 0.0
        %635 = vmatprep.subr.mxu0 0.0
        %636 = vmatpush2.msra.mxu0 0.0
        %637 = vmatprep.mubr.f32.mxu0 0.0
        %638 = vmatmul.mubr.f32.gmra.mxu0 %v571
        %v639 = vpop.f32.mrf.mxu0
        %v640 = vadd.f32 0.0, %v639
        %v641 = vpop.f32.mrf.mxu0
        %642 = vdwg.mxu0
        %v644 = vsel %vm321, %v306, 0
        %646 = vmatprep.subr.mxu0 0.0
        %647 = vmatpush1.msra.mxu0 0.0
        %648 = vmatprep.subr.mxu0 0.0
        %649 = vmatpush1.msra.mxu0 0.0
        %650 = vmatprep.subr.mxu0 0.0
        %651 = vmatpush1.msra.mxu0 0.0
        %652 = vmatprep.subr.mxu0 0.0
        %653 = vmatpush1.msra.mxu0 0.0
        %654 = vmatprep.subr.mxu0 0.0
        %655 = vmatpush1.msra.mxu0 0.0
        %656 = vmatprep.subr.mxu0 0.0
        %657 = vmatpush1.msra.mxu0 0.0
        %658 = vmatprep.subr.mxu0 0.0
        %659 = vmatpush1.msra.mxu0 0.0
        %660 = vmatprep.subr.mxu0 0.0
        %661 = vmatpush1.msra.mxu0 0.0
        %662 = vmatprep.subr.mxu0 0.0
        %663 = vmatpush1.msra.mxu0 0.0
        %664 = vmatprep.subr.mxu0 0.0
        %665 = vmatpush1.msra.mxu0 0.0
        %666 = vmatprep.subr.mxu0 0.0
        %667 = vmatpush1.msra.mxu0 0.0
        %668 = vmatprep.subr.mxu0 0.0
        %669 = vmatpush1.msra.mxu0 0.0
        %670 = vmatprep.subr.mxu0 0.0
        %671 = vmatpush1.msra.mxu0 0.0
        %672 = vmatprep.subr.mxu0 0.0
        %673 = vmatpush1.msra.mxu0 0.0
        %674 = vmatprep.subr.mxu0 0.0
        %675 = vmatpush1.msra.mxu0 0.0
        %676 = vmatprep.subr.mxu0 0.0
        %677 = vmatpush1.msra.mxu0 %v497
        %678 = vmatprep.subr.mxu0 0.0
        %679 = vmatpush2.msra.mxu0 0.0
        %680 = vmatprep.subr.mxu0 0.0
        %681 = vmatpush2.msra.mxu0 0.0
        %682 = vmatprep.subr.mxu0 0.0
        %683 = vmatpush2.msra.mxu0 0.0
        %684 = vmatprep.subr.mxu0 0.0
        %685 = vmatpush2.msra.mxu0 0.0
        %686 = vmatprep.subr.mxu0 0.0
        %687 = vmatpush2.msra.mxu0 0.0
        %688 = vmatprep.subr.mxu0 0.0
        %689 = vmatpush2.msra.mxu0 0.0
        %690 = vmatprep.subr.mxu0 0.0
        %691 = vmatpush2.msra.mxu0 0.0
        %692 = vmatprep.subr.mxu0 0.0
        %693 = vmatpush2.msra.mxu0 0.0
        %694 = vmatprep.subr.mxu0 0.0
        %695 = vmatpush2.msra.mxu0 0.0
        %696 = vmatprep.subr.mxu0 0.0
        %697 = vmatpush2.msra.mxu0 0.0
        %698 = vmatprep.subr.mxu0 0.0
        %699 = vmatpush2.msra.mxu0 0.0
        %700 = vmatprep.subr.mxu0 0.0
        %701 = vmatpush2.msra.mxu0 0.0
        %702 = vmatprep.subr.mxu0 0.0
        %703 = vmatpush2.msra.mxu0 0.0
        %704 = vmatprep.subr.mxu0 0.0
        %705 = vmatpush2.msra.mxu0 0.0
        %706 = vmatprep.subr.mxu0 0.0
        %707 = vmatpush2.msra.mxu0 0.0
        %708 = vmatprep.subr.mxu0 0.0
        %709 = vmatpush2.msra.mxu0 0.0
        %710 = vmatprep.mubr.f32.mxu0 0.0
        %711 = vmatmul.mubr.f32.gmra.mxu0 %v644
        %v712 = vpop.f32.mrf.mxu0
        %v713 = vadd.f32 0.0, %v712
        %v714 = vpop.f32.mrf.mxu0
        %715 = vdwg.mxu0
        %v717 = vsel %vm321, %v307, 0
        %719 = vmatprep.subr.mxu0 0.0
        %720 = vmatpush1.msra.mxu0 0.0
        %721 = vmatprep.subr.mxu0 0.0
        %722 = vmatpush1.msra.mxu0 0.0
        %723 = vmatprep.subr.mxu0 0.0
        %724 = vmatpush1.msra.mxu0 0.0
        %725 = vmatprep.subr.mxu0 0.0
        %726 = vmatpush1.msra.mxu0 0.0
        %727 = vmatprep.subr.mxu0 0.0
        %728 = vmatpush1.msra.mxu0 0.0
        %729 = vmatprep.subr.mxu0 0.0
        %730 = vmatpush1.msra.mxu0 0.0
        %731 = vmatprep.subr.mxu0 0.0
        %732 = vmatpush1.msra.mxu0 0.0
        %733 = vmatprep.subr.mxu0 0.0
        %734 = vmatpush1.msra.mxu0 0.0
        %735 = vmatprep.subr.mxu0 0.0
        %736 = vmatpush1.msra.mxu0 0.0
        %737 = vmatprep.subr.mxu0 0.0
        %738 = vmatpush1.msra.mxu0 0.0
        %739 = vmatprep.subr.mxu0 0.0
        %740 = vmatpush1.msra.mxu0 0.0
        %741 = vmatprep.subr.mxu0 0.0
        %742 = vmatpush1.msra.mxu0 0.0
        %743 = vmatprep.subr.mxu0 0.0
        %744 = vmatpush1.msra.mxu0 0.0
        %745 = vmatprep.subr.mxu0 0.0
        %746 = vmatpush1.msra.mxu0 0.0
        %747 = vmatprep.subr.mxu0 0.0
        %748 = vmatpush1.msra.mxu0 0.0
        %749 = vmatprep.subr.mxu0 0.0
        %750 = vmatpush1.msra.mxu0 %v502
        %751 = vmatprep.subr.mxu0 0.0
        %752 = vmatpush2.msra.mxu0 0.0
        %753 = vmatprep.subr.mxu0 0.0
        %754 = vmatpush2.msra.mxu0 0.0
        %755 = vmatprep.subr.mxu0 0.0
        %756 = vmatpush2.msra.mxu0 0.0
        %757 = vmatprep.subr.mxu0 0.0
        %758 = vmatpush2.msra.mxu0 0.0
        %759 = vmatprep.subr.mxu0 0.0
        %760 = vmatpush2.msra.mxu0 0.0
        %761 = vmatprep.subr.mxu0 0.0
        %762 = vmatpush2.msra.mxu0 0.0
        %763 = vmatprep.subr.mxu0 0.0
        %764 = vmatpush2.msra.mxu0 0.0
        %765 = vmatprep.subr.mxu0 0.0
        %766 = vmatpush2.msra.mxu0 0.0
        %767 = vmatprep.subr.mxu0 0.0
        %768 = vmatpush2.msra.mxu0 0.0
        %769 = vmatprep.subr.mxu0 0.0
        %770 = vmatpush2.msra.mxu0 0.0
        %771 = vmatprep.subr.mxu0 0.0
        %772 = vmatpush2.msra.mxu0 0.0
        %773 = vmatprep.subr.mxu0 0.0
        %774 = vmatpush2.msra.mxu0 0.0
        %775 = vmatprep.subr.mxu0 0.0
        %776 = vmatpush2.msra.mxu0 0.0
        %777 = vmatprep.subr.mxu0 0.0
        %778 = vmatpush2.msra.mxu0 0.0
        %779 = vmatprep.subr.mxu0 0.0
        %780 = vmatpush2.msra.mxu0 0.0
        %781 = vmatprep.subr.mxu0 0.0
        %782 = vmatpush2.msra.mxu0 0.0
        %783 = vmatprep.mubr.f32.mxu0 0.0
        %784 = vmatmul.mubr.f32.gmra.mxu0 %v717
        %v785 = vpop.f32.mrf.mxu0
        %v786 = vadd.f32 0.0, %v785
        %v787 = vpop.f32.mrf.mxu0
        %788 = vdwg.mxu0
        %v790 = vsel %vm321, %v308, 0
        %792 = vmatprep.subr.mxu0 0.0
        %793 = vmatpush1.msra.mxu0 0.0
        %794 = vmatprep.subr.mxu0 0.0
        %795 = vmatpush1.msra.mxu0 0.0
        %796 = vmatprep.subr.mxu0 0.0
        %797 = vmatpush1.msra.mxu0 0.0
        %798 = vmatprep.subr.mxu0 0.0
        %799 = vmatpush1.msra.mxu0 0.0
        %800 = vmatprep.subr.mxu0 0.0
        %801 = vmatpush1.msra.mxu0 0.0
        %802 = vmatprep.subr.mxu0 0.0
        %803 = vmatpush1.msra.mxu0 0.0
        %804 = vmatprep.subr.mxu0 0.0
        %805 = vmatpush1.msra.mxu0 0.0
        %806 = vmatprep.subr.mxu0 0.0
        %807 = vmatpush1.msra.mxu0 0.0
        %808 = vmatprep.subr.mxu0 0.0
        %809 = vmatpush1.msra.mxu0 0.0
        %810 = vmatprep.subr.mxu0 0.0
        %811 = vmatpush1.msra.mxu0 0.0
        %812 = vmatprep.subr.mxu0 0.0
        %813 = vmatpush1.msra.mxu0 0.0
        %814 = vmatprep.subr.mxu0 0.0
        %815 = vmatpush1.msra.mxu0 0.0
        %816 = vmatprep.subr.mxu0 0.0
        %817 = vmatpush1.msra.mxu0 0.0
        %818 = vmatprep.subr.mxu0 0.0
        %819 = vmatpush1.msra.mxu0 0.0
        %820 = vmatprep.subr.mxu0 0.0
        %821 = vmatpush1.msra.mxu0 0.0
        %822 = vmatprep.subr.mxu0 0.0
        %823 = vmatpush1.msra.mxu0 %v507
        %824 = vmatprep.subr.mxu0 0.0
        %825 = vmatpush2.msra.mxu0 0.0
        %826 = vmatprep.subr.mxu0 0.0
        %827 = vmatpush2.msra.mxu0 0.0
        %828 = vmatprep.subr.mxu0 0.0
        %829 = vmatpush2.msra.mxu0 0.0
        %830 = vmatprep.subr.mxu0 0.0
        %831 = vmatpush2.msra.mxu0 0.0
        %832 = vmatprep.subr.mxu0 0.0
        %833 = vmatpush2.msra.mxu0 0.0
        %834 = vmatprep.subr.mxu0 0.0
        %835 = vmatpush2.msra.mxu0 0.0
        %836 = vmatprep.subr.mxu0 0.0
        %837 = vmatpush2.msra.mxu0 0.0
        %838 = vmatprep.subr.mxu0 0.0
        %839 = vmatpush2.msra.mxu0 0.0
        %840 = vmatprep.subr.mxu0 0.0
        %841 = vmatpush2.msra.mxu0 0.0
        %842 = vmatprep.subr.mxu0 0.0
        %843 = vmatpush2.msra.mxu0 0.0
        %844 = vmatprep.subr.mxu0 0.0
        %845 = vmatpush2.msra.mxu0 0.0
        %846 = vmatprep.subr.mxu0 0.0
        %847 = vmatpush2.msra.mxu0 0.0
        %848 = vmatprep.subr.mxu0 0.0
        %849 = vmatpush2.msra.mxu0 0.0
        %850 = vmatprep.subr.mxu0 0.0
        %851 = vmatpush2.msra.mxu0 0.0
        %852 = vmatprep.subr.mxu0 0.0
        %853 = vmatpush2.msra.mxu0 0.0
        %854 = vmatprep.subr.mxu0 0.0
        %855 = vmatpush2.msra.mxu0 0.0
        %856 = vmatprep.mubr.f32.mxu0 0.0
        %857 = vmatmul.mubr.f32.gmra.mxu0 %v790
        %v858 = vpop.f32.mrf.mxu0
        %v859 = vadd.f32 0.0, %v858
        %v860 = vpop.f32.mrf.mxu0
        %861 = vdwg.mxu0
        %v863 = vsel %vm321, %v309, 0
        %865 = vmatprep.subr.mxu0 0.0
        %866 = vmatpush1.msra.mxu0 0.0
        %867 = vmatprep.subr.mxu0 0.0
        %868 = vmatpush1.msra.mxu0 0.0
        %869 = vmatprep.subr.mxu0 0.0
        %870 = vmatpush1.msra.mxu0 0.0
        %871 = vmatprep.subr.mxu0 0.0
        %872 = vmatpush1.msra.mxu0 0.0
        %873 = vmatprep.subr.mxu0 0.0
        %874 = vmatpush1.msra.mxu0 0.0
        %875 = vmatprep.subr.mxu0 0.0
        %876 = vmatpush1.msra.mxu0 0.0
        %877 = vmatprep.subr.mxu0 0.0
        %878 = vmatpush1.msra.mxu0 0.0
        %879 = vmatprep.subr.mxu0 0.0
        %880 = vmatpush1.msra.mxu0 0.0
        %881 = vmatprep.subr.mxu0 0.0
        %882 = vmatpush1.msra.mxu0 0.0
        %883 = vmatprep.subr.mxu0 0.0
        %884 = vmatpush1.msra.mxu0 0.0
        %885 = vmatprep.subr.mxu0 0.0
        %886 = vmatpush1.msra.mxu0 0.0
        %887 = vmatprep.subr.mxu0 0.0
        %888 = vmatpush1.msra.mxu0 0.0
        %889 = vmatprep.subr.mxu0 0.0
        %890 = vmatpush1.msra.mxu0 0.0
        %891 = vmatprep.subr.mxu0 0.0
        %892 = vmatpush1.msra.mxu0 0.0
        %893 = vmatprep.subr.mxu0 0.0
        %894 = vmatpush1.msra.mxu0 0.0
        %895 = vmatprep.subr.mxu0 0.0
        %896 = vmatpush1.msra.mxu0 %v512
        %897 = vmatprep.subr.mxu0 0.0
        %898 = vmatpush2.msra.mxu0 0.0
        %899 = vmatprep.subr.mxu0 0.0
        %900 = vmatpush2.msra.mxu0 0.0
        %901 = vmatprep.subr.mxu0 0.0
        %902 = vmatpush2.msra.mxu0 0.0
        %903 = vmatprep.subr.mxu0 0.0
        %904 = vmatpush2.msra.mxu0 0.0
        %905 = vmatprep.subr.mxu0 0.0
        %906 = vmatpush2.msra.mxu0 0.0
        %907 = vmatprep.subr.mxu0 0.0
        %908 = vmatpush2.msra.mxu0 0.0
        %909 = vmatprep.subr.mxu0 0.0
        %910 = vmatpush2.msra.mxu0 0.0
        %911 = vmatprep.subr.mxu0 0.0
        %912 = vmatpush2.msra.mxu0 0.0
        %913 = vmatprep.subr.mxu0 0.0
        %914 = vmatpush2.msra.mxu0 0.0
        %915 = vmatprep.subr.mxu0 0.0
        %916 = vmatpush2.msra.mxu0 0.0
        %917 = vmatprep.subr.mxu0 0.0
        %918 = vmatpush2.msra.mxu0 0.0
        %919 = vmatprep.subr.mxu0 0.0
        %920 = vmatpush2.msra.mxu0 0.0
        %921 = vmatprep.subr.mxu0 0.0
        %922 = vmatpush2.msra.mxu0 0.0
        %923 = vmatprep.subr.mxu0 0.0
        %924 = vmatpush2.msra.mxu0 0.0
        %925 = vmatprep.subr.mxu0 0.0
        %926 = vmatpush2.msra.mxu0 0.0
        %927 = vmatprep.subr.mxu0 0.0
        %928 = vmatpush2.msra.mxu0 0.0
        %929 = vmatprep.mubr.f32.mxu0 0.0
        %930 = vmatmul.mubr.f32.gmra.mxu0 %v863
        %v931 = vpop.f32.mrf.mxu0
        %v932 = vadd.f32 0.0, %v931
        %v933 = vpop.f32.mrf.mxu0
        %934 = vdwg.mxu0
        %v936 = vsel %vm321, %v310, 0
        %938 = vmatprep.subr.mxu0 0.0
        %939 = vmatpush1.msra.mxu0 0.0
        %940 = vmatprep.subr.mxu0 0.0
        %941 = vmatpush1.msra.mxu0 0.0
        %942 = vmatprep.subr.mxu0 0.0
        %943 = vmatpush1.msra.mxu0 0.0
        %944 = vmatprep.subr.mxu0 0.0
        %945 = vmatpush1.msra.mxu0 0.0
        %946 = vmatprep.subr.mxu0 0.0
        %947 = vmatpush1.msra.mxu0 0.0
        %948 = vmatprep.subr.mxu0 0.0
        %949 = vmatpush1.msra.mxu0 0.0
        %950 = vmatprep.subr.mxu0 0.0
        %951 = vmatpush1.msra.mxu0 0.0
        %952 = vmatprep.subr.mxu0 0.0
        %953 = vmatpush1.msra.mxu0 0.0
        %954 = vmatprep.subr.mxu0 0.0
        %955 = vmatpush1.msra.mxu0 0.0
        %956 = vmatprep.subr.mxu0 0.0
        %957 = vmatpush1.msra.mxu0 0.0
        %958 = vmatprep.subr.mxu0 0.0
        %959 = vmatpush1.msra.mxu0 0.0
        %960 = vmatprep.subr.mxu0 0.0
        %961 = vmatpush1.msra.mxu0 0.0
        %962 = vmatprep.subr.mxu0 0.0
        %963 = vmatpush1.msra.mxu0 0.0
        %964 = vmatprep.subr.mxu0 0.0
        %965 = vmatpush1.msra.mxu0 0.0
        %966 = vmatprep.subr.mxu0 0.0
        %967 = vmatpush1.msra.mxu0 0.0
        %968 = vmatprep.subr.mxu0 0.0
        %969 = vmatpush1.msra.mxu0 %v517
        %970 = vmatprep.subr.mxu0 0.0
        %971 = vmatpush2.msra.mxu0 0.0
        %972 = vmatprep.subr.mxu0 0.0
        %973 = vmatpush2.msra.mxu0 0.0
        %974 = vmatprep.subr.mxu0 0.0
        %975 = vmatpush2.msra.mxu0 0.0
        %976 = vmatprep.subr.mxu0 0.0
        %977 = vmatpush2.msra.mxu0 0.0
        %978 = vmatprep.subr.mxu0 0.0
        %979 = vmatpush2.msra.mxu0 0.0
        %980 = vmatprep.subr.mxu0 0.0
        %981 = vmatpush2.msra.mxu0 0.0
        %982 = vmatprep.subr.mxu0 0.0
        %983 = vmatpush2.msra.mxu0 0.0
        %984 = vmatprep.subr.mxu0 0.0
        %985 = vmatpush2.msra.mxu0 0.0
        %986 = vmatprep.subr.mxu0 0.0
        %987 = vmatpush2.msra.mxu0 0.0
        %988 = vmatprep.subr.mxu0 0.0
        %989 = vmatpush2.msra.mxu0 0.0
        %990 = vmatprep.subr.mxu0 0.0
        %991 = vmatpush2.msra.mxu0 0.0
        %992 = vmatprep.subr.mxu0 0.0
        %993 = vmatpush2.msra.mxu0 0.0
        %994 = vmatprep.subr.mxu0 0.0
        %995 = vmatpush2.msra.mxu0 0.0
        %996 = vmatprep.subr.mxu0 0.0
        %997 = vmatpush2.msra.mxu0 0.0
        %998 = vmatprep.subr.mxu0 0.0
        %999 = vmatpush2.msra.mxu0 0.0
        %1000 = vmatprep.subr.mxu0 0.0
        %1001 = vmatpush2.msra.mxu0 0.0
        %1002 = vmatprep.mubr.f32.mxu0 0.0
        %1003 = vmatmul.mubr.f32.gmra.mxu0 %v936
        %v1004 = vpop.f32.mrf.mxu0
        %v1005 = vadd.f32 0.0, %v1004
        %v1006 = vpop.f32.mrf.mxu0
        %1007 = vdwg.mxu0
        %v1009 = vsel %vm321, %v311, 0
        %1011 = vmatprep.subr.mxu0 0.0
        %1012 = vmatpush1.msra.mxu0 0.0
        %1013 = vmatprep.subr.mxu0 0.0
        %1014 = vmatpush1.msra.mxu0 0.0
        %1015 = vmatprep.subr.mxu0 0.0
        %1016 = vmatpush1.msra.mxu0 0.0
        %1017 = vmatprep.subr.mxu0 0.0
        %1018 = vmatpush1.msra.mxu0 0.0
        %1019 = vmatprep.subr.mxu0 0.0
        %1020 = vmatpush1.msra.mxu0 0.0
        %1021 = vmatprep.subr.mxu0 0.0
        %1022 = vmatpush1.msra.mxu0 0.0
        %1023 = vmatprep.subr.mxu0 0.0
        %1024 = vmatpush1.msra.mxu0 0.0
        %1025 = vmatprep.subr.mxu0 0.0
        %1026 = vmatpush1.msra.mxu0 0.0
        %1027 = vmatprep.subr.mxu0 0.0
        %1028 = vmatpush1.msra.mxu0 0.0
        %1029 = vmatprep.subr.mxu0 0.0
        %1030 = vmatpush1.msra.mxu0 0.0
        %1031 = vmatprep.subr.mxu0 0.0
        %1032 = vmatpush1.msra.mxu0 0.0
        %1033 = vmatprep.subr.mxu0 0.0
        %1034 = vmatpush1.msra.mxu0 0.0
        %1035 = vmatprep.subr.mxu0 0.0
        %1036 = vmatpush1.msra.mxu0 0.0
        %1037 = vmatprep.subr.mxu0 0.0
        %1038 = vmatpush1.msra.mxu0 0.0
        %1039 = vmatprep.subr.mxu0 0.0
        %1040 = vmatpush1.msra.mxu0 0.0
        %1041 = vmatprep.subr.mxu0 0.0
        %1042 = vmatpush1.msra.mxu0 %v522
        %1043 = vmatprep.subr.mxu0 0.0
        %1044 = vmatpush2.msra.mxu0 0.0
        %1045 = vmatprep.subr.mxu0 0.0
        %1046 = vmatpush2.msra.mxu0 0.0
        %1047 = vmatprep.subr.mxu0 0.0
        %1048 = vmatpush2.msra.mxu0 0.0
        %1049 = vmatprep.subr.mxu0 0.0
        %1050 = vmatpush2.msra.mxu0 0.0
        %1051 = vmatprep.subr.mxu0 0.0
        %1052 = vmatpush2.msra.mxu0 0.0
        %1053 = vmatprep.subr.mxu0 0.0
        %1054 = vmatpush2.msra.mxu0 0.0
        %1055 = vmatprep.subr.mxu0 0.0
        %1056 = vmatpush2.msra.mxu0 0.0
        %1057 = vmatprep.subr.mxu0 0.0
        %1058 = vmatpush2.msra.mxu0 0.0
        %1059 = vmatprep.subr.mxu0 0.0
        %1060 = vmatpush2.msra.mxu0 0.0
        %1061 = vmatprep.subr.mxu0 0.0
        %1062 = vmatpush2.msra.mxu0 0.0
        %1063 = vmatprep.subr.mxu0 0.0
        %1064 = vmatpush2.msra.mxu0 0.0
        %1065 = vmatprep.subr.mxu0 0.0
        %1066 = vmatpush2.msra.mxu0 0.0
        %1067 = vmatprep.subr.mxu0 0.0
        %1068 = vmatpush2.msra.mxu0 0.0
        %1069 = vmatprep.subr.mxu0 0.0
        %1070 = vmatpush2.msra.mxu0 0.0
        %1071 = vmatprep.subr.mxu0 0.0
        %1072 = vmatpush2.msra.mxu0 0.0
        %1073 = vmatprep.subr.mxu0 0.0
        %1074 = vmatpush2.msra.mxu0 0.0
        %1075 = vmatprep.mubr.f32.mxu0 0.0
        %1076 = vmatmul.mubr.f32.gmra.mxu0 %v1009
        %v1077 = vpop.f32.mrf.mxu0
        %v1078 = vadd.f32 0.0, %v1077
        %v1079 = vpop.f32.mrf.mxu0
        %1080 = vdwg.mxu0
        %v1082 = vsel %vm321, %v312, 0
        %1084 = vmatprep.subr.mxu0 0.0
        %1085 = vmatpush1.msra.mxu0 0.0
        %1086 = vmatprep.subr.mxu0 0.0
        %1087 = vmatpush1.msra.mxu0 0.0
        %1088 = vmatprep.subr.mxu0 0.0
        %1089 = vmatpush1.msra.mxu0 0.0
        %1090 = vmatprep.subr.mxu0 0.0
        %1091 = vmatpush1.msra.mxu0 0.0
        %1092 = vmatprep.subr.mxu0 0.0
        %1093 = vmatpush1.msra.mxu0 0.0
        %1094 = vmatprep.subr.mxu0 0.0
        %1095 = vmatpush1.msra.mxu0 0.0
        %1096 = vmatprep.subr.mxu0 0.0
        %1097 = vmatpush1.msra.mxu0 0.0
        %1098 = vmatprep.subr.mxu0 0.0
        %1099 = vmatpush1.msra.mxu0 0.0
        %1100 = vmatprep.subr.mxu0 0.0
        %1101 = vmatpush1.msra.mxu0 0.0
        %1102 = vmatprep.subr.mxu0 0.0
        %1103 = vmatpush1.msra.mxu0 0.0
        %1104 = vmatprep.subr.mxu0 0.0
        %1105 = vmatpush1.msra.mxu0 0.0
        %1106 = vmatprep.subr.mxu0 0.0
        %1107 = vmatpush1.msra.mxu0 0.0
        %1108 = vmatprep.subr.mxu0 0.0
        %1109 = vmatpush1.msra.mxu0 0.0
        %1110 = vmatprep.subr.mxu0 0.0
        %1111 = vmatpush1.msra.mxu0 0.0
        %1112 = vmatprep.subr.mxu0 0.0
        %1113 = vmatpush1.msra.mxu0 0.0
        %1114 = vmatprep.subr.mxu0 0.0
        %1115 = vmatpush1.msra.mxu0 %v527
        %1116 = vmatprep.subr.mxu0 0.0
        %1117 = vmatpush2.msra.mxu0 0.0
        %1118 = vmatprep.subr.mxu0 0.0
        %1119 = vmatpush2.msra.mxu0 0.0
        %1120 = vmatprep.subr.mxu0 0.0
        %1121 = vmatpush2.msra.mxu0 0.0
        %1122 = vmatprep.subr.mxu0 0.0
        %1123 = vmatpush2.msra.mxu0 0.0
        %1124 = vmatprep.subr.mxu0 0.0
        %1125 = vmatpush2.msra.mxu0 0.0
        %1126 = vmatprep.subr.mxu0 0.0
        %1127 = vmatpush2.msra.mxu0 0.0
        %1128 = vmatprep.subr.mxu0 0.0
        %1129 = vmatpush2.msra.mxu0 0.0
        %1130 = vmatprep.subr.mxu0 0.0
        %1131 = vmatpush2.msra.mxu0 0.0
        %1132 = vmatprep.subr.mxu0 0.0
        %1133 = vmatpush2.msra.mxu0 0.0
        %1134 = vmatprep.subr.mxu0 0.0
        %1135 = vmatpush2.msra.mxu0 0.0
        %1136 = vmatprep.subr.mxu0 0.0
        %1137 = vmatpush2.msra.mxu0 0.0
        %1138 = vmatprep.subr.mxu0 0.0
        %1139 = vmatpush2.msra.mxu0 0.0
        %1140 = vmatprep.subr.mxu0 0.0
        %1141 = vmatpush2.msra.mxu0 0.0
        %1142 = vmatprep.subr.mxu0 0.0
        %1143 = vmatpush2.msra.mxu0 0.0
        %1144 = vmatprep.subr.mxu0 0.0
        %1145 = vmatpush2.msra.mxu0 0.0
        %1146 = vmatprep.subr.mxu0 0.0
        %1147 = vmatpush2.msra.mxu0 0.0
        %1148 = vmatprep.mubr.f32.mxu0 0.0
        %1149 = vmatmul.mubr.f32.gmra.mxu0 %v1082
        %v1150 = vpop.f32.mrf.mxu0
        %v1151 = vadd.f32 0.0, %v1150
        %v1152 = vpop.f32.mrf.mxu0
        %1153 = vdwg.mxu0
        %v1155 = vsel %vm321, %v313, 0
        %1157 = vmatprep.subr.mxu0 0.0
        %1158 = vmatpush1.msra.mxu0 0.0
        %1159 = vmatprep.subr.mxu0 0.0
        %1160 = vmatpush1.msra.mxu0 0.0
        %1161 = vmatprep.subr.mxu0 0.0
        %1162 = vmatpush1.msra.mxu0 0.0
        %1163 = vmatprep.subr.mxu0 0.0
        %1164 = vmatpush1.msra.mxu0 0.0
        %1165 = vmatprep.subr.mxu0 0.0
        %1166 = vmatpush1.msra.mxu0 0.0
        %1167 = vmatprep.subr.mxu0 0.0
        %1168 = vmatpush1.msra.mxu0 0.0
        %1169 = vmatprep.subr.mxu0 0.0
        %1170 = vmatpush1.msra.mxu0 0.0
        %1171 = vmatprep.subr.mxu0 0.0
        %1172 = vmatpush1.msra.mxu0 0.0
        %1173 = vmatprep.subr.mxu0 0.0
        %1174 = vmatpush1.msra.mxu0 0.0
        %1175 = vmatprep.subr.mxu0 0.0
        %1176 = vmatpush1.msra.mxu0 0.0
        %1177 = vmatprep.subr.mxu0 0.0
        %1178 = vmatpush1.msra.mxu0 0.0
        %1179 = vmatprep.subr.mxu0 0.0
        %1180 = vmatpush1.msra.mxu0 0.0
        %1181 = vmatprep.subr.mxu0 0.0
        %1182 = vmatpush1.msra.mxu0 0.0
        %1183 = vmatprep.subr.mxu0 0.0
        %1184 = vmatpush1.msra.mxu0 0.0
        %1185 = vmatprep.subr.mxu0 0.0
        %1186 = vmatpush1.msra.mxu0 0.0
        %1187 = vmatprep.subr.mxu0 0.0
        %1188 = vmatpush1.msra.mxu0 %v532
        %1189 = vmatprep.subr.mxu0 0.0
        %1190 = vmatpush2.msra.mxu0 0.0
        %1191 = vmatprep.subr.mxu0 0.0
        %1192 = vmatpush2.msra.mxu0 0.0
        %1193 = vmatprep.subr.mxu0 0.0
        %1194 = vmatpush2.msra.mxu0 0.0
        %1195 = vmatprep.subr.mxu0 0.0
        %1196 = vmatpush2.msra.mxu0 0.0
        %1197 = vmatprep.subr.mxu0 0.0
        %1198 = vmatpush2.msra.mxu0 0.0
        %1199 = vmatprep.subr.mxu0 0.0
        %1200 = vmatpush2.msra.mxu0 0.0
        %1201 = vmatprep.subr.mxu0 0.0
        %1202 = vmatpush2.msra.mxu0 0.0
        %1203 = vmatprep.subr.mxu0 0.0
        %1204 = vmatpush2.msra.mxu0 0.0
        %1205 = vmatprep.subr.mxu0 0.0
        %1206 = vmatpush2.msra.mxu0 0.0
        %1207 = vmatprep.subr.mxu0 0.0
        %1208 = vmatpush2.msra.mxu0 0.0
        %1209 = vmatprep.subr.mxu0 0.0
        %1210 = vmatpush2.msra.mxu0 0.0
        %1211 = vmatprep.subr.mxu0 0.0
        %1212 = vmatpush2.msra.mxu0 0.0
        %1213 = vmatprep.subr.mxu0 0.0
        %1214 = vmatpush2.msra.mxu0 0.0
        %1215 = vmatprep.subr.mxu0 0.0
        %1216 = vmatpush2.msra.mxu0 0.0
        %1217 = vmatprep.subr.mxu0 0.0
        %1218 = vmatpush2.msra.mxu0 0.0
        %1219 = vmatprep.subr.mxu0 0.0
        %1220 = vmatpush2.msra.mxu0 0.0
        %1221 = vmatprep.mubr.f32.mxu0 0.0
        %1222 = vmatmul.mubr.f32.gmra.mxu0 %v1155
        %v1223 = vpop.f32.mrf.mxu0
        %v1224 = vadd.f32 0.0, %v1223
        %v1225 = vpop.f32.mrf.mxu0
        %1226 = vdwg.mxu0
        %v1228 = vsel %vm321, %v314, 0
        %1230 = vmatprep.subr.mxu0 0.0
        %1231 = vmatpush1.msra.mxu0 0.0
        %1232 = vmatprep.subr.mxu0 0.0
        %1233 = vmatpush1.msra.mxu0 0.0
        %1234 = vmatprep.subr.mxu0 0.0
        %1235 = vmatpush1.msra.mxu0 0.0
        %1236 = vmatprep.subr.mxu0 0.0
        %1237 = vmatpush1.msra.mxu0 0.0
        %1238 = vmatprep.subr.mxu0 0.0
        %1239 = vmatpush1.msra.mxu0 0.0
        %1240 = vmatprep.subr.mxu0 0.0
        %1241 = vmatpush1.msra.mxu0 0.0
        %1242 = vmatprep.subr.mxu0 0.0
        %1243 = vmatpush1.msra.mxu0 0.0
        %1244 = vmatprep.subr.mxu0 0.0
        %1245 = vmatpush1.msra.mxu0 0.0
        %1246 = vmatprep.subr.mxu0 0.0
        %1247 = vmatpush1.msra.mxu0 0.0
        %1248 = vmatprep.subr.mxu0 0.0
        %1249 = vmatpush1.msra.mxu0 0.0
        %1250 = vmatprep.subr.mxu0 0.0
        %1251 = vmatpush1.msra.mxu0 0.0
        %1252 = vmatprep.subr.mxu0 0.0
        %1253 = vmatpush1.msra.mxu0 0.0
        %1254 = vmatprep.subr.mxu0 0.0
        %1255 = vmatpush1.msra.mxu0 0.0
        %1256 = vmatprep.subr.mxu0 0.0
        %1257 = vmatpush1.msra.mxu0 0.0
        %1258 = vmatprep.subr.mxu0 0.0
        %1259 = vmatpush1.msra.mxu0 0.0
        %1260 = vmatprep.subr.mxu0 0.0
        %1261 = vmatpush1.msra.mxu0 %v537
        %1262 = vmatprep.subr.mxu0 0.0
        %1263 = vmatpush2.msra.mxu0 0.0
        %1264 = vmatprep.subr.mxu0 0.0
        %1265 = vmatpush2.msra.mxu0 0.0
        %1266 = vmatprep.subr.mxu0 0.0
        %1267 = vmatpush2.msra.mxu0 0.0
        %1268 = vmatprep.subr.mxu0 0.0
        %1269 = vmatpush2.msra.mxu0 0.0
        %1270 = vmatprep.subr.mxu0 0.0
        %1271 = vmatpush2.msra.mxu0 0.0
        %1272 = vmatprep.subr.mxu0 0.0
        %1273 = vmatpush2.msra.mxu0 0.0
        %1274 = vmatprep.subr.mxu0 0.0
        %1275 = vmatpush2.msra.mxu0 0.0
        %1276 = vmatprep.subr.mxu0 0.0
        %1277 = vmatpush2.msra.mxu0 0.0
        %1278 = vmatprep.subr.mxu0 0.0
        %1279 = vmatpush2.msra.mxu0 0.0
        %1280 = vmatprep.subr.mxu0 0.0
        %1281 = vmatpush2.msra.mxu0 0.0
        %1282 = vmatprep.subr.mxu0 0.0
        %1283 = vmatpush2.msra.mxu0 0.0
        %1284 = vmatprep.subr.mxu0 0.0
        %1285 = vmatpush2.msra.mxu0 0.0
        %1286 = vmatprep.subr.mxu0 0.0
        %1287 = vmatpush2.msra.mxu0 0.0
        %1288 = vmatprep.subr.mxu0 0.0
        %1289 = vmatpush2.msra.mxu0 0.0
        %1290 = vmatprep.subr.mxu0 0.0
        %1291 = vmatpush2.msra.mxu0 0.0
        %1292 = vmatprep.subr.mxu0 0.0
        %1293 = vmatpush2.msra.mxu0 0.0
        %1294 = vmatprep.mubr.f32.mxu0 0.0
        %1295 = vmatmul.mubr.f32.gmra.mxu0 %v1228
        %v1296 = vpop.f32.mrf.mxu0
        %v1297 = vadd.f32 0.0, %v1296
        %v1298 = vpop.f32.mrf.mxu0
        %1299 = vdwg.mxu0
        %v1301 = vsel %vm321, %v315, 0
        %1303 = vmatprep.subr.mxu0 0.0
        %1304 = vmatpush1.msra.mxu0 0.0
        %1305 = vmatprep.subr.mxu0 0.0
        %1306 = vmatpush1.msra.mxu0 0.0
        %1307 = vmatprep.subr.mxu0 0.0
        %1308 = vmatpush1.msra.mxu0 0.0
        %1309 = vmatprep.subr.mxu0 0.0
        %1310 = vmatpush1.msra.mxu0 0.0
        %1311 = vmatprep.subr.mxu0 0.0
        %1312 = vmatpush1.msra.mxu0 0.0
        %1313 = vmatprep.subr.mxu0 0.0
        %1314 = vmatpush1.msra.mxu0 0.0
        %1315 = vmatprep.subr.mxu0 0.0
        %1316 = vmatpush1.msra.mxu0 0.0
        %1317 = vmatprep.subr.mxu0 0.0
        %1318 = vmatpush1.msra.mxu0 0.0
        %1319 = vmatprep.subr.mxu0 0.0
        %1320 = vmatpush1.msra.mxu0 0.0
        %1321 = vmatprep.subr.mxu0 0.0
        %1322 = vmatpush1.msra.mxu0 0.0
        %1323 = vmatprep.subr.mxu0 0.0
        %1324 = vmatpush1.msra.mxu0 0.0
        %1325 = vmatprep.subr.mxu0 0.0
        %1326 = vmatpush1.msra.mxu0 0.0
        %1327 = vmatprep.subr.mxu0 0.0
        %1328 = vmatpush1.msra.mxu0 0.0
        %1329 = vmatprep.subr.mxu0 0.0
        %1330 = vmatpush1.msra.mxu0 0.0
        %1331 = vmatprep.subr.mxu0 0.0
        %1332 = vmatpush1.msra.mxu0 0.0
        %1333 = vmatprep.subr.mxu0 0.0
        %1334 = vmatpush1.msra.mxu0 %v542
        %1335 = vmatprep.subr.mxu0 0.0
        %1336 = vmatpush2.msra.mxu0 0.0
        %1337 = vmatprep.subr.mxu0 0.0
        %1338 = vmatpush2.msra.mxu0 0.0
        %1339 = vmatprep.subr.mxu0 0.0
        %1340 = vmatpush2.msra.mxu0 0.0
        %1341 = vmatprep.subr.mxu0 0.0
        %1342 = vmatpush2.msra.mxu0 0.0
        %1343 = vmatprep.subr.mxu0 0.0
        %1344 = vmatpush2.msra.mxu0 0.0
        %1345 = vmatprep.subr.mxu0 0.0
        %1346 = vmatpush2.msra.mxu0 0.0
        %1347 = vmatprep.subr.mxu0 0.0
        %1348 = vmatpush2.msra.mxu0 0.0
        %1349 = vmatprep.subr.mxu0 0.0
        %1350 = vmatpush2.msra.mxu0 0.0
        %1351 = vmatprep.subr.mxu0 0.0
        %1352 = vmatpush2.msra.mxu0 0.0
        %1353 = vmatprep.subr.mxu0 0.0
        %1354 = vmatpush2.msra.mxu0 0.0
        %1355 = vmatprep.subr.mxu0 0.0
        %1356 = vmatpush2.msra.mxu0 0.0
        %1357 = vmatprep.subr.mxu0 0.0
        %1358 = vmatpush2.msra.mxu0 0.0
        %1359 = vmatprep.subr.mxu0 0.0
        %1360 = vmatpush2.msra.mxu0 0.0
        %1361 = vmatprep.subr.mxu0 0.0
        %1362 = vmatpush2.msra.mxu0 0.0
        %1363 = vmatprep.subr.mxu0 0.0
        %1364 = vmatpush2.msra.mxu0 0.0
        %1365 = vmatprep.subr.mxu0 0.0
        %1366 = vmatpush2.msra.mxu0 0.0
        %1367 = vmatprep.mubr.f32.mxu0 0.0
        %1368 = vmatmul.mubr.f32.gmra.mxu0 %v1301
        %v1369 = vpop.f32.mrf.mxu0
        %v1370 = vadd.f32 0.0, %v1369
        %v1371 = vpop.f32.mrf.mxu0
        %1372 = vdwg.mxu0
        %v1374 = vsel %vm321, %v316, 0
        %1376 = vmatprep.subr.mxu0 0.0
        %1377 = vmatpush1.msra.mxu0 0.0
        %1378 = vmatprep.subr.mxu0 0.0
        %1379 = vmatpush1.msra.mxu0 0.0
        %1380 = vmatprep.subr.mxu0 0.0
        %1381 = vmatpush1.msra.mxu0 0.0
        %1382 = vmatprep.subr.mxu0 0.0
        %1383 = vmatpush1.msra.mxu0 0.0
        %1384 = vmatprep.subr.mxu0 0.0
        %1385 = vmatpush1.msra.mxu0 0.0
        %1386 = vmatprep.subr.mxu0 0.0
        %1387 = vmatpush1.msra.mxu0 0.0
        %1388 = vmatprep.subr.mxu0 0.0
        %1389 = vmatpush1.msra.mxu0 0.0
        %1390 = vmatprep.subr.mxu0 0.0
        %1391 = vmatpush1.msra.mxu0 0.0
        %1392 = vmatprep.subr.mxu0 0.0
        %1393 = vmatpush1.msra.mxu0 0.0
        %1394 = vmatprep.subr.mxu0 0.0
        %1395 = vmatpush1.msra.mxu0 0.0
        %1396 = vmatprep.subr.mxu0 0.0
        %1397 = vmatpush1.msra.mxu0 0.0
        %1398 = vmatprep.subr.mxu0 0.0
        %1399 = vmatpush1.msra.mxu0 0.0
        %1400 = vmatprep.subr.mxu0 0.0
        %1401 = vmatpush1.msra.mxu0 0.0
        %1402 = vmatprep.subr.mxu0 0.0
        %1403 = vmatpush1.msra.mxu0 0.0
        %1404 = vmatprep.subr.mxu0 0.0
        %1405 = vmatpush1.msra.mxu0 0.0
        %1406 = vmatprep.subr.mxu0 0.0
        %1407 = vmatpush1.msra.mxu0 %v547
        %1408 = vmatprep.subr.mxu0 0.0
        %1409 = vmatpush2.msra.mxu0 0.0
        %1410 = vmatprep.subr.mxu0 0.0
        %1411 = vmatpush2.msra.mxu0 0.0
        %1412 = vmatprep.subr.mxu0 0.0
        %1413 = vmatpush2.msra.mxu0 0.0
        %1414 = vmatprep.subr.mxu0 0.0
        %1415 = vmatpush2.msra.mxu0 0.0
        %1416 = vmatprep.subr.mxu0 0.0
        %1417 = vmatpush2.msra.mxu0 0.0
        %1418 = vmatprep.subr.mxu0 0.0
        %1419 = vmatpush2.msra.mxu0 0.0
        %1420 = vmatprep.subr.mxu0 0.0
        %1421 = vmatpush2.msra.mxu0 0.0
        %1422 = vmatprep.subr.mxu0 0.0
        %1423 = vmatpush2.msra.mxu0 0.0
        %1424 = vmatprep.subr.mxu0 0.0
        %1425 = vmatpush2.msra.mxu0 0.0
        %1426 = vmatprep.subr.mxu0 0.0
        %1427 = vmatpush2.msra.mxu0 0.0
        %1428 = vmatprep.subr.mxu0 0.0
        %1429 = vmatpush2.msra.mxu0 0.0
        %1430 = vmatprep.subr.mxu0 0.0
        %1431 = vmatpush2.msra.mxu0 0.0
        %1432 = vmatprep.subr.mxu0 0.0
        %1433 = vmatpush2.msra.mxu0 0.0
        %1434 = vmatprep.subr.mxu0 0.0
        %1435 = vmatpush2.msra.mxu0 0.0
        %1436 = vmatprep.subr.mxu0 0.0
        %1437 = vmatpush2.msra.mxu0 0.0
        %1438 = vmatprep.subr.mxu0 0.0
        %1439 = vmatpush2.msra.mxu0 0.0
        %1440 = vmatprep.mubr.f32.mxu0 0.0
        %1441 = vmatmul.mubr.f32.gmra.mxu0 %v1374
        %v1442 = vpop.f32.mrf.mxu0
        %v1443 = vadd.f32 0.0, %v1442
        %v1444 = vpop.f32.mrf.mxu0
        %1445 = vdwg.mxu0
        %v1447 = vsel %vm321, %v317, 0
        %1449 = vmatprep.subr.mxu0 0.0
        %1450 = vmatpush1.msra.mxu0 0.0
        %1451 = vmatprep.subr.mxu0 0.0
        %1452 = vmatpush1.msra.mxu0 0.0
        %1453 = vmatprep.subr.mxu0 0.0
        %1454 = vmatpush1.msra.mxu0 0.0
        %1455 = vmatprep.subr.mxu0 0.0
        %1456 = vmatpush1.msra.mxu0 0.0
        %1457 = vmatprep.subr.mxu0 0.0
        %1458 = vmatpush1.msra.mxu0 0.0
        %1459 = vmatprep.subr.mxu0 0.0
        %1460 = vmatpush1.msra.mxu0 0.0
        %1461 = vmatprep.subr.mxu0 0.0
        %1462 = vmatpush1.msra.mxu0 0.0
        %1463 = vmatprep.subr.mxu0 0.0
        %1464 = vmatpush1.msra.mxu0 0.0
        %1465 = vmatprep.subr.mxu0 0.0
        %1466 = vmatpush1.msra.mxu0 0.0
        %1467 = vmatprep.subr.mxu0 0.0
        %1468 = vmatpush1.msra.mxu0 0.0
        %1469 = vmatprep.subr.mxu0 0.0
        %1470 = vmatpush1.msra.mxu0 0.0
        %1471 = vmatprep.subr.mxu0 0.0
        %1472 = vmatpush1.msra.mxu0 0.0
        %1473 = vmatprep.subr.mxu0 0.0
        %1474 = vmatpush1.msra.mxu0 0.0
        %1475 = vmatprep.subr.mxu0 0.0
        %1476 = vmatpush1.msra.mxu0 0.0
        %1477 = vmatprep.subr.mxu0 0.0
        %1478 = vmatpush1.msra.mxu0 0.0
        %1479 = vmatprep.subr.mxu0 0.0
        %1480 = vmatpush1.msra.mxu0 %v552
        %1481 = vmatprep.subr.mxu0 0.0
        %1482 = vmatpush2.msra.mxu0 0.0
        %1483 = vmatprep.subr.mxu0 0.0
        %1484 = vmatpush2.msra.mxu0 0.0
        %1485 = vmatprep.subr.mxu0 0.0
        %1486 = vmatpush2.msra.mxu0 0.0
        %1487 = vmatprep.subr.mxu0 0.0
        %1488 = vmatpush2.msra.mxu0 0.0
        %1489 = vmatprep.subr.mxu0 0.0
        %1490 = vmatpush2.msra.mxu0 0.0
        %1491 = vmatprep.subr.mxu0 0.0
        %1492 = vmatpush2.msra.mxu0 0.0
        %1493 = vmatprep.subr.mxu0 0.0
        %1494 = vmatpush2.msra.mxu0 0.0
        %1495 = vmatprep.subr.mxu0 0.0
        %1496 = vmatpush2.msra.mxu0 0.0
        %1497 = vmatprep.subr.mxu0 0.0
        %1498 = vmatpush2.msra.mxu0 0.0
        %1499 = vmatprep.subr.mxu0 0.0
        %1500 = vmatpush2.msra.mxu0 0.0
        %1501 = vmatprep.subr.mxu0 0.0
        %1502 = vmatpush2.msra.mxu0 0.0
        %1503 = vmatprep.subr.mxu0 0.0
        %1504 = vmatpush2.msra.mxu0 0.0
        %1505 = vmatprep.subr.mxu0 0.0
        %1506 = vmatpush2.msra.mxu0 0.0
        %1507 = vmatprep.subr.mxu0 0.0
        %1508 = vmatpush2.msra.mxu0 0.0
        %1509 = vmatprep.subr.mxu0 0.0
        %1510 = vmatpush2.msra.mxu0 0.0
        %1511 = vmatprep.subr.mxu0 0.0
        %1512 = vmatpush2.msra.mxu0 0.0
        %1513 = vmatprep.mubr.f32.mxu0 0.0
        %1514 = vmatmul.mubr.f32.gmra.mxu0 %v1447
        %v1515 = vpop.f32.mrf.mxu0
        %v1516 = vadd.f32 0.0, %v1515
        %v1517 = vpop.f32.mrf.mxu0
        %1518 = vdwg.mxu0
        %v1520 = vsel %vm321, %v318, 0
        %1522 = vmatprep.subr.mxu0 0.0
        %1523 = vmatpush1.msra.mxu0 0.0
        %1524 = vmatprep.subr.mxu0 0.0
        %1525 = vmatpush1.msra.mxu0 0.0
        %1526 = vmatprep.subr.mxu0 0.0
        %1527 = vmatpush1.msra.mxu0 0.0
        %1528 = vmatprep.subr.mxu0 0.0
        %1529 = vmatpush1.msra.mxu0 0.0
        %1530 = vmatprep.subr.mxu0 0.0
        %1531 = vmatpush1.msra.mxu0 0.0
        %1532 = vmatprep.subr.mxu0 0.0
        %1533 = vmatpush1.msra.mxu0 0.0
        %1534 = vmatprep.subr.mxu0 0.0
        %1535 = vmatpush1.msra.mxu0 0.0
        %1536 = vmatprep.subr.mxu0 0.0
        %1537 = vmatpush1.msra.mxu0 0.0
        %1538 = vmatprep.subr.mxu0 0.0
        %1539 = vmatpush1.msra.mxu0 0.0
        %1540 = vmatprep.subr.mxu0 0.0
        %1541 = vmatpush1.msra.mxu0 0.0
        %1542 = vmatprep.subr.mxu0 0.0
        %1543 = vmatpush1.msra.mxu0 0.0
        %1544 = vmatprep.subr.mxu0 0.0
        %1545 = vmatpush1.msra.mxu0 0.0
        %1546 = vmatprep.subr.mxu0 0.0
        %1547 = vmatpush1.msra.mxu0 0.0
        %1548 = vmatprep.subr.mxu0 0.0
        %1549 = vmatpush1.msra.mxu0 0.0
        %1550 = vmatprep.subr.mxu0 0.0
        %1551 = vmatpush1.msra.mxu0 0.0
        %1552 = vmatprep.subr.mxu0 0.0
        %1553 = vmatpush1.msra.mxu0 %v557
        %1554 = vmatprep.subr.mxu0 0.0
        %1555 = vmatpush2.msra.mxu0 0.0
        %1556 = vmatprep.subr.mxu0 0.0
        %1557 = vmatpush2.msra.mxu0 0.0
        %1558 = vmatprep.subr.mxu0 0.0
        %1559 = vmatpush2.msra.mxu0 0.0
        %1560 = vmatprep.subr.mxu0 0.0
        %1561 = vmatpush2.msra.mxu0 0.0
        %1562 = vmatprep.subr.mxu0 0.0
        %1563 = vmatpush2.msra.mxu0 0.0
        %1564 = vmatprep.subr.mxu0 0.0
        %1565 = vmatpush2.msra.mxu0 0.0
        %1566 = vmatprep.subr.mxu0 0.0
        %1567 = vmatpush2.msra.mxu0 0.0
        %1568 = vmatprep.subr.mxu0 0.0
        %1569 = vmatpush2.msra.mxu0 0.0
        %1570 = vmatprep.subr.mxu0 0.0
        %1571 = vmatpush2.msra.mxu0 0.0
        %1572 = vmatprep.subr.mxu0 0.0
        %1573 = vmatpush2.msra.mxu0 0.0
        %1574 = vmatprep.subr.mxu0 0.0
        %1575 = vmatpush2.msra.mxu0 0.0
        %1576 = vmatprep.subr.mxu0 0.0
        %1577 = vmatpush2.msra.mxu0 0.0
        %1578 = vmatprep.subr.mxu0 0.0
        %1579 = vmatpush2.msra.mxu0 0.0
        %1580 = vmatprep.subr.mxu0 0.0
        %1581 = vmatpush2.msra.mxu0 0.0
        %1582 = vmatprep.subr.mxu0 0.0
        %1583 = vmatpush2.msra.mxu0 0.0
        %1584 = vmatprep.subr.mxu0 0.0
        %1585 = vmatpush2.msra.mxu0 0.0
        %1586 = vmatprep.mubr.f32.mxu0 0.0
        %1587 = vmatmul.mubr.f32.gmra.mxu0 %v1520
        %v1588 = vpop.f32.mrf.mxu0
        %v1589 = vadd.f32 0.0, %v1588
        %v1590 = vpop.f32.mrf.mxu0
        %1591 = vdwg.mxu0
        %v1593 = vsel %vm321, %v319, 0
        %1595 = vmatprep.subr.mxu0 0.0
        %1596 = vmatpush1.msra.mxu0 0.0
        %1597 = vmatprep.subr.mxu0 0.0
        %1598 = vmatpush1.msra.mxu0 0.0
        %1599 = vmatprep.subr.mxu0 0.0
        %1600 = vmatpush1.msra.mxu0 0.0
        %1601 = vmatprep.subr.mxu0 0.0
        %1602 = vmatpush1.msra.mxu0 0.0
        %1603 = vmatprep.subr.mxu0 0.0
        %1604 = vmatpush1.msra.mxu0 0.0
        %1605 = vmatprep.subr.mxu0 0.0
        %1606 = vmatpush1.msra.mxu0 0.0
        %1607 = vmatprep.subr.mxu0 0.0
        %1608 = vmatpush1.msra.mxu0 0.0
        %1609 = vmatprep.subr.mxu0 0.0
        %1610 = vmatpush1.msra.mxu0 0.0
        %1611 = vmatprep.subr.mxu0 0.0
        %1612 = vmatpush1.msra.mxu0 0.0
        %1613 = vmatprep.subr.mxu0 0.0
        %1614 = vmatpush1.msra.mxu0 0.0
        %1615 = vmatprep.subr.mxu0 0.0
        %1616 = vmatpush1.msra.mxu0 0.0
        %1617 = vmatprep.subr.mxu0 0.0
        %1618 = vmatpush1.msra.mxu0 0.0
        %1619 = vmatprep.subr.mxu0 0.0
        %1620 = vmatpush1.msra.mxu0 0.0
        %1621 = vmatprep.subr.mxu0 0.0
        %1622 = vmatpush1.msra.mxu0 0.0
        %1623 = vmatprep.subr.mxu0 0.0
        %1624 = vmatpush1.msra.mxu0 0.0
        %1625 = vmatprep.subr.mxu0 0.0
        %1626 = vmatpush1.msra.mxu0 %v562
        %1627 = vmatprep.subr.mxu0 0.0
        %1628 = vmatpush2.msra.mxu0 0.0
        %1629 = vmatprep.subr.mxu0 0.0
        %1630 = vmatpush2.msra.mxu0 0.0
        %1631 = vmatprep.subr.mxu0 0.0
        %1632 = vmatpush2.msra.mxu0 0.0
        %1633 = vmatprep.subr.mxu0 0.0
        %1634 = vmatpush2.msra.mxu0 0.0
        %1635 = vmatprep.subr.mxu0 0.0
        %1636 = vmatpush2.msra.mxu0 0.0
        %1637 = vmatprep.subr.mxu0 0.0
        %1638 = vmatpush2.msra.mxu0 0.0
        %1639 = vmatprep.subr.mxu0 0.0
        %1640 = vmatpush2.msra.mxu0 0.0
        %1641 = vmatprep.subr.mxu0 0.0
        %1642 = vmatpush2.msra.mxu0 0.0
        %1643 = vmatprep.subr.mxu0 0.0
        %1644 = vmatpush2.msra.mxu0 0.0
        %1645 = vmatprep.subr.mxu0 0.0
        %1646 = vmatpush2.msra.mxu0 0.0
        %1647 = vmatprep.subr.mxu0 0.0
        %1648 = vmatpush2.msra.mxu0 0.0
        %1649 = vmatprep.subr.mxu0 0.0
        %1650 = vmatpush2.msra.mxu0 0.0
        %1651 = vmatprep.subr.mxu0 0.0
        %1652 = vmatpush2.msra.mxu0 0.0
        %1653 = vmatprep.subr.mxu0 0.0
        %1654 = vmatpush2.msra.mxu0 0.0
        %1655 = vmatprep.subr.mxu0 0.0
        %1656 = vmatpush2.msra.mxu0 0.0
        %1657 = vmatprep.subr.mxu0 0.0
        %1658 = vmatpush2.msra.mxu0 0.0
        %1659 = vmatprep.mubr.f32.mxu0 0.0
        %1660 = vmatmul.mubr.f32.gmra.mxu0 %v1593
        %v1661 = vpop.f32.mrf.mxu0
        %v1662 = vadd.f32 0.0, %v1661
        %v1663 = vpop.f32.mrf.mxu0
        %1664 = vdwg.mxu0
        %v1666 = vsel %vm321, %v320, 0
        %1668 = vmatprep.subr.mxu0 0.0
        %1669 = vmatpush1.msra.mxu0 0.0
        %1670 = vmatprep.subr.mxu0 0.0
        %1671 = vmatpush1.msra.mxu0 0.0
        %1672 = vmatprep.subr.mxu0 0.0
        %1673 = vmatpush1.msra.mxu0 0.0
        %1674 = vmatprep.subr.mxu0 0.0
        %1675 = vmatpush1.msra.mxu0 0.0
        %1676 = vmatprep.subr.mxu0 0.0
        %1677 = vmatpush1.msra.mxu0 0.0
        %1678 = vmatprep.subr.mxu0 0.0
        %1679 = vmatpush1.msra.mxu0 0.0
        %1680 = vmatprep.subr.mxu0 0.0
        %1681 = vmatpush1.msra.mxu0 0.0
        %1682 = vmatprep.subr.mxu0 0.0
        %1683 = vmatpush1.msra.mxu0 0.0
        %1684 = vmatprep.subr.mxu0 0.0
        %1685 = vmatpush1.msra.mxu0 0.0
        %1686 = vmatprep.subr.mxu0 0.0
        %1687 = vmatpush1.msra.mxu0 0.0
        %1688 = vmatprep.subr.mxu0 0.0
        %1689 = vmatpush1.msra.mxu0 0.0
        %1690 = vmatprep.subr.mxu0 0.0
        %1691 = vmatpush1.msra.mxu0 0.0
        %1692 = vmatprep.subr.mxu0 0.0
        %1693 = vmatpush1.msra.mxu0 0.0
        %1694 = vmatprep.subr.mxu0 0.0
        %1695 = vmatpush1.msra.mxu0 0.0
        %1696 = vmatprep.subr.mxu0 0.0
        %1697 = vmatpush1.msra.mxu0 0.0
        %1698 = vmatprep.subr.mxu0 0.0
        %1699 = vmatpush1.msra.mxu0 %v567
        %1700 = vmatprep.subr.mxu0 0.0
        %1701 = vmatpush2.msra.mxu0 0.0
        %1702 = vmatprep.subr.mxu0 0.0
        %1703 = vmatpush2.msra.mxu0 0.0
        %1704 = vmatprep.subr.mxu0 0.0
        %1705 = vmatpush2.msra.mxu0 0.0
        %1706 = vmatprep.subr.mxu0 0.0
        %1707 = vmatpush2.msra.mxu0 0.0
        %1708 = vmatprep.subr.mxu0 0.0
        %1709 = vmatpush2.msra.mxu0 0.0
        %1710 = vmatprep.subr.mxu0 0.0
        %1711 = vmatpush2.msra.mxu0 0.0
        %1712 = vmatprep.subr.mxu0 0.0
        %1713 = vmatpush2.msra.mxu0 0.0
        %1714 = vmatprep.subr.mxu0 0.0
        %1715 = vmatpush2.msra.mxu0 0.0
        %1716 = vmatprep.subr.mxu0 0.0
        %1717 = vmatpush2.msra.mxu0 0.0
        %1718 = vmatprep.subr.mxu0 0.0
        %1719 = vmatpush2.msra.mxu0 0.0
        %1720 = vmatprep.subr.mxu0 0.0
        %1721 = vmatpush2.msra.mxu0 0.0
        %1722 = vmatprep.subr.mxu0 0.0
        %1723 = vmatpush2.msra.mxu0 0.0
        %1724 = vmatprep.subr.mxu0 0.0
        %1725 = vmatpush2.msra.mxu0 0.0
        %1726 = vmatprep.subr.mxu0 0.0
        %1727 = vmatpush2.msra.mxu0 0.0
        %1728 = vmatprep.subr.mxu0 0.0
        %1729 = vmatpush2.msra.mxu0 0.0
        %1730 = vmatprep.subr.mxu0 0.0
        %1731 = vmatpush2.msra.mxu0 0.0
        %1732 = vmatprep.mubr.f32.mxu0 0.0
        %1733 = vmatmul.mubr.f32.gmra.mxu0 %v1666
        %v1734 = vpop.f32.mrf.mxu0
        %v1735 = vadd.f32 0.0, %v1734
        %v1736 = vpop.f32.mrf.mxu0
        %1737 = vdwg.mxu0
        %v1738 = vmul.f32 %v640, %v370
        %v1739 = vmul.f32 %v713, %v371
        %v1740 = vmul.f32 %v786, %v372
        %v1741 = vmul.f32 %v859, %v373
        %v1742 = vmul.f32 %v932, %v374
        %v1743 = vmul.f32 %v1005, %v375
        %v1744 = vmul.f32 %v1078, %v376
        %v1745 = vmul.f32 %v1151, %v377
        %v1746 = vmul.f32 %v1224, %v378
        %v1747 = vmul.f32 %v1297, %v379
        %v1748 = vmul.f32 %v1370, %v380
        %v1749 = vmul.f32 %v1443, %v381
        %v1750 = vmul.f32 %v1516, %v382
        %v1751 = vmul.f32 %v1589, %v383
        %v1752 = vmul.f32 %v1662, %v384
        %v1753 = vmul.f32 %v1735, %v385
        %v1754 = vld [vmem:[#allocation5] sm:$0xff]
        %v1755 = vld [vmem:[#allocation5 + $0x8] sm:$0xff]
        %v1756 = vld [vmem:[#allocation5 + $0x10] sm:$0xff]
        %v1757 = vld [vmem:[#allocation5 + $0x18] sm:$0xff]
        %v1758 = vld [vmem:[#allocation5 + $0x20] sm:$0xff]
        %v1759 = vld [vmem:[#allocation5 + $0x28] sm:$0xff]
        %v1760 = vld [vmem:[#allocation5 + $0x30] sm:$0xff]
        %v1761 = vld [vmem:[#allocation5 + $0x38] sm:$0xff]
        %v1762 = vld [vmem:[#allocation5 + $0x40] sm:$0xff]
        %v1763 = vld [vmem:[#allocation5 + $0x48] sm:$0xff]
        %v1764 = vld [vmem:[#allocation5 + $0x50] sm:$0xff]
        %v1765 = vld [vmem:[#allocation5 + $0x58] sm:$0xff]
        %v1766 = vld [vmem:[#allocation5 + $0x60] sm:$0xff]
        %v1767 = vld [vmem:[#allocation5 + $0x68] sm:$0xff]
        %v1768 = vld [vmem:[#allocation5 + $0x70] sm:$0xff]
        %v1769 = vld [vmem:[#allocation5 + $0x78] sm:$0xff]
        %v1770 = vld [vmem:[%s5] sm:$0x1]
        %v1772 = vlaneseq
        %v1773 = vshrl.u32 %v1772, 7
        %v1774 = vsub.s32 0, %v1773
        %v1775 = vrot.slane %v1770, %v1774
        %1777 = vmatprep.subr.mxu0 0.0
        %1778 = vmatpush1.msra.mxu0 %v1769
        %1779 = vmatprep.subr.mxu0 0.0
        %1780 = vmatpush1.msra.mxu0 %v1768
        %1781 = vmatprep.subr.mxu0 0.0
        %1782 = vmatpush1.msra.mxu0 %v1767
        %1783 = vmatprep.subr.mxu0 0.0
        %1784 = vmatpush1.msra.mxu0 %v1766
        %1785 = vmatprep.subr.mxu0 0.0
        %1786 = vmatpush1.msra.mxu0 %v1765
        %1787 = vmatprep.subr.mxu0 0.0
        %1788 = vmatpush1.msra.mxu0 %v1764
        %1789 = vmatprep.subr.mxu0 0.0
        %1790 = vmatpush1.msra.mxu0 %v1763
        %1791 = vmatprep.subr.mxu0 0.0
        %1792 = vmatpush1.msra.mxu0 %v1762
        %1793 = vmatprep.subr.mxu0 0.0
        %1794 = vmatpush1.msra.mxu0 %v1761
        %1795 = vmatprep.subr.mxu0 0.0
        %1796 = vmatpush1.msra.mxu0 %v1760
        %1797 = vmatprep.subr.mxu0 0.0
        %1798 = vmatpush1.msra.mxu0 %v1759
        %1799 = vmatprep.subr.mxu0 0.0
        %1800 = vmatpush1.msra.mxu0 %v1758
        %1801 = vmatprep.subr.mxu0 0.0
        %1802 = vmatpush1.msra.mxu0 %v1757
        %1803 = vmatprep.subr.mxu0 0.0
        %1804 = vmatpush1.msra.mxu0 %v1756
        %1805 = vmatprep.subr.mxu0 0.0
        %1806 = vmatpush1.msra.mxu0 %v1755
        %1807 = vmatprep.subr.mxu0 0.0
        %1808 = vmatpush1.msra.mxu0 %v1754
        %1809 = vmatprep.subr.mxu0 0.0
        %1810 = vmatpush2.msra.mxu0 0.0
        %1811 = vmatprep.subr.mxu0 0.0
        %1812 = vmatpush2.msra.mxu0 0.0
        %1813 = vmatprep.subr.mxu0 0.0
        %1814 = vmatpush2.msra.mxu0 0.0
        %1815 = vmatprep.subr.mxu0 0.0
        %1816 = vmatpush2.msra.mxu0 0.0
        %1817 = vmatprep.subr.mxu0 0.0
        %1818 = vmatpush2.msra.mxu0 0.0
        %1819 = vmatprep.subr.mxu0 0.0
        %1820 = vmatpush2.msra.mxu0 0.0
        %1821 = vmatprep.subr.mxu0 0.0
        %1822 = vmatpush2.msra.mxu0 0.0
        %1823 = vmatprep.subr.mxu0 0.0
        %1824 = vmatpush2.msra.mxu0 0.0
        %1825 = vmatprep.subr.mxu0 0.0
        %1826 = vmatpush2.msra.mxu0 0.0
        %1827 = vmatprep.subr.mxu0 0.0
        %1828 = vmatpush2.msra.mxu0 0.0
        %1829 = vmatprep.subr.mxu0 0.0
        %1830 = vmatpush2.msra.mxu0 0.0
        %1831 = vmatprep.subr.mxu0 0.0
        %1832 = vmatpush2.msra.mxu0 0.0
        %1833 = vmatprep.subr.mxu0 0.0
        %1834 = vmatpush2.msra.mxu0 0.0
        %1835 = vmatprep.subr.mxu0 0.0
        %1836 = vmatpush2.msra.mxu0 0.0
        %1837 = vmatprep.subr.mxu0 0.0
        %1838 = vmatpush2.msra.mxu0 0.0
        %1839 = vmatprep.subr.mxu0 0.0
        %1840 = vmatpush2.msra.mxu0 0.0
        %1841 = vmatprep.mubr.f32.mxu0 0.0
        %1842 = vmatmul.mubr.f32.gmra.mxu0 %v1738
        %v1843 = vpop.f32.mrf.mxu0
        %v1844 = vadd.f32 %v1775, %v1843
        %v1845 = vpop.f32.mrf.mxu0
        %1846 = vmatprep.mubr.f32.mxu0 0.0
        %1847 = vmatmul.mubr.f32.gmra.mxu0 %v1739
        %v1848 = vpop.f32.mrf.mxu0
        %v1849 = vadd.f32 %v1775, %v1848
        %v1850 = vpop.f32.mrf.mxu0
        %1851 = vmatprep.mubr.f32.mxu0 0.0
        %1852 = vmatmul.mubr.f32.gmra.mxu0 %v1740
        %v1853 = vpop.f32.mrf.mxu0
        %v1854 = vadd.f32 %v1775, %v1853
        %v1855 = vpop.f32.mrf.mxu0
        %1856 = vmatprep.mubr.f32.mxu0 0.0
        %1857 = vmatmul.mubr.f32.gmra.mxu0 %v1741
        %v1858 = vpop.f32.mrf.mxu0
        %v1859 = vadd.f32 %v1775, %v1858
        %v1860 = vpop.f32.mrf.mxu0
        %1861 = vmatprep.mubr.f32.mxu0 0.0
        %1862 = vmatmul.mubr.f32.gmra.mxu0 %v1742
        %v1863 = vpop.f32.mrf.mxu0
        %v1864 = vadd.f32 %v1775, %v1863
        %v1865 = vpop.f32.mrf.mxu0
        %1866 = vmatprep.mubr.f32.mxu0 0.0
        %1867 = vmatmul.mubr.f32.gmra.mxu0 %v1743
        %v1868 = vpop.f32.mrf.mxu0
        %v1869 = vadd.f32 %v1775, %v1868
        %v1870 = vpop.f32.mrf.mxu0
        %1871 = vmatprep.mubr.f32.mxu0 0.0
        %1872 = vmatmul.mubr.f32.gmra.mxu0 %v1744
        %v1873 = vpop.f32.mrf.mxu0
        %v1874 = vadd.f32 %v1775, %v1873
        %v1875 = vpop.f32.mrf.mxu0
        %1876 = vmatprep.mubr.f32.mxu0 0.0
        %1877 = vmatmul.mubr.f32.gmra.mxu0 %v1745
        %v1878 = vpop.f32.mrf.mxu0
        %v1879 = vadd.f32 %v1775, %v1878
        %v1880 = vpop.f32.mrf.mxu0
        %1881 = vmatprep.mubr.f32.mxu0 0.0
        %1882 = vmatmul.mubr.f32.gmra.mxu0 %v1746
        %v1883 = vpop.f32.mrf.mxu0
        %v1884 = vadd.f32 %v1775, %v1883
        %v1885 = vpop.f32.mrf.mxu0
        %1886 = vmatprep.mubr.f32.mxu0 0.0
        %1887 = vmatmul.mubr.f32.gmra.mxu0 %v1747
        %v1888 = vpop.f32.mrf.mxu0
        %v1889 = vadd.f32 %v1775, %v1888
        %v1890 = vpop.f32.mrf.mxu0
        %1891 = vmatprep.mubr.f32.mxu0 0.0
        %1892 = vmatmul.mubr.f32.gmra.mxu0 %v1748
        %v1893 = vpop.f32.mrf.mxu0
        %v1894 = vadd.f32 %v1775, %v1893
        %v1895 = vpop.f32.mrf.mxu0
        %1896 = vmatprep.mubr.f32.mxu0 0.0
        %1897 = vmatmul.mubr.f32.gmra.mxu0 %v1749
        %v1898 = vpop.f32.mrf.mxu0
        %v1899 = vadd.f32 %v1775, %v1898
        %v1900 = vpop.f32.mrf.mxu0
        %1901 = vmatprep.mubr.f32.mxu0 0.0
        %1902 = vmatmul.mubr.f32.gmra.mxu0 %v1750
        %v1903 = vpop.f32.mrf.mxu0
        %v1904 = vadd.f32 %v1775, %v1903
        %v1905 = vpop.f32.mrf.mxu0
        %1906 = vmatprep.mubr.f32.mxu0 0.0
        %1907 = vmatmul.mubr.f32.gmra.mxu0 %v1751
        %v1908 = vpop.f32.mrf.mxu0
        %v1909 = vadd.f32 %v1775, %v1908
        %v1910 = vpop.f32.mrf.mxu0
        %1911 = vmatprep.mubr.f32.mxu0 0.0
        %1912 = vmatmul.mubr.f32.gmra.mxu0 %v1752
        %v1913 = vpop.f32.mrf.mxu0
        %v1914 = vadd.f32 %v1775, %v1913
        %v1915 = vpop.f32.mrf.mxu0
        %1916 = vmatprep.mubr.f32.mxu0 0.0
        %1917 = vmatmul.mubr.f32.gmra.mxu0 %v1753
        %v1918 = vpop.f32.mrf.mxu0
        %v1919 = vadd.f32 %v1775, %v1918
        %v1920 = vpop.f32.mrf.mxu0
        %1921 = vdwg.mxu0
        %vm1922 = vcmp.gt.f32.partialorder %v1844, 0.0
        %vm1923 = vcmp.gt.f32.partialorder %v1849, 0.0
        %vm1924 = vcmp.gt.f32.partialorder %v1854, 0.0
        %vm1925 = vcmp.gt.f32.partialorder %v1859, 0.0
        %vm1926 = vcmp.gt.f32.partialorder %v1864, 0.0
        %vm1927 = vcmp.gt.f32.partialorder %v1869, 0.0
        %vm1928 = vcmp.gt.f32.partialorder %v1874, 0.0
        %vm1929 = vcmp.gt.f32.partialorder %v1879, 0.0
        %vm1930 = vcmp.gt.f32.partialorder %v1884, 0.0
        %vm1931 = vcmp.gt.f32.partialorder %v1889, 0.0
        %vm1932 = vcmp.gt.f32.partialorder %v1894, 0.0
        %vm1933 = vcmp.gt.f32.partialorder %v1899, 0.0
        %vm1934 = vcmp.gt.f32.partialorder %v1904, 0.0
        %vm1935 = vcmp.gt.f32.partialorder %v1909, 0.0
        %vm1936 = vcmp.gt.f32.partialorder %v1914, 0.0
        %vm1937 = vcmp.gt.f32.partialorder %v1919, 0.0
        %v1938 = vmul.f32 %v1844, 0.01
        %v1939 = vmul.f32 %v1849, 0.01
        %v1940 = vmul.f32 %v1854, 0.01
        %v1941 = vmul.f32 %v1859, 0.01
        %v1942 = vmul.f32 %v1864, 0.01
        %v1943 = vmul.f32 %v1869, 0.01
        %v1944 = vmul.f32 %v1874, 0.01
        %v1945 = vmul.f32 %v1879, 0.01
        %v1946 = vmul.f32 %v1884, 0.01
        %v1947 = vmul.f32 %v1889, 0.01
        %v1948 = vmul.f32 %v1894, 0.01
        %v1949 = vmul.f32 %v1899, 0.01
        %v1950 = vmul.f32 %v1904, 0.01
        %v1951 = vmul.f32 %v1909, 0.01
        %v1952 = vmul.f32 %v1914, 0.01
        %v1953 = vmul.f32 %v1919, 0.01
        %v1954 = vsel %vm1922, %v1844, %v1938
        %v1955 = vsel %vm1923, %v1849, %v1939
        %v1956 = vsel %vm1924, %v1854, %v1940
        %v1957 = vsel %vm1925, %v1859, %v1941
        %v1958 = vsel %vm1926, %v1864, %v1942
        %v1959 = vsel %vm1927, %v1869, %v1943
        %v1960 = vsel %vm1928, %v1874, %v1944
        %v1961 = vsel %vm1929, %v1879, %v1945
        %v1962 = vsel %vm1930, %v1884, %v1946
        %v1963 = vsel %vm1931, %v1889, %v1947
        %v1964 = vsel %vm1932, %v1894, %v1948
        %v1965 = vsel %vm1933, %v1899, %v1949
        %v1966 = vsel %vm1934, %v1904, %v1950
        %v1967 = vsel %vm1935, %v1909, %v1951
        %v1968 = vsel %vm1936, %v1914, %v1952
        %v1969 = vsel %vm1937, %v1919, %v1953
        %1970 = vmatprep.subr.mxu0 0.0
        %1971 = vmatpush1.msra.mxu0 0.0
        %1972 = vmatprep.subr.mxu0 0.0
        %1973 = vmatpush1.msra.mxu0 0.0
        %1974 = vmatprep.subr.mxu0 0.0
        %1975 = vmatpush1.msra.mxu0 0.0
        %1976 = vmatprep.subr.mxu0 0.0
        %1977 = vmatpush1.msra.mxu0 0.0
        %1978 = vmatprep.subr.mxu0 0.0
        %1979 = vmatpush1.msra.mxu0 0.0
        %1980 = vmatprep.subr.mxu0 0.0
        %1981 = vmatpush1.msra.mxu0 0.0
        %1982 = vmatprep.subr.mxu0 0.0
        %1983 = vmatpush1.msra.mxu0 0.0
        %1984 = vmatprep.subr.mxu0 0.0
        %1985 = vmatpush1.msra.mxu0 0.0
        %1986 = vmatprep.subr.mxu0 0.0
        %1987 = vmatpush1.msra.mxu0 0.0
        %1988 = vmatprep.subr.mxu0 0.0
        %1989 = vmatpush1.msra.mxu0 0.0
        %1990 = vmatprep.subr.mxu0 0.0
        %1991 = vmatpush1.msra.mxu0 0.0
        %1992 = vmatprep.subr.mxu0 0.0
        %1993 = vmatpush1.msra.mxu0 0.0
        %1994 = vmatprep.subr.mxu0 0.0
        %1995 = vmatpush1.msra.mxu0 0.0
        %1996 = vmatprep.subr.mxu0 0.0
        %1997 = vmatpush1.msra.mxu0 0.0
        %1998 = vmatprep.subr.mxu0 0.0
        %1999 = vmatpush1.msra.mxu0 0.0
        %2000 = vmatprep.subr.mxu0 0.0
        %2001 = vmatpush1.msra.mxu0 %v1954
        %2002 = vmatprep.subr.mxu0 0.0
        %2003 = vmatpush2.msra.mxu0 0.0
        %2004 = vmatprep.subr.mxu0 0.0
        %2005 = vmatpush2.msra.mxu0 0.0
        %2006 = vmatprep.subr.mxu0 0.0
        %2007 = vmatpush2.msra.mxu0 0.0
        %2008 = vmatprep.subr.mxu0 0.0
        %2009 = vmatpush2.msra.mxu0 0.0
        %2010 = vmatprep.subr.mxu0 0.0
        %2011 = vmatpush2.msra.mxu0 0.0
        %2012 = vmatprep.subr.mxu0 0.0
        %2013 = vmatpush2.msra.mxu0 0.0
        %2014 = vmatprep.subr.mxu0 0.0
        %2015 = vmatpush2.msra.mxu0 0.0
        %2016 = vmatprep.subr.mxu0 0.0
        %2017 = vmatpush2.msra.mxu0 0.0
        %2018 = vmatprep.subr.mxu0 0.0
        %2019 = vmatpush2.msra.mxu0 0.0
        %2020 = vmatprep.subr.mxu0 0.0
        %2021 = vmatpush2.msra.mxu0 0.0
        %2022 = vmatprep.subr.mxu0 0.0
        %2023 = vmatpush2.msra.mxu0 0.0
        %2024 = vmatprep.subr.mxu0 0.0
        %2025 = vmatpush2.msra.mxu0 0.0
        %2026 = vmatprep.subr.mxu0 0.0
        %2027 = vmatpush2.msra.mxu0 0.0
        %2028 = vmatprep.subr.mxu0 0.0
        %2029 = vmatpush2.msra.mxu0 0.0
        %2030 = vmatprep.subr.mxu0 0.0
        %2031 = vmatpush2.msra.mxu0 0.0
        %2032 = vmatprep.subr.mxu0 0.0
        %2033 = vmatpush2.msra.mxu0 0.0
        %2034 = vmatprep.mubr.f32.mxu0 0.0
        %2035 = vmatmul.mubr.f32.gmra.mxu0 %v571
        %v2036 = vpop.f32.mrf.mxu0
        %v2037 = vadd.f32 0.0, %v2036
        %v2038 = vpop.f32.mrf.mxu0
        %2039 = vdwg.mxu0
        %2040 = vmatprep.subr.mxu0 0.0
        %2041 = vmatpush1.msra.mxu0 0.0
        %2042 = vmatprep.subr.mxu0 0.0
        %2043 = vmatpush1.msra.mxu0 0.0
        %2044 = vmatprep.subr.mxu0 0.0
        %2045 = vmatpush1.msra.mxu0 0.0
        %2046 = vmatprep.subr.mxu0 0.0
        %2047 = vmatpush1.msra.mxu0 0.0
        %2048 = vmatprep.subr.mxu0 0.0
        %2049 = vmatpush1.msra.mxu0 0.0
        %2050 = vmatprep.subr.mxu0 0.0
        %2051 = vmatpush1.msra.mxu0 0.0
        %2052 = vmatprep.subr.mxu0 0.0
        %2053 = vmatpush1.msra.mxu0 0.0
        %2054 = vmatprep.subr.mxu0 0.0
        %2055 = vmatpush1.msra.mxu0 0.0
        %2056 = vmatprep.subr.mxu0 0.0
        %2057 = vmatpush1.msra.mxu0 0.0
        %2058 = vmatprep.subr.mxu0 0.0
        %2059 = vmatpush1.msra.mxu0 0.0
        %2060 = vmatprep.subr.mxu0 0.0
        %2061 = vmatpush1.msra.mxu0 0.0
        %2062 = vmatprep.subr.mxu0 0.0
        %2063 = vmatpush1.msra.mxu0 0.0
        %2064 = vmatprep.subr.mxu0 0.0
        %2065 = vmatpush1.msra.mxu0 0.0
        %2066 = vmatprep.subr.mxu0 0.0
        %2067 = vmatpush1.msra.mxu0 0.0
        %2068 = vmatprep.subr.mxu0 0.0
        %2069 = vmatpush1.msra.mxu0 0.0
        %2070 = vmatprep.subr.mxu0 0.0
        %2071 = vmatpush1.msra.mxu0 %v1955
        %2072 = vmatprep.subr.mxu0 0.0
        %2073 = vmatpush2.msra.mxu0 0.0
        %2074 = vmatprep.subr.mxu0 0.0
        %2075 = vmatpush2.msra.mxu0 0.0
        %2076 = vmatprep.subr.mxu0 0.0
        %2077 = vmatpush2.msra.mxu0 0.0
        %2078 = vmatprep.subr.mxu0 0.0
        %2079 = vmatpush2.msra.mxu0 0.0
        %2080 = vmatprep.subr.mxu0 0.0
        %2081 = vmatpush2.msra.mxu0 0.0
        %2082 = vmatprep.subr.mxu0 0.0
        %2083 = vmatpush2.msra.mxu0 0.0
        %2084 = vmatprep.subr.mxu0 0.0
        %2085 = vmatpush2.msra.mxu0 0.0
        %2086 = vmatprep.subr.mxu0 0.0
        %2087 = vmatpush2.msra.mxu0 0.0
        %2088 = vmatprep.subr.mxu0 0.0
        %2089 = vmatpush2.msra.mxu0 0.0
        %2090 = vmatprep.subr.mxu0 0.0
        %2091 = vmatpush2.msra.mxu0 0.0
        %2092 = vmatprep.subr.mxu0 0.0
        %2093 = vmatpush2.msra.mxu0 0.0
        %2094 = vmatprep.subr.mxu0 0.0
        %2095 = vmatpush2.msra.mxu0 0.0
        %2096 = vmatprep.subr.mxu0 0.0
        %2097 = vmatpush2.msra.mxu0 0.0
        %2098 = vmatprep.subr.mxu0 0.0
        %2099 = vmatpush2.msra.mxu0 0.0
        %2100 = vmatprep.subr.mxu0 0.0
        %2101 = vmatpush2.msra.mxu0 0.0
        %2102 = vmatprep.subr.mxu0 0.0
        %2103 = vmatpush2.msra.mxu0 0.0
        %2104 = vmatprep.mubr.f32.mxu0 0.0
        %2105 = vmatmul.mubr.f32.gmra.mxu0 %v644
        %v2106 = vpop.f32.mrf.mxu0
        %v2107 = vadd.f32 0.0, %v2106
        %v2108 = vpop.f32.mrf.mxu0
        %2109 = vdwg.mxu0
        %2110 = vmatprep.subr.mxu0 0.0
        %2111 = vmatpush1.msra.mxu0 0.0
        %2112 = vmatprep.subr.mxu0 0.0
        %2113 = vmatpush1.msra.mxu0 0.0
        %2114 = vmatprep.subr.mxu0 0.0
        %2115 = vmatpush1.msra.mxu0 0.0
        %2116 = vmatprep.subr.mxu0 0.0
        %2117 = vmatpush1.msra.mxu0 0.0
        %2118 = vmatprep.subr.mxu0 0.0
        %2119 = vmatpush1.msra.mxu0 0.0
        %2120 = vmatprep.subr.mxu0 0.0
        %2121 = vmatpush1.msra.mxu0 0.0
        %2122 = vmatprep.subr.mxu0 0.0
        %2123 = vmatpush1.msra.mxu0 0.0
        %2124 = vmatprep.subr.mxu0 0.0
        %2125 = vmatpush1.msra.mxu0 0.0
        %2126 = vmatprep.subr.mxu0 0.0
        %2127 = vmatpush1.msra.mxu0 0.0
        %2128 = vmatprep.subr.mxu0 0.0
        %2129 = vmatpush1.msra.mxu0 0.0
        %2130 = vmatprep.subr.mxu0 0.0
        %2131 = vmatpush1.msra.mxu0 0.0
        %2132 = vmatprep.subr.mxu0 0.0
        %2133 = vmatpush1.msra.mxu0 0.0
        %2134 = vmatprep.subr.mxu0 0.0
        %2135 = vmatpush1.msra.mxu0 0.0
        %2136 = vmatprep.subr.mxu0 0.0
        %2137 = vmatpush1.msra.mxu0 0.0
        %2138 = vmatprep.subr.mxu0 0.0
        %2139 = vmatpush1.msra.mxu0 0.0
        %2140 = vmatprep.subr.mxu0 0.0
        %2141 = vmatpush1.msra.mxu0 %v1956
        %2142 = vmatprep.subr.mxu0 0.0
        %2143 = vmatpush2.msra.mxu0 0.0
        %2144 = vmatprep.subr.mxu0 0.0
        %2145 = vmatpush2.msra.mxu0 0.0
        %2146 = vmatprep.subr.mxu0 0.0
        %2147 = vmatpush2.msra.mxu0 0.0
        %2148 = vmatprep.subr.mxu0 0.0
        %2149 = vmatpush2.msra.mxu0 0.0
        %2150 = vmatprep.subr.mxu0 0.0
        %2151 = vmatpush2.msra.mxu0 0.0
        %2152 = vmatprep.subr.mxu0 0.0
        %2153 = vmatpush2.msra.mxu0 0.0
        %2154 = vmatprep.subr.mxu0 0.0
        %2155 = vmatpush2.msra.mxu0 0.0
        %2156 = vmatprep.subr.mxu0 0.0
        %2157 = vmatpush2.msra.mxu0 0.0
        %2158 = vmatprep.subr.mxu0 0.0
        %2159 = vmatpush2.msra.mxu0 0.0
        %2160 = vmatprep.subr.mxu0 0.0
        %2161 = vmatpush2.msra.mxu0 0.0
        %2162 = vmatprep.subr.mxu0 0.0
        %2163 = vmatpush2.msra.mxu0 0.0
        %2164 = vmatprep.subr.mxu0 0.0
        %2165 = vmatpush2.msra.mxu0 0.0
        %2166 = vmatprep.subr.mxu0 0.0
        %2167 = vmatpush2.msra.mxu0 0.0
        %2168 = vmatprep.subr.mxu0 0.0
        %2169 = vmatpush2.msra.mxu0 0.0
        %2170 = vmatprep.subr.mxu0 0.0
        %2171 = vmatpush2.msra.mxu0 0.0
        %2172 = vmatprep.subr.mxu0 0.0
        %2173 = vmatpush2.msra.mxu0 0.0
        %2174 = vmatprep.mubr.f32.mxu0 0.0
        %2175 = vmatmul.mubr.f32.gmra.mxu0 %v717
        %v2176 = vpop.f32.mrf.mxu0
        %v2177 = vadd.f32 0.0, %v2176
        %v2178 = vpop.f32.mrf.mxu0
        %2179 = vdwg.mxu0
        %2180 = vmatprep.subr.mxu0 0.0
        %2181 = vmatpush1.msra.mxu0 0.0
        %2182 = vmatprep.subr.mxu0 0.0
        %2183 = vmatpush1.msra.mxu0 0.0
        %2184 = vmatprep.subr.mxu0 0.0
        %2185 = vmatpush1.msra.mxu0 0.0
        %2186 = vmatprep.subr.mxu0 0.0
        %2187 = vmatpush1.msra.mxu0 0.0
        %2188 = vmatprep.subr.mxu0 0.0
        %2189 = vmatpush1.msra.mxu0 0.0
        %2190 = vmatprep.subr.mxu0 0.0
        %2191 = vmatpush1.msra.mxu0 0.0
        %2192 = vmatprep.subr.mxu0 0.0
        %2193 = vmatpush1.msra.mxu0 0.0
        %2194 = vmatprep.subr.mxu0 0.0
        %2195 = vmatpush1.msra.mxu0 0.0
        %2196 = vmatprep.subr.mxu0 0.0
        %2197 = vmatpush1.msra.mxu0 0.0
        %2198 = vmatprep.subr.mxu0 0.0
        %2199 = vmatpush1.msra.mxu0 0.0
        %2200 = vmatprep.subr.mxu0 0.0
        %2201 = vmatpush1.msra.mxu0 0.0
        %2202 = vmatprep.subr.mxu0 0.0
        %2203 = vmatpush1.msra.mxu0 0.0
        %2204 = vmatprep.subr.mxu0 0.0
        %2205 = vmatpush1.msra.mxu0 0.0
        %2206 = vmatprep.subr.mxu0 0.0
        %2207 = vmatpush1.msra.mxu0 0.0
        %2208 = vmatprep.subr.mxu0 0.0
        %2209 = vmatpush1.msra.mxu0 0.0
        %2210 = vmatprep.subr.mxu0 0.0
        %2211 = vmatpush1.msra.mxu0 %v1957
        %2212 = vmatprep.subr.mxu0 0.0
        %2213 = vmatpush2.msra.mxu0 0.0
        %2214 = vmatprep.subr.mxu0 0.0
        %2215 = vmatpush2.msra.mxu0 0.0
        %2216 = vmatprep.subr.mxu0 0.0
        %2217 = vmatpush2.msra.mxu0 0.0
        %2218 = vmatprep.subr.mxu0 0.0
        %2219 = vmatpush2.msra.mxu0 0.0
        %2220 = vmatprep.subr.mxu0 0.0
        %2221 = vmatpush2.msra.mxu0 0.0
        %2222 = vmatprep.subr.mxu0 0.0
        %2223 = vmatpush2.msra.mxu0 0.0
        %2224 = vmatprep.subr.mxu0 0.0
        %2225 = vmatpush2.msra.mxu0 0.0
        %2226 = vmatprep.subr.mxu0 0.0
        %2227 = vmatpush2.msra.mxu0 0.0
        %2228 = vmatprep.subr.mxu0 0.0
        %2229 = vmatpush2.msra.mxu0 0.0
        %2230 = vmatprep.subr.mxu0 0.0
        %2231 = vmatpush2.msra.mxu0 0.0
        %2232 = vmatprep.subr.mxu0 0.0
        %2233 = vmatpush2.msra.mxu0 0.0
        %2234 = vmatprep.subr.mxu0 0.0
        %2235 = vmatpush2.msra.mxu0 0.0
        %2236 = vmatprep.subr.mxu0 0.0
        %2237 = vmatpush2.msra.mxu0 0.0
        %2238 = vmatprep.subr.mxu0 0.0
        %2239 = vmatpush2.msra.mxu0 0.0
        %2240 = vmatprep.subr.mxu0 0.0
        %2241 = vmatpush2.msra.mxu0 0.0
        %2242 = vmatprep.subr.mxu0 0.0
        %2243 = vmatpush2.msra.mxu0 0.0
        %2244 = vmatprep.mubr.f32.mxu0 0.0
        %2245 = vmatmul.mubr.f32.gmra.mxu0 %v790
        %v2246 = vpop.f32.mrf.mxu0
        %v2247 = vadd.f32 0.0, %v2246
        %v2248 = vpop.f32.mrf.mxu0
        %2249 = vdwg.mxu0
        %2250 = vmatprep.subr.mxu0 0.0
        %2251 = vmatpush1.msra.mxu0 0.0
        %2252 = vmatprep.subr.mxu0 0.0
        %2253 = vmatpush1.msra.mxu0 0.0
        %2254 = vmatprep.subr.mxu0 0.0
        %2255 = vmatpush1.msra.mxu0 0.0
        %2256 = vmatprep.subr.mxu0 0.0
        %2257 = vmatpush1.msra.mxu0 0.0
        %2258 = vmatprep.subr.mxu0 0.0
        %2259 = vmatpush1.msra.mxu0 0.0
        %2260 = vmatprep.subr.mxu0 0.0
        %2261 = vmatpush1.msra.mxu0 0.0
        %2262 = vmatprep.subr.mxu0 0.0
        %2263 = vmatpush1.msra.mxu0 0.0
        %2264 = vmatprep.subr.mxu0 0.0
        %2265 = vmatpush1.msra.mxu0 0.0
        %2266 = vmatprep.subr.mxu0 0.0
        %2267 = vmatpush1.msra.mxu0 0.0
        %2268 = vmatprep.subr.mxu0 0.0
        %2269 = vmatpush1.msra.mxu0 0.0
        %2270 = vmatprep.subr.mxu0 0.0
        %2271 = vmatpush1.msra.mxu0 0.0
        %2272 = vmatprep.subr.mxu0 0.0
        %2273 = vmatpush1.msra.mxu0 0.0
        %2274 = vmatprep.subr.mxu0 0.0
        %2275 = vmatpush1.msra.mxu0 0.0
        %2276 = vmatprep.subr.mxu0 0.0
        %2277 = vmatpush1.msra.mxu0 0.0
        %2278 = vmatprep.subr.mxu0 0.0
        %2279 = vmatpush1.msra.mxu0 0.0
        %2280 = vmatprep.subr.mxu0 0.0
        %2281 = vmatpush1.msra.mxu0 %v1958
        %2282 = vmatprep.subr.mxu0 0.0
        %2283 = vmatpush2.msra.mxu0 0.0
        %2284 = vmatprep.subr.mxu0 0.0
        %2285 = vmatpush2.msra.mxu0 0.0
        %2286 = vmatprep.subr.mxu0 0.0
        %2287 = vmatpush2.msra.mxu0 0.0
        %2288 = vmatprep.subr.mxu0 0.0
        %2289 = vmatpush2.msra.mxu0 0.0
        %2290 = vmatprep.subr.mxu0 0.0
        %2291 = vmatpush2.msra.mxu0 0.0
        %2292 = vmatprep.subr.mxu0 0.0
        %2293 = vmatpush2.msra.mxu0 0.0
        %2294 = vmatprep.subr.mxu0 0.0
        %2295 = vmatpush2.msra.mxu0 0.0
        %2296 = vmatprep.subr.mxu0 0.0
        %2297 = vmatpush2.msra.mxu0 0.0
        %2298 = vmatprep.subr.mxu0 0.0
        %2299 = vmatpush2.msra.mxu0 0.0
        %2300 = vmatprep.subr.mxu0 0.0
        %2301 = vmatpush2.msra.mxu0 0.0
        %2302 = vmatprep.subr.mxu0 0.0
        %2303 = vmatpush2.msra.mxu0 0.0
        %2304 = vmatprep.subr.mxu0 0.0
        %2305 = vmatpush2.msra.mxu0 0.0
        %2306 = vmatprep.subr.mxu0 0.0
        %2307 = vmatpush2.msra.mxu0 0.0
        %2308 = vmatprep.subr.mxu0 0.0
        %2309 = vmatpush2.msra.mxu0 0.0
        %2310 = vmatprep.subr.mxu0 0.0
        %2311 = vmatpush2.msra.mxu0 0.0
        %2312 = vmatprep.subr.mxu0 0.0
        %2313 = vmatpush2.msra.mxu0 0.0
        %2314 = vmatprep.mubr.f32.mxu0 0.0
        %2315 = vmatmul.mubr.f32.gmra.mxu0 %v863
        %v2316 = vpop.f32.mrf.mxu0
        %v2317 = vadd.f32 0.0, %v2316
        %v2318 = vpop.f32.mrf.mxu0
        %2319 = vdwg.mxu0
        %2320 = vmatprep.subr.mxu0 0.0
        %2321 = vmatpush1.msra.mxu0 0.0
        %2322 = vmatprep.subr.mxu0 0.0
        %2323 = vmatpush1.msra.mxu0 0.0
        %2324 = vmatprep.subr.mxu0 0.0
        %2325 = vmatpush1.msra.mxu0 0.0
        %2326 = vmatprep.subr.mxu0 0.0
        %2327 = vmatpush1.msra.mxu0 0.0
        %2328 = vmatprep.subr.mxu0 0.0
        %2329 = vmatpush1.msra.mxu0 0.0
        %2330 = vmatprep.subr.mxu0 0.0
        %2331 = vmatpush1.msra.mxu0 0.0
        %2332 = vmatprep.subr.mxu0 0.0
        %2333 = vmatpush1.msra.mxu0 0.0
        %2334 = vmatprep.subr.mxu0 0.0
        %2335 = vmatpush1.msra.mxu0 0.0
        %2336 = vmatprep.subr.mxu0 0.0
        %2337 = vmatpush1.msra.mxu0 0.0
        %2338 = vmatprep.subr.mxu0 0.0
        %2339 = vmatpush1.msra.mxu0 0.0
        %2340 = vmatprep.subr.mxu0 0.0
        %2341 = vmatpush1.msra.mxu0 0.0
        %2342 = vmatprep.subr.mxu0 0.0
        %2343 = vmatpush1.msra.mxu0 0.0
        %2344 = vmatprep.subr.mxu0 0.0
        %2345 = vmatpush1.msra.mxu0 0.0
        %2346 = vmatprep.subr.mxu0 0.0
        %2347 = vmatpush1.msra.mxu0 0.0
        %2348 = vmatprep.subr.mxu0 0.0
        %2349 = vmatpush1.msra.mxu0 0.0
        %2350 = vmatprep.subr.mxu0 0.0
        %2351 = vmatpush1.msra.mxu0 %v1959
        %2352 = vmatprep.subr.mxu0 0.0
        %2353 = vmatpush2.msra.mxu0 0.0
        %2354 = vmatprep.subr.mxu0 0.0
        %2355 = vmatpush2.msra.mxu0 0.0
        %2356 = vmatprep.subr.mxu0 0.0
        %2357 = vmatpush2.msra.mxu0 0.0
        %2358 = vmatprep.subr.mxu0 0.0
        %2359 = vmatpush2.msra.mxu0 0.0
        %2360 = vmatprep.subr.mxu0 0.0
        %2361 = vmatpush2.msra.mxu0 0.0
        %2362 = vmatprep.subr.mxu0 0.0
        %2363 = vmatpush2.msra.mxu0 0.0
        %2364 = vmatprep.subr.mxu0 0.0
        %2365 = vmatpush2.msra.mxu0 0.0
        %2366 = vmatprep.subr.mxu0 0.0
        %2367 = vmatpush2.msra.mxu0 0.0
        %2368 = vmatprep.subr.mxu0 0.0
        %2369 = vmatpush2.msra.mxu0 0.0
        %2370 = vmatprep.subr.mxu0 0.0
        %2371 = vmatpush2.msra.mxu0 0.0
        %2372 = vmatprep.subr.mxu0 0.0
        %2373 = vmatpush2.msra.mxu0 0.0
        %2374 = vmatprep.subr.mxu0 0.0
        %2375 = vmatpush2.msra.mxu0 0.0
        %2376 = vmatprep.subr.mxu0 0.0
        %2377 = vmatpush2.msra.mxu0 0.0
        %2378 = vmatprep.subr.mxu0 0.0
        %2379 = vmatpush2.msra.mxu0 0.0
        %2380 = vmatprep.subr.mxu0 0.0
        %2381 = vmatpush2.msra.mxu0 0.0
        %2382 = vmatprep.subr.mxu0 0.0
        %2383 = vmatpush2.msra.mxu0 0.0
        %2384 = vmatprep.mubr.f32.mxu0 0.0
        %2385 = vmatmul.mubr.f32.gmra.mxu0 %v936
        %v2386 = vpop.f32.mrf.mxu0
        %v2387 = vadd.f32 0.0, %v2386
        %v2388 = vpop.f32.mrf.mxu0
        %2389 = vdwg.mxu0
        %2390 = vmatprep.subr.mxu0 0.0
        %2391 = vmatpush1.msra.mxu0 0.0
        %2392 = vmatprep.subr.mxu0 0.0
        %2393 = vmatpush1.msra.mxu0 0.0
        %2394 = vmatprep.subr.mxu0 0.0
        %2395 = vmatpush1.msra.mxu0 0.0
        %2396 = vmatprep.subr.mxu0 0.0
        %2397 = vmatpush1.msra.mxu0 0.0
        %2398 = vmatprep.subr.mxu0 0.0
        %2399 = vmatpush1.msra.mxu0 0.0
        %2400 = vmatprep.subr.mxu0 0.0
        %2401 = vmatpush1.msra.mxu0 0.0
        %2402 = vmatprep.subr.mxu0 0.0
        %2403 = vmatpush1.msra.mxu0 0.0
        %2404 = vmatprep.subr.mxu0 0.0
        %2405 = vmatpush1.msra.mxu0 0.0
        %2406 = vmatprep.subr.mxu0 0.0
        %2407 = vmatpush1.msra.mxu0 0.0
        %2408 = vmatprep.subr.mxu0 0.0
        %2409 = vmatpush1.msra.mxu0 0.0
        %2410 = vmatprep.subr.mxu0 0.0
        %2411 = vmatpush1.msra.mxu0 0.0
        %2412 = vmatprep.subr.mxu0 0.0
        %2413 = vmatpush1.msra.mxu0 0.0
        %2414 = vmatprep.subr.mxu0 0.0
        %2415 = vmatpush1.msra.mxu0 0.0
        %2416 = vmatprep.subr.mxu0 0.0
        %2417 = vmatpush1.msra.mxu0 0.0
        %2418 = vmatprep.subr.mxu0 0.0
        %2419 = vmatpush1.msra.mxu0 0.0
        %2420 = vmatprep.subr.mxu0 0.0
        %2421 = vmatpush1.msra.mxu0 %v1960
        %2422 = vmatprep.subr.mxu0 0.0
        %2423 = vmatpush2.msra.mxu0 0.0
        %2424 = vmatprep.subr.mxu0 0.0
        %2425 = vmatpush2.msra.mxu0 0.0
        %2426 = vmatprep.subr.mxu0 0.0
        %2427 = vmatpush2.msra.mxu0 0.0
        %2428 = vmatprep.subr.mxu0 0.0
        %2429 = vmatpush2.msra.mxu0 0.0
        %2430 = vmatprep.subr.mxu0 0.0
        %2431 = vmatpush2.msra.mxu0 0.0
        %2432 = vmatprep.subr.mxu0 0.0
        %2433 = vmatpush2.msra.mxu0 0.0
        %2434 = vmatprep.subr.mxu0 0.0
        %2435 = vmatpush2.msra.mxu0 0.0
        %2436 = vmatprep.subr.mxu0 0.0
        %2437 = vmatpush2.msra.mxu0 0.0
        %2438 = vmatprep.subr.mxu0 0.0
        %2439 = vmatpush2.msra.mxu0 0.0
        %2440 = vmatprep.subr.mxu0 0.0
        %2441 = vmatpush2.msra.mxu0 0.0
        %2442 = vmatprep.subr.mxu0 0.0
        %2443 = vmatpush2.msra.mxu0 0.0
        %2444 = vmatprep.subr.mxu0 0.0
        %2445 = vmatpush2.msra.mxu0 0.0
        %2446 = vmatprep.subr.mxu0 0.0
        %2447 = vmatpush2.msra.mxu0 0.0
        %2448 = vmatprep.subr.mxu0 0.0
        %2449 = vmatpush2.msra.mxu0 0.0
        %2450 = vmatprep.subr.mxu0 0.0
        %2451 = vmatpush2.msra.mxu0 0.0
        %2452 = vmatprep.subr.mxu0 0.0
        %2453 = vmatpush2.msra.mxu0 0.0
        %2454 = vmatprep.mubr.f32.mxu0 0.0
        %2455 = vmatmul.mubr.f32.gmra.mxu0 %v1009
        %v2456 = vpop.f32.mrf.mxu0
        %v2457 = vadd.f32 0.0, %v2456
        %v2458 = vpop.f32.mrf.mxu0
        %2459 = vdwg.mxu0
        %2460 = vmatprep.subr.mxu0 0.0
        %2461 = vmatpush1.msra.mxu0 0.0
        %2462 = vmatprep.subr.mxu0 0.0
        %2463 = vmatpush1.msra.mxu0 0.0
        %2464 = vmatprep.subr.mxu0 0.0
        %2465 = vmatpush1.msra.mxu0 0.0
        %2466 = vmatprep.subr.mxu0 0.0
        %2467 = vmatpush1.msra.mxu0 0.0
        %2468 = vmatprep.subr.mxu0 0.0
        %2469 = vmatpush1.msra.mxu0 0.0
        %2470 = vmatprep.subr.mxu0 0.0
        %2471 = vmatpush1.msra.mxu0 0.0
        %2472 = vmatprep.subr.mxu0 0.0
        %2473 = vmatpush1.msra.mxu0 0.0
        %2474 = vmatprep.subr.mxu0 0.0
        %2475 = vmatpush1.msra.mxu0 0.0
        %2476 = vmatprep.subr.mxu0 0.0
        %2477 = vmatpush1.msra.mxu0 0.0
        %2478 = vmatprep.subr.mxu0 0.0
        %2479 = vmatpush1.msra.mxu0 0.0
        %2480 = vmatprep.subr.mxu0 0.0
        %2481 = vmatpush1.msra.mxu0 0.0
        %2482 = vmatprep.subr.mxu0 0.0
        %2483 = vmatpush1.msra.mxu0 0.0
        %2484 = vmatprep.subr.mxu0 0.0
        %2485 = vmatpush1.msra.mxu0 0.0
        %2486 = vmatprep.subr.mxu0 0.0
        %2487 = vmatpush1.msra.mxu0 0.0
        %2488 = vmatprep.subr.mxu0 0.0
        %2489 = vmatpush1.msra.mxu0 0.0
        %2490 = vmatprep.subr.mxu0 0.0
        %2491 = vmatpush1.msra.mxu0 %v1961
        %2492 = vmatprep.subr.mxu0 0.0
        %2493 = vmatpush2.msra.mxu0 0.0
        %2494 = vmatprep.subr.mxu0 0.0
        %2495 = vmatpush2.msra.mxu0 0.0
        %2496 = vmatprep.subr.mxu0 0.0
        %2497 = vmatpush2.msra.mxu0 0.0
        %2498 = vmatprep.subr.mxu0 0.0
        %2499 = vmatpush2.msra.mxu0 0.0
        %2500 = vmatprep.subr.mxu0 0.0
        %2501 = vmatpush2.msra.mxu0 0.0
        %2502 = vmatprep.subr.mxu0 0.0
        %2503 = vmatpush2.msra.mxu0 0.0
        %2504 = vmatprep.subr.mxu0 0.0
        %2505 = vmatpush2.msra.mxu0 0.0
        %2506 = vmatprep.subr.mxu0 0.0
        %2507 = vmatpush2.msra.mxu0 0.0
        %2508 = vmatprep.subr.mxu0 0.0
        %2509 = vmatpush2.msra.mxu0 0.0
        %2510 = vmatprep.subr.mxu0 0.0
        %2511 = vmatpush2.msra.mxu0 0.0
        %2512 = vmatprep.subr.mxu0 0.0
        %2513 = vmatpush2.msra.mxu0 0.0
        %2514 = vmatprep.subr.mxu0 0.0
        %2515 = vmatpush2.msra.mxu0 0.0
        %2516 = vmatprep.subr.mxu0 0.0
        %2517 = vmatpush2.msra.mxu0 0.0
        %2518 = vmatprep.subr.mxu0 0.0
        %2519 = vmatpush2.msra.mxu0 0.0
        %2520 = vmatprep.subr.mxu0 0.0
        %2521 = vmatpush2.msra.mxu0 0.0
        %2522 = vmatprep.subr.mxu0 0.0
        %2523 = vmatpush2.msra.mxu0 0.0
        %2524 = vmatprep.mubr.f32.mxu0 0.0
        %2525 = vmatmul.mubr.f32.gmra.mxu0 %v1082
        %v2526 = vpop.f32.mrf.mxu0
        %v2527 = vadd.f32 0.0, %v2526
        %v2528 = vpop.f32.mrf.mxu0
        %2529 = vdwg.mxu0
        %2530 = vmatprep.subr.mxu0 0.0
        %2531 = vmatpush1.msra.mxu0 0.0
        %2532 = vmatprep.subr.mxu0 0.0
        %2533 = vmatpush1.msra.mxu0 0.0
        %2534 = vmatprep.subr.mxu0 0.0
        %2535 = vmatpush1.msra.mxu0 0.0
        %2536 = vmatprep.subr.mxu0 0.0
        %2537 = vmatpush1.msra.mxu0 0.0
        %2538 = vmatprep.subr.mxu0 0.0
        %2539 = vmatpush1.msra.mxu0 0.0
        %2540 = vmatprep.subr.mxu0 0.0
        %2541 = vmatpush1.msra.mxu0 0.0
        %2542 = vmatprep.subr.mxu0 0.0
        %2543 = vmatpush1.msra.mxu0 0.0
        %2544 = vmatprep.subr.mxu0 0.0
        %2545 = vmatpush1.msra.mxu0 0.0
        %2546 = vmatprep.subr.mxu0 0.0
        %2547 = vmatpush1.msra.mxu0 0.0
        %2548 = vmatprep.subr.mxu0 0.0
        %2549 = vmatpush1.msra.mxu0 0.0
        %2550 = vmatprep.subr.mxu0 0.0
        %2551 = vmatpush1.msra.mxu0 0.0
        %2552 = vmatprep.subr.mxu0 0.0
        %2553 = vmatpush1.msra.mxu0 0.0
        %2554 = vmatprep.subr.mxu0 0.0
        %2555 = vmatpush1.msra.mxu0 0.0
        %2556 = vmatprep.subr.mxu0 0.0
        %2557 = vmatpush1.msra.mxu0 0.0
        %2558 = vmatprep.subr.mxu0 0.0
        %2559 = vmatpush1.msra.mxu0 0.0
        %2560 = vmatprep.subr.mxu0 0.0
        %2561 = vmatpush1.msra.mxu0 %v1962
        %2562 = vmatprep.subr.mxu0 0.0
        %2563 = vmatpush2.msra.mxu0 0.0
        %2564 = vmatprep.subr.mxu0 0.0
        %2565 = vmatpush2.msra.mxu0 0.0
        %2566 = vmatprep.subr.mxu0 0.0
        %2567 = vmatpush2.msra.mxu0 0.0
        %2568 = vmatprep.subr.mxu0 0.0
        %2569 = vmatpush2.msra.mxu0 0.0
        %2570 = vmatprep.subr.mxu0 0.0
        %2571 = vmatpush2.msra.mxu0 0.0
        %2572 = vmatprep.subr.mxu0 0.0
        %2573 = vmatpush2.msra.mxu0 0.0
        %2574 = vmatprep.subr.mxu0 0.0
        %2575 = vmatpush2.msra.mxu0 0.0
        %2576 = vmatprep.subr.mxu0 0.0
        %2577 = vmatpush2.msra.mxu0 0.0
        %2578 = vmatprep.subr.mxu0 0.0
        %2579 = vmatpush2.msra.mxu0 0.0
        %2580 = vmatprep.subr.mxu0 0.0
        %2581 = vmatpush2.msra.mxu0 0.0
        %2582 = vmatprep.subr.mxu0 0.0
        %2583 = vmatpush2.msra.mxu0 0.0
        %2584 = vmatprep.subr.mxu0 0.0
        %2585 = vmatpush2.msra.mxu0 0.0
        %2586 = vmatprep.subr.mxu0 0.0
        %2587 = vmatpush2.msra.mxu0 0.0
        %2588 = vmatprep.subr.mxu0 0.0
        %2589 = vmatpush2.msra.mxu0 0.0
        %2590 = vmatprep.subr.mxu0 0.0
        %2591 = vmatpush2.msra.mxu0 0.0
        %2592 = vmatprep.subr.mxu0 0.0
        %2593 = vmatpush2.msra.mxu0 0.0
        %2594 = vmatprep.mubr.f32.mxu0 0.0
        %2595 = vmatmul.mubr.f32.gmra.mxu0 %v1155
        %v2596 = vpop.f32.mrf.mxu0
        %v2597 = vadd.f32 0.0, %v2596
        %v2598 = vpop.f32.mrf.mxu0
        %2599 = vdwg.mxu0
        %2600 = vmatprep.subr.mxu0 0.0
        %2601 = vmatpush1.msra.mxu0 0.0
        %2602 = vmatprep.subr.mxu0 0.0
        %2603 = vmatpush1.msra.mxu0 0.0
        %2604 = vmatprep.subr.mxu0 0.0
        %2605 = vmatpush1.msra.mxu0 0.0
        %2606 = vmatprep.subr.mxu0 0.0
        %2607 = vmatpush1.msra.mxu0 0.0
        %2608 = vmatprep.subr.mxu0 0.0
        %2609 = vmatpush1.msra.mxu0 0.0
        %2610 = vmatprep.subr.mxu0 0.0
        %2611 = vmatpush1.msra.mxu0 0.0
        %2612 = vmatprep.subr.mxu0 0.0
        %2613 = vmatpush1.msra.mxu0 0.0
        %2614 = vmatprep.subr.mxu0 0.0
        %2615 = vmatpush1.msra.mxu0 0.0
        %2616 = vmatprep.subr.mxu0 0.0
        %2617 = vmatpush1.msra.mxu0 0.0
        %2618 = vmatprep.subr.mxu0 0.0
        %2619 = vmatpush1.msra.mxu0 0.0
        %2620 = vmatprep.subr.mxu0 0.0
        %2621 = vmatpush1.msra.mxu0 0.0
        %2622 = vmatprep.subr.mxu0 0.0
        %2623 = vmatpush1.msra.mxu0 0.0
        %2624 = vmatprep.subr.mxu0 0.0
        %2625 = vmatpush1.msra.mxu0 0.0
        %2626 = vmatprep.subr.mxu0 0.0
        %2627 = vmatpush1.msra.mxu0 0.0
        %2628 = vmatprep.subr.mxu0 0.0
        %2629 = vmatpush1.msra.mxu0 0.0
        %2630 = vmatprep.subr.mxu0 0.0
        %2631 = vmatpush1.msra.mxu0 %v1963
        %2632 = vmatprep.subr.mxu0 0.0
        %2633 = vmatpush2.msra.mxu0 0.0
        %2634 = vmatprep.subr.mxu0 0.0
        %2635 = vmatpush2.msra.mxu0 0.0
        %2636 = vmatprep.subr.mxu0 0.0
        %2637 = vmatpush2.msra.mxu0 0.0
        %2638 = vmatprep.subr.mxu0 0.0
        %2639 = vmatpush2.msra.mxu0 0.0
        %2640 = vmatprep.subr.mxu0 0.0
        %2641 = vmatpush2.msra.mxu0 0.0
        %2642 = vmatprep.subr.mxu0 0.0
        %2643 = vmatpush2.msra.mxu0 0.0
        %2644 = vmatprep.subr.mxu0 0.0
        %2645 = vmatpush2.msra.mxu0 0.0
        %2646 = vmatprep.subr.mxu0 0.0
        %2647 = vmatpush2.msra.mxu0 0.0
        %2648 = vmatprep.subr.mxu0 0.0
        %2649 = vmatpush2.msra.mxu0 0.0
        %2650 = vmatprep.subr.mxu0 0.0
        %2651 = vmatpush2.msra.mxu0 0.0
        %2652 = vmatprep.subr.mxu0 0.0
        %2653 = vmatpush2.msra.mxu0 0.0
        %2654 = vmatprep.subr.mxu0 0.0
        %2655 = vmatpush2.msra.mxu0 0.0
        %2656 = vmatprep.subr.mxu0 0.0
        %2657 = vmatpush2.msra.mxu0 0.0
        %2658 = vmatprep.subr.mxu0 0.0
        %2659 = vmatpush2.msra.mxu0 0.0
        %2660 = vmatprep.subr.mxu0 0.0
        %2661 = vmatpush2.msra.mxu0 0.0
        %2662 = vmatprep.subr.mxu0 0.0
        %2663 = vmatpush2.msra.mxu0 0.0
        %2664 = vmatprep.mubr.f32.mxu0 0.0
        %2665 = vmatmul.mubr.f32.gmra.mxu0 %v1228
        %v2666 = vpop.f32.mrf.mxu0
        %v2667 = vadd.f32 0.0, %v2666
        %v2668 = vpop.f32.mrf.mxu0
        %2669 = vdwg.mxu0
        %2670 = vmatprep.subr.mxu0 0.0
        %2671 = vmatpush1.msra.mxu0 0.0
        %2672 = vmatprep.subr.mxu0 0.0
        %2673 = vmatpush1.msra.mxu0 0.0
        %2674 = vmatprep.subr.mxu0 0.0
        %2675 = vmatpush1.msra.mxu0 0.0
        %2676 = vmatprep.subr.mxu0 0.0
        %2677 = vmatpush1.msra.mxu0 0.0
        %2678 = vmatprep.subr.mxu0 0.0
        %2679 = vmatpush1.msra.mxu0 0.0
        %2680 = vmatprep.subr.mxu0 0.0
        %2681 = vmatpush1.msra.mxu0 0.0
        %2682 = vmatprep.subr.mxu0 0.0
        %2683 = vmatpush1.msra.mxu0 0.0
        %2684 = vmatprep.subr.mxu0 0.0
        %2685 = vmatpush1.msra.mxu0 0.0
        %2686 = vmatprep.subr.mxu0 0.0
        %2687 = vmatpush1.msra.mxu0 0.0
        %2688 = vmatprep.subr.mxu0 0.0
        %2689 = vmatpush1.msra.mxu0 0.0
        %2690 = vmatprep.subr.mxu0 0.0
        %2691 = vmatpush1.msra.mxu0 0.0
        %2692 = vmatprep.subr.mxu0 0.0
        %2693 = vmatpush1.msra.mxu0 0.0
        %2694 = vmatprep.subr.mxu0 0.0
        %2695 = vmatpush1.msra.mxu0 0.0
        %2696 = vmatprep.subr.mxu0 0.0
        %2697 = vmatpush1.msra.mxu0 0.0
        %2698 = vmatprep.subr.mxu0 0.0
        %2699 = vmatpush1.msra.mxu0 0.0
        %2700 = vmatprep.subr.mxu0 0.0
        %2701 = vmatpush1.msra.mxu0 %v1964
        %2702 = vmatprep.subr.mxu0 0.0
        %2703 = vmatpush2.msra.mxu0 0.0
        %2704 = vmatprep.subr.mxu0 0.0
        %2705 = vmatpush2.msra.mxu0 0.0
        %2706 = vmatprep.subr.mxu0 0.0
        %2707 = vmatpush2.msra.mxu0 0.0
        %2708 = vmatprep.subr.mxu0 0.0
        %2709 = vmatpush2.msra.mxu0 0.0
        %2710 = vmatprep.subr.mxu0 0.0
        %2711 = vmatpush2.msra.mxu0 0.0
        %2712 = vmatprep.subr.mxu0 0.0
        %2713 = vmatpush2.msra.mxu0 0.0
        %2714 = vmatprep.subr.mxu0 0.0
        %2715 = vmatpush2.msra.mxu0 0.0
        %2716 = vmatprep.subr.mxu0 0.0
        %2717 = vmatpush2.msra.mxu0 0.0
        %2718 = vmatprep.subr.mxu0 0.0
        %2719 = vmatpush2.msra.mxu0 0.0
        %2720 = vmatprep.subr.mxu0 0.0
        %2721 = vmatpush2.msra.mxu0 0.0
        %2722 = vmatprep.subr.mxu0 0.0
        %2723 = vmatpush2.msra.mxu0 0.0
        %2724 = vmatprep.subr.mxu0 0.0
        %2725 = vmatpush2.msra.mxu0 0.0
        %2726 = vmatprep.subr.mxu0 0.0
        %2727 = vmatpush2.msra.mxu0 0.0
        %2728 = vmatprep.subr.mxu0 0.0
        %2729 = vmatpush2.msra.mxu0 0.0
        %2730 = vmatprep.subr.mxu0 0.0
        %2731 = vmatpush2.msra.mxu0 0.0
        %2732 = vmatprep.subr.mxu0 0.0
        %2733 = vmatpush2.msra.mxu0 0.0
        %2734 = vmatprep.mubr.f32.mxu0 0.0
        %2735 = vmatmul.mubr.f32.gmra.mxu0 %v1301
        %v2736 = vpop.f32.mrf.mxu0
        %v2737 = vadd.f32 0.0, %v2736
        %v2738 = vpop.f32.mrf.mxu0
        %2739 = vdwg.mxu0
        %2740 = vmatprep.subr.mxu0 0.0
        %2741 = vmatpush1.msra.mxu0 0.0
        %2742 = vmatprep.subr.mxu0 0.0
        %2743 = vmatpush1.msra.mxu0 0.0
        %2744 = vmatprep.subr.mxu0 0.0
        %2745 = vmatpush1.msra.mxu0 0.0
        %2746 = vmatprep.subr.mxu0 0.0
        %2747 = vmatpush1.msra.mxu0 0.0
        %2748 = vmatprep.subr.mxu0 0.0
        %2749 = vmatpush1.msra.mxu0 0.0
        %2750 = vmatprep.subr.mxu0 0.0
        %2751 = vmatpush1.msra.mxu0 0.0
        %2752 = vmatprep.subr.mxu0 0.0
        %2753 = vmatpush1.msra.mxu0 0.0
        %2754 = vmatprep.subr.mxu0 0.0
        %2755 = vmatpush1.msra.mxu0 0.0
        %2756 = vmatprep.subr.mxu0 0.0
        %2757 = vmatpush1.msra.mxu0 0.0
        %2758 = vmatprep.subr.mxu0 0.0
        %2759 = vmatpush1.msra.mxu0 0.0
        %2760 = vmatprep.subr.mxu0 0.0
        %2761 = vmatpush1.msra.mxu0 0.0
        %2762 = vmatprep.subr.mxu0 0.0
        %2763 = vmatpush1.msra.mxu0 0.0
        %2764 = vmatprep.subr.mxu0 0.0
        %2765 = vmatpush1.msra.mxu0 0.0
        %2766 = vmatprep.subr.mxu0 0.0
        %2767 = vmatpush1.msra.mxu0 0.0
        %2768 = vmatprep.subr.mxu0 0.0
        %2769 = vmatpush1.msra.mxu0 0.0
        %2770 = vmatprep.subr.mxu0 0.0
        %2771 = vmatpush1.msra.mxu0 %v1965
        %2772 = vmatprep.subr.mxu0 0.0
        %2773 = vmatpush2.msra.mxu0 0.0
        %2774 = vmatprep.subr.mxu0 0.0
        %2775 = vmatpush2.msra.mxu0 0.0
        %2776 = vmatprep.subr.mxu0 0.0
        %2777 = vmatpush2.msra.mxu0 0.0
        %2778 = vmatprep.subr.mxu0 0.0
        %2779 = vmatpush2.msra.mxu0 0.0
        %2780 = vmatprep.subr.mxu0 0.0
        %2781 = vmatpush2.msra.mxu0 0.0
        %2782 = vmatprep.subr.mxu0 0.0
        %2783 = vmatpush2.msra.mxu0 0.0
        %2784 = vmatprep.subr.mxu0 0.0
        %2785 = vmatpush2.msra.mxu0 0.0
        %2786 = vmatprep.subr.mxu0 0.0
        %2787 = vmatpush2.msra.mxu0 0.0
        %2788 = vmatprep.subr.mxu0 0.0
        %2789 = vmatpush2.msra.mxu0 0.0
        %2790 = vmatprep.subr.mxu0 0.0
        %2791 = vmatpush2.msra.mxu0 0.0
        %2792 = vmatprep.subr.mxu0 0.0
        %2793 = vmatpush2.msra.mxu0 0.0
        %2794 = vmatprep.subr.mxu0 0.0
        %2795 = vmatpush2.msra.mxu0 0.0
        %2796 = vmatprep.subr.mxu0 0.0
        %2797 = vmatpush2.msra.mxu0 0.0
        %2798 = vmatprep.subr.mxu0 0.0
        %2799 = vmatpush2.msra.mxu0 0.0
        %2800 = vmatprep.subr.mxu0 0.0
        %2801 = vmatpush2.msra.mxu0 0.0
        %2802 = vmatprep.subr.mxu0 0.0
        %2803 = vmatpush2.msra.mxu0 0.0
        %2804 = vmatprep.mubr.f32.mxu0 0.0
        %2805 = vmatmul.mubr.f32.gmra.mxu0 %v1374
        %v2806 = vpop.f32.mrf.mxu0
        %v2807 = vadd.f32 0.0, %v2806
        %v2808 = vpop.f32.mrf.mxu0
        %2809 = vdwg.mxu0
        %2810 = vmatprep.subr.mxu0 0.0
        %2811 = vmatpush1.msra.mxu0 0.0
        %2812 = vmatprep.subr.mxu0 0.0
        %2813 = vmatpush1.msra.mxu0 0.0
        %2814 = vmatprep.subr.mxu0 0.0
        %2815 = vmatpush1.msra.mxu0 0.0
        %2816 = vmatprep.subr.mxu0 0.0
        %2817 = vmatpush1.msra.mxu0 0.0
        %2818 = vmatprep.subr.mxu0 0.0
        %2819 = vmatpush1.msra.mxu0 0.0
        %2820 = vmatprep.subr.mxu0 0.0
        %2821 = vmatpush1.msra.mxu0 0.0
        %2822 = vmatprep.subr.mxu0 0.0
        %2823 = vmatpush1.msra.mxu0 0.0
        %2824 = vmatprep.subr.mxu0 0.0
        %2825 = vmatpush1.msra.mxu0 0.0
        %2826 = vmatprep.subr.mxu0 0.0
        %2827 = vmatpush1.msra.mxu0 0.0
        %2828 = vmatprep.subr.mxu0 0.0
        %2829 = vmatpush1.msra.mxu0 0.0
        %2830 = vmatprep.subr.mxu0 0.0
        %2831 = vmatpush1.msra.mxu0 0.0
        %2832 = vmatprep.subr.mxu0 0.0
        %2833 = vmatpush1.msra.mxu0 0.0
        %2834 = vmatprep.subr.mxu0 0.0
        %2835 = vmatpush1.msra.mxu0 0.0
        %2836 = vmatprep.subr.mxu0 0.0
        %2837 = vmatpush1.msra.mxu0 0.0
        %2838 = vmatprep.subr.mxu0 0.0
        %2839 = vmatpush1.msra.mxu0 0.0
        %2840 = vmatprep.subr.mxu0 0.0
        %2841 = vmatpush1.msra.mxu0 %v1966
        %2842 = vmatprep.subr.mxu0 0.0
        %2843 = vmatpush2.msra.mxu0 0.0
        %2844 = vmatprep.subr.mxu0 0.0
        %2845 = vmatpush2.msra.mxu0 0.0
        %2846 = vmatprep.subr.mxu0 0.0
        %2847 = vmatpush2.msra.mxu0 0.0
        %2848 = vmatprep.subr.mxu0 0.0
        %2849 = vmatpush2.msra.mxu0 0.0
        %2850 = vmatprep.subr.mxu0 0.0
        %2851 = vmatpush2.msra.mxu0 0.0
        %2852 = vmatprep.subr.mxu0 0.0
        %2853 = vmatpush2.msra.mxu0 0.0
        %2854 = vmatprep.subr.mxu0 0.0
        %2855 = vmatpush2.msra.mxu0 0.0
        %2856 = vmatprep.subr.mxu0 0.0
        %2857 = vmatpush2.msra.mxu0 0.0
        %2858 = vmatprep.subr.mxu0 0.0
        %2859 = vmatpush2.msra.mxu0 0.0
        %2860 = vmatprep.subr.mxu0 0.0
        %2861 = vmatpush2.msra.mxu0 0.0
        %2862 = vmatprep.subr.mxu0 0.0
        %2863 = vmatpush2.msra.mxu0 0.0
        %2864 = vmatprep.subr.mxu0 0.0
        %2865 = vmatpush2.msra.mxu0 0.0
        %2866 = vmatprep.subr.mxu0 0.0
        %2867 = vmatpush2.msra.mxu0 0.0
        %2868 = vmatprep.subr.mxu0 0.0
        %2869 = vmatpush2.msra.mxu0 0.0
        %2870 = vmatprep.subr.mxu0 0.0
        %2871 = vmatpush2.msra.mxu0 0.0
        %2872 = vmatprep.subr.mxu0 0.0
        %2873 = vmatpush2.msra.mxu0 0.0
        %2874 = vmatprep.mubr.f32.mxu0 0.0
        %2875 = vmatmul.mubr.f32.gmra.mxu0 %v1447
        %v2876 = vpop.f32.mrf.mxu0
        %v2877 = vadd.f32 0.0, %v2876
        %v2878 = vpop.f32.mrf.mxu0
        %2879 = vdwg.mxu0
        %2880 = vmatprep.subr.mxu0 0.0
        %2881 = vmatpush1.msra.mxu0 0.0
        %2882 = vmatprep.subr.mxu0 0.0
        %2883 = vmatpush1.msra.mxu0 0.0
        %2884 = vmatprep.subr.mxu0 0.0
        %2885 = vmatpush1.msra.mxu0 0.0
        %2886 = vmatprep.subr.mxu0 0.0
        %2887 = vmatpush1.msra.mxu0 0.0
        %2888 = vmatprep.subr.mxu0 0.0
        %2889 = vmatpush1.msra.mxu0 0.0
        %2890 = vmatprep.subr.mxu0 0.0
        %2891 = vmatpush1.msra.mxu0 0.0
        %2892 = vmatprep.subr.mxu0 0.0
        %2893 = vmatpush1.msra.mxu0 0.0
        %2894 = vmatprep.subr.mxu0 0.0
        %2895 = vmatpush1.msra.mxu0 0.0
        %2896 = vmatprep.subr.mxu0 0.0
        %2897 = vmatpush1.msra.mxu0 0.0
        %2898 = vmatprep.subr.mxu0 0.0
        %2899 = vmatpush1.msra.mxu0 0.0
        %2900 = vmatprep.subr.mxu0 0.0
        %2901 = vmatpush1.msra.mxu0 0.0
        %2902 = vmatprep.subr.mxu0 0.0
        %2903 = vmatpush1.msra.mxu0 0.0
        %2904 = vmatprep.subr.mxu0 0.0
        %2905 = vmatpush1.msra.mxu0 0.0
        %2906 = vmatprep.subr.mxu0 0.0
        %2907 = vmatpush1.msra.mxu0 0.0
        %2908 = vmatprep.subr.mxu0 0.0
        %2909 = vmatpush1.msra.mxu0 0.0
        %2910 = vmatprep.subr.mxu0 0.0
        %2911 = vmatpush1.msra.mxu0 %v1967
        %2912 = vmatprep.subr.mxu0 0.0
        %2913 = vmatpush2.msra.mxu0 0.0
        %2914 = vmatprep.subr.mxu0 0.0
        %2915 = vmatpush2.msra.mxu0 0.0
        %2916 = vmatprep.subr.mxu0 0.0
        %2917 = vmatpush2.msra.mxu0 0.0
        %2918 = vmatprep.subr.mxu0 0.0
        %2919 = vmatpush2.msra.mxu0 0.0
        %2920 = vmatprep.subr.mxu0 0.0
        %2921 = vmatpush2.msra.mxu0 0.0
        %2922 = vmatprep.subr.mxu0 0.0
        %2923 = vmatpush2.msra.mxu0 0.0
        %2924 = vmatprep.subr.mxu0 0.0
        %2925 = vmatpush2.msra.mxu0 0.0
        %2926 = vmatprep.subr.mxu0 0.0
        %2927 = vmatpush2.msra.mxu0 0.0
        %2928 = vmatprep.subr.mxu0 0.0
        %2929 = vmatpush2.msra.mxu0 0.0
        %2930 = vmatprep.subr.mxu0 0.0
        %2931 = vmatpush2.msra.mxu0 0.0
        %2932 = vmatprep.subr.mxu0 0.0
        %2933 = vmatpush2.msra.mxu0 0.0
        %2934 = vmatprep.subr.mxu0 0.0
        %2935 = vmatpush2.msra.mxu0 0.0
        %2936 = vmatprep.subr.mxu0 0.0
        %2937 = vmatpush2.msra.mxu0 0.0
        %2938 = vmatprep.subr.mxu0 0.0
        %2939 = vmatpush2.msra.mxu0 0.0
        %2940 = vmatprep.subr.mxu0 0.0
        %2941 = vmatpush2.msra.mxu0 0.0
        %2942 = vmatprep.subr.mxu0 0.0
        %2943 = vmatpush2.msra.mxu0 0.0
        %2944 = vmatprep.mubr.f32.mxu0 0.0
        %2945 = vmatmul.mubr.f32.gmra.mxu0 %v1520
        %v2946 = vpop.f32.mrf.mxu0
        %v2947 = vadd.f32 0.0, %v2946
        %v2948 = vpop.f32.mrf.mxu0
        %2949 = vdwg.mxu0
        %2950 = vmatprep.subr.mxu0 0.0
        %2951 = vmatpush1.msra.mxu0 0.0
        %2952 = vmatprep.subr.mxu0 0.0
        %2953 = vmatpush1.msra.mxu0 0.0
        %2954 = vmatprep.subr.mxu0 0.0
        %2955 = vmatpush1.msra.mxu0 0.0
        %2956 = vmatprep.subr.mxu0 0.0
        %2957 = vmatpush1.msra.mxu0 0.0
        %2958 = vmatprep.subr.mxu0 0.0
        %2959 = vmatpush1.msra.mxu0 0.0
        %2960 = vmatprep.subr.mxu0 0.0
        %2961 = vmatpush1.msra.mxu0 0.0
        %2962 = vmatprep.subr.mxu0 0.0
        %2963 = vmatpush1.msra.mxu0 0.0
        %2964 = vmatprep.subr.mxu0 0.0
        %2965 = vmatpush1.msra.mxu0 0.0
        %2966 = vmatprep.subr.mxu0 0.0
        %2967 = vmatpush1.msra.mxu0 0.0
        %2968 = vmatprep.subr.mxu0 0.0
        %2969 = vmatpush1.msra.mxu0 0.0
        %2970 = vmatprep.subr.mxu0 0.0
        %2971 = vmatpush1.msra.mxu0 0.0
        %2972 = vmatprep.subr.mxu0 0.0
        %2973 = vmatpush1.msra.mxu0 0.0
        %2974 = vmatprep.subr.mxu0 0.0
        %2975 = vmatpush1.msra.mxu0 0.0
        %2976 = vmatprep.subr.mxu0 0.0
        %2977 = vmatpush1.msra.mxu0 0.0
        %2978 = vmatprep.subr.mxu0 0.0
        %2979 = vmatpush1.msra.mxu0 0.0
        %2980 = vmatprep.subr.mxu0 0.0
        %2981 = vmatpush1.msra.mxu0 %v1968
        %2982 = vmatprep.subr.mxu0 0.0
        %2983 = vmatpush2.msra.mxu0 0.0
        %2984 = vmatprep.subr.mxu0 0.0
        %2985 = vmatpush2.msra.mxu0 0.0
        %2986 = vmatprep.subr.mxu0 0.0
        %2987 = vmatpush2.msra.mxu0 0.0
        %2988 = vmatprep.subr.mxu0 0.0
        %2989 = vmatpush2.msra.mxu0 0.0
        %2990 = vmatprep.subr.mxu0 0.0
        %2991 = vmatpush2.msra.mxu0 0.0
        %2992 = vmatprep.subr.mxu0 0.0
        %2993 = vmatpush2.msra.mxu0 0.0
        %2994 = vmatprep.subr.mxu0 0.0
        %2995 = vmatpush2.msra.mxu0 0.0
        %2996 = vmatprep.subr.mxu0 0.0
        %2997 = vmatpush2.msra.mxu0 0.0
        %2998 = vmatprep.subr.mxu0 0.0
        %2999 = vmatpush2.msra.mxu0 0.0
        %3000 = vmatprep.subr.mxu0 0.0
        %3001 = vmatpush2.msra.mxu0 0.0
        %3002 = vmatprep.subr.mxu0 0.0
        %3003 = vmatpush2.msra.mxu0 0.0
        %3004 = vmatprep.subr.mxu0 0.0
        %3005 = vmatpush2.msra.mxu0 0.0
        %3006 = vmatprep.subr.mxu0 0.0
        %3007 = vmatpush2.msra.mxu0 0.0
        %3008 = vmatprep.subr.mxu0 0.0
        %3009 = vmatpush2.msra.mxu0 0.0
        %3010 = vmatprep.subr.mxu0 0.0
        %3011 = vmatpush2.msra.mxu0 0.0
        %3012 = vmatprep.subr.mxu0 0.0
        %3013 = vmatpush2.msra.mxu0 0.0
        %3014 = vmatprep.mubr.f32.mxu0 0.0
        %3015 = vmatmul.mubr.f32.gmra.mxu0 %v1593
        %v3016 = vpop.f32.mrf.mxu0
        %v3017 = vadd.f32 0.0, %v3016
        %v3018 = vpop.f32.mrf.mxu0
        %3019 = vdwg.mxu0
        %3020 = vmatprep.subr.mxu0 0.0
        %3021 = vmatpush1.msra.mxu0 0.0
        %3022 = vmatprep.subr.mxu0 0.0
        %3023 = vmatpush1.msra.mxu0 0.0
        %3024 = vmatprep.subr.mxu0 0.0
        %3025 = vmatpush1.msra.mxu0 0.0
        %3026 = vmatprep.subr.mxu0 0.0
        %3027 = vmatpush1.msra.mxu0 0.0
        %3028 = vmatprep.subr.mxu0 0.0
        %3029 = vmatpush1.msra.mxu0 0.0
        %3030 = vmatprep.subr.mxu0 0.0
        %3031 = vmatpush1.msra.mxu0 0.0
        %3032 = vmatprep.subr.mxu0 0.0
        %3033 = vmatpush1.msra.mxu0 0.0
        %3034 = vmatprep.subr.mxu0 0.0
        %3035 = vmatpush1.msra.mxu0 0.0
        %3036 = vmatprep.subr.mxu0 0.0
        %3037 = vmatpush1.msra.mxu0 0.0
        %3038 = vmatprep.subr.mxu0 0.0
        %3039 = vmatpush1.msra.mxu0 0.0
        %3040 = vmatprep.subr.mxu0 0.0
        %3041 = vmatpush1.msra.mxu0 0.0
        %3042 = vmatprep.subr.mxu0 0.0
        %3043 = vmatpush1.msra.mxu0 0.0
        %3044 = vmatprep.subr.mxu0 0.0
        %3045 = vmatpush1.msra.mxu0 0.0
        %3046 = vmatprep.subr.mxu0 0.0
        %3047 = vmatpush1.msra.mxu0 0.0
        %3048 = vmatprep.subr.mxu0 0.0
        %3049 = vmatpush1.msra.mxu0 0.0
        %3050 = vmatprep.subr.mxu0 0.0
        %3051 = vmatpush1.msra.mxu0 %v1969
        %3052 = vmatprep.subr.mxu0 0.0
        %3053 = vmatpush2.msra.mxu0 0.0
        %3054 = vmatprep.subr.mxu0 0.0
        %3055 = vmatpush2.msra.mxu0 0.0
        %3056 = vmatprep.subr.mxu0 0.0
        %3057 = vmatpush2.msra.mxu0 0.0
        %3058 = vmatprep.subr.mxu0 0.0
        %3059 = vmatpush2.msra.mxu0 0.0
        %3060 = vmatprep.subr.mxu0 0.0
        %3061 = vmatpush2.msra.mxu0 0.0
        %3062 = vmatprep.subr.mxu0 0.0
        %3063 = vmatpush2.msra.mxu0 0.0
        %3064 = vmatprep.subr.mxu0 0.0
        %3065 = vmatpush2.msra.mxu0 0.0
        %3066 = vmatprep.subr.mxu0 0.0
        %3067 = vmatpush2.msra.mxu0 0.0
        %3068 = vmatprep.subr.mxu0 0.0
        %3069 = vmatpush2.msra.mxu0 0.0
        %3070 = vmatprep.subr.mxu0 0.0
        %3071 = vmatpush2.msra.mxu0 0.0
        %3072 = vmatprep.subr.mxu0 0.0
        %3073 = vmatpush2.msra.mxu0 0.0
        %3074 = vmatprep.subr.mxu0 0.0
        %3075 = vmatpush2.msra.mxu0 0.0
        %3076 = vmatprep.subr.mxu0 0.0
        %3077 = vmatpush2.msra.mxu0 0.0
        %3078 = vmatprep.subr.mxu0 0.0
        %3079 = vmatpush2.msra.mxu0 0.0
        %3080 = vmatprep.subr.mxu0 0.0
        %3081 = vmatpush2.msra.mxu0 0.0
        %3082 = vmatprep.subr.mxu0 0.0
        %3083 = vmatpush2.msra.mxu0 0.0
        %3084 = vmatprep.mubr.f32.mxu0 0.0
        %3085 = vmatmul.mubr.f32.gmra.mxu0 %v1666
        %v3086 = vpop.f32.mrf.mxu0
        %v3087 = vadd.f32 0.0, %v3086
        %v3088 = vpop.f32.mrf.mxu0
        %3089 = vdwg.mxu0
        %v3090 = vmul.f32 %v2037, %v370
        %v3091 = vmul.f32 %v2107, %v371
        %v3092 = vmul.f32 %v2177, %v372
        %v3093 = vmul.f32 %v2247, %v373
        %v3094 = vmul.f32 %v2317, %v374
        %v3095 = vmul.f32 %v2387, %v375
        %v3096 = vmul.f32 %v2457, %v376
        %v3097 = vmul.f32 %v2527, %v377
        %v3098 = vmul.f32 %v2597, %v378
        %v3099 = vmul.f32 %v2667, %v379
        %v3100 = vmul.f32 %v2737, %v380
        %v3101 = vmul.f32 %v2807, %v381
        %v3102 = vmul.f32 %v2877, %v382
        %v3103 = vmul.f32 %v2947, %v383
        %v3104 = vmul.f32 %v3017, %v384
        %v3105 = vmul.f32 %v3087, %v385
        %s3106 = scalar_lea.vmem [#allocation5], 128
        %v3107 = vld [vmem:[%s3106] sm:$0xff]
        %v3108 = vld [vmem:[%s3106 + $0x8] sm:$0xff]
        %v3109 = vld [vmem:[%s3106 + $0x10] sm:$0xff]
        %v3110 = vld [vmem:[%s3106 + $0x18] sm:$0xff]
        %v3111 = vld [vmem:[%s3106 + $0x20] sm:$0xff]
        %v3112 = vld [vmem:[%s3106 + $0x28] sm:$0xff]
        %v3113 = vld [vmem:[%s3106 + $0x30] sm:$0xff]
        %v3114 = vld [vmem:[%s3106 + $0x38] sm:$0xff]
        %v3115 = vld [vmem:[%s3106 + $0x40] sm:$0xff]
        %v3116 = vld [vmem:[%s3106 + $0x48] sm:$0xff]
        %v3117 = vld [vmem:[%s3106 + $0x50] sm:$0xff]
        %v3118 = vld [vmem:[%s3106 + $0x58] sm:$0xff]
        %v3119 = vld [vmem:[%s3106 + $0x60] sm:$0xff]
        %v3120 = vld [vmem:[%s3106 + $0x68] sm:$0xff]
        %v3121 = vld [vmem:[%s3106 + $0x70] sm:$0xff]
        %v3122 = vld [vmem:[%s3106 + $0x78] sm:$0xff]
        %s3123 = scalar_lea.vmem %s5, 1
        %v3124 = vld [vmem:[%s3123] sm:$0x1]
        %v3126 = vlaneseq
        %v3127 = vshrl.u32 %v3126, 7
        %v3128 = vsub.s32 0, %v3127
        %v3129 = vrot.slane %v3124, %v3128
        %3131 = vmatprep.subr.mxu0 0.0
        %3132 = vmatpush1.msra.mxu0 %v3122
        %3133 = vmatprep.subr.mxu0 0.0
        %3134 = vmatpush1.msra.mxu0 %v3121
        %3135 = vmatprep.subr.mxu0 0.0
        %3136 = vmatpush1.msra.mxu0 %v3120
        %3137 = vmatprep.subr.mxu0 0.0
        %3138 = vmatpush1.msra.mxu0 %v3119
        %3139 = vmatprep.subr.mxu0 0.0
        %3140 = vmatpush1.msra.mxu0 %v3118
        %3141 = vmatprep.subr.mxu0 0.0
        %3142 = vmatpush1.msra.mxu0 %v3117
        %3143 = vmatprep.subr.mxu0 0.0
        %3144 = vmatpush1.msra.mxu0 %v3116
        %3145 = vmatprep.subr.mxu0 0.0
        %3146 = vmatpush1.msra.mxu0 %v3115
        %3147 = vmatprep.subr.mxu0 0.0
        %3148 = vmatpush1.msra.mxu0 %v3114
        %3149 = vmatprep.subr.mxu0 0.0
        %3150 = vmatpush1.msra.mxu0 %v3113
        %3151 = vmatprep.subr.mxu0 0.0
        %3152 = vmatpush1.msra.mxu0 %v3112
        %3153 = vmatprep.subr.mxu0 0.0
        %3154 = vmatpush1.msra.mxu0 %v3111
        %3155 = vmatprep.subr.mxu0 0.0
        %3156 = vmatpush1.msra.mxu0 %v3110
        %3157 = vmatprep.subr.mxu0 0.0
        %3158 = vmatpush1.msra.mxu0 %v3109
        %3159 = vmatprep.subr.mxu0 0.0
        %3160 = vmatpush1.msra.mxu0 %v3108
        %3161 = vmatprep.subr.mxu0 0.0
        %3162 = vmatpush1.msra.mxu0 %v3107
        %3163 = vmatprep.subr.mxu0 0.0
        %3164 = vmatpush2.msra.mxu0 0.0
        %3165 = vmatprep.subr.mxu0 0.0
        %3166 = vmatpush2.msra.mxu0 0.0
        %3167 = vmatprep.subr.mxu0 0.0
        %3168 = vmatpush2.msra.mxu0 0.0
        %3169 = vmatprep.subr.mxu0 0.0
        %3170 = vmatpush2.msra.mxu0 0.0
        %3171 = vmatprep.subr.mxu0 0.0
        %3172 = vmatpush2.msra.mxu0 0.0
        %3173 = vmatprep.subr.mxu0 0.0
        %3174 = vmatpush2.msra.mxu0 0.0
        %3175 = vmatprep.subr.mxu0 0.0
        %3176 = vmatpush2.msra.mxu0 0.0
        %3177 = vmatprep.subr.mxu0 0.0
        %3178 = vmatpush2.msra.mxu0 0.0
        %3179 = vmatprep.subr.mxu0 0.0
        %3180 = vmatpush2.msra.mxu0 0.0
        %3181 = vmatprep.subr.mxu0 0.0
        %3182 = vmatpush2.msra.mxu0 0.0
        %3183 = vmatprep.subr.mxu0 0.0
        %3184 = vmatpush2.msra.mxu0 0.0
        %3185 = vmatprep.subr.mxu0 0.0
        %3186 = vmatpush2.msra.mxu0 0.0
        %3187 = vmatprep.subr.mxu0 0.0
        %3188 = vmatpush2.msra.mxu0 0.0
        %3189 = vmatprep.subr.mxu0 0.0
        %3190 = vmatpush2.msra.mxu0 0.0
        %3191 = vmatprep.subr.mxu0 0.0
        %3192 = vmatpush2.msra.mxu0 0.0
        %3193 = vmatprep.subr.mxu0 0.0
        %3194 = vmatpush2.msra.mxu0 0.0
        %3195 = vmatprep.mubr.f32.mxu0 0.0
        %3196 = vmatmul.mubr.f32.gmra.mxu0 %v3090
        %v3197 = vpop.f32.mrf.mxu0
        %v3198 = vadd.f32 %v3129, %v3197
        %v3199 = vpop.f32.mrf.mxu0
        %3200 = vmatprep.mubr.f32.mxu0 0.0
        %3201 = vmatmul.mubr.f32.gmra.mxu0 %v3091
        %v3202 = vpop.f32.mrf.mxu0
        %v3203 = vadd.f32 %v3129, %v3202
        %v3204 = vpop.f32.mrf.mxu0
        %3205 = vmatprep.mubr.f32.mxu0 0.0
        %3206 = vmatmul.mubr.f32.gmra.mxu0 %v3092
        %v3207 = vpop.f32.mrf.mxu0
        %v3208 = vadd.f32 %v3129, %v3207
        %v3209 = vpop.f32.mrf.mxu0
        %3210 = vmatprep.mubr.f32.mxu0 0.0
        %3211 = vmatmul.mubr.f32.gmra.mxu0 %v3093
        %v3212 = vpop.f32.mrf.mxu0
        %v3213 = vadd.f32 %v3129, %v3212
        %v3214 = vpop.f32.mrf.mxu0
        %3215 = vmatprep.mubr.f32.mxu0 0.0
        %3216 = vmatmul.mubr.f32.gmra.mxu0 %v3094
        %v3217 = vpop.f32.mrf.mxu0
        %v3218 = vadd.f32 %v3129, %v3217
        %v3219 = vpop.f32.mrf.mxu0
        %3220 = vmatprep.mubr.f32.mxu0 0.0
        %3221 = vmatmul.mubr.f32.gmra.mxu0 %v3095
        %v3222 = vpop.f32.mrf.mxu0
        %v3223 = vadd.f32 %v3129, %v3222
        %v3224 = vpop.f32.mrf.mxu0
        %3225 = vmatprep.mubr.f32.mxu0 0.0
        %3226 = vmatmul.mubr.f32.gmra.mxu0 %v3096
        %v3227 = vpop.f32.mrf.mxu0
        %v3228 = vadd.f32 %v3129, %v3227
        %v3229 = vpop.f32.mrf.mxu0
        %3230 = vmatprep.mubr.f32.mxu0 0.0
        %3231 = vmatmul.mubr.f32.gmra.mxu0 %v3097
        %v3232 = vpop.f32.mrf.mxu0
        %v3233 = vadd.f32 %v3129, %v3232
        %v3234 = vpop.f32.mrf.mxu0
        %3235 = vmatprep.mubr.f32.mxu0 0.0
        %3236 = vmatmul.mubr.f32.gmra.mxu0 %v3098
        %v3237 = vpop.f32.mrf.mxu0
        %v3238 = vadd.f32 %v3129, %v3237
        %v3239 = vpop.f32.mrf.mxu0
        %3240 = vmatprep.mubr.f32.mxu0 0.0
        %3241 = vmatmul.mubr.f32.gmra.mxu0 %v3099
        %v3242 = vpop.f32.mrf.mxu0
        %v3243 = vadd.f32 %v3129, %v3242
        %v3244 = vpop.f32.mrf.mxu0
        %3245 = vmatprep.mubr.f32.mxu0 0.0
        %3246 = vmatmul.mubr.f32.gmra.mxu0 %v3100
        %v3247 = vpop.f32.mrf.mxu0
        %v3248 = vadd.f32 %v3129, %v3247
        %v3249 = vpop.f32.mrf.mxu0
        %3250 = vmatprep.mubr.f32.mxu0 0.0
        %3251 = vmatmul.mubr.f32.gmra.mxu0 %v3101
        %v3252 = vpop.f32.mrf.mxu0
        %v3253 = vadd.f32 %v3129, %v3252
        %v3254 = vpop.f32.mrf.mxu0
        %3255 = vmatprep.mubr.f32.mxu0 0.0
        %3256 = vmatmul.mubr.f32.gmra.mxu0 %v3102
        %v3257 = vpop.f32.mrf.mxu0
        %v3258 = vadd.f32 %v3129, %v3257
        %v3259 = vpop.f32.mrf.mxu0
        %3260 = vmatprep.mubr.f32.mxu0 0.0
        %3261 = vmatmul.mubr.f32.gmra.mxu0 %v3103
        %v3262 = vpop.f32.mrf.mxu0
        %v3263 = vadd.f32 %v3129, %v3262
        %v3264 = vpop.f32.mrf.mxu0
        %3265 = vmatprep.mubr.f32.mxu0 0.0
        %3266 = vmatmul.mubr.f32.gmra.mxu0 %v3104
        %v3267 = vpop.f32.mrf.mxu0
        %v3268 = vadd.f32 %v3129, %v3267
        %v3269 = vpop.f32.mrf.mxu0
        %3270 = vmatprep.mubr.f32.mxu0 0.0
        %3271 = vmatmul.mubr.f32.gmra.mxu0 %v3105
        %v3272 = vpop.f32.mrf.mxu0
        %v3273 = vadd.f32 %v3129, %v3272
        %v3274 = vpop.f32.mrf.mxu0
        %3275 = vdwg.mxu0
        %vm3276 = vcmp.gt.f32.partialorder %v3198, 0.0
        %vm3277 = vcmp.gt.f32.partialorder %v3203, 0.0
        %vm3278 = vcmp.gt.f32.partialorder %v3208, 0.0
        %vm3279 = vcmp.gt.f32.partialorder %v3213, 0.0
        %vm3280 = vcmp.gt.f32.partialorder %v3218, 0.0
        %vm3281 = vcmp.gt.f32.partialorder %v3223, 0.0
        %vm3282 = vcmp.gt.f32.partialorder %v3228, 0.0
        %vm3283 = vcmp.gt.f32.partialorder %v3233, 0.0
        %vm3284 = vcmp.gt.f32.partialorder %v3238, 0.0
        %vm3285 = vcmp.gt.f32.partialorder %v3243, 0.0
        %vm3286 = vcmp.gt.f32.partialorder %v3248, 0.0
        %vm3287 = vcmp.gt.f32.partialorder %v3253, 0.0
        %vm3288 = vcmp.gt.f32.partialorder %v3258, 0.0
        %vm3289 = vcmp.gt.f32.partialorder %v3263, 0.0
        %vm3290 = vcmp.gt.f32.partialorder %v3268, 0.0
        %vm3291 = vcmp.gt.f32.partialorder %v3273, 0.0
        %v3292 = vmul.f32 %v3198, 0.01
        %v3293 = vmul.f32 %v3203, 0.01
        %v3294 = vmul.f32 %v3208, 0.01
        %v3295 = vmul.f32 %v3213, 0.01
        %v3296 = vmul.f32 %v3218, 0.01
        %v3297 = vmul.f32 %v3223, 0.01
        %v3298 = vmul.f32 %v3228, 0.01
        %v3299 = vmul.f32 %v3233, 0.01
        %v3300 = vmul.f32 %v3238, 0.01
        %v3301 = vmul.f32 %v3243, 0.01
        %v3302 = vmul.f32 %v3248, 0.01
        %v3303 = vmul.f32 %v3253, 0.01
        %v3304 = vmul.f32 %v3258, 0.01
        %v3305 = vmul.f32 %v3263, 0.01
        %v3306 = vmul.f32 %v3268, 0.01
        %v3307 = vmul.f32 %v3273, 0.01
        %v3308 = vsel %vm3276, %v3198, %v3292
        %v3309 = vsel %vm3277, %v3203, %v3293
        %v3310 = vsel %vm3278, %v3208, %v3294
        %v3311 = vsel %vm3279, %v3213, %v3295
        %v3312 = vsel %vm3280, %v3218, %v3296
        %v3313 = vsel %vm3281, %v3223, %v3297
        %v3314 = vsel %vm3282, %v3228, %v3298
        %v3315 = vsel %vm3283, %v3233, %v3299
        %v3316 = vsel %vm3284, %v3238, %v3300
        %v3317 = vsel %vm3285, %v3243, %v3301
        %v3318 = vsel %vm3286, %v3248, %v3302
        %v3319 = vsel %vm3287, %v3253, %v3303
        %v3320 = vsel %vm3288, %v3258, %v3304
        %v3321 = vsel %vm3289, %v3263, %v3305
        %v3322 = vsel %vm3290, %v3268, %v3306
        %v3323 = vsel %vm3291, %v3273, %v3307
        %v3324 = vrot.slane %v3308, 4
        %v3325 = vadd.f32 %v3308, %v3324
        %v3326 = vrot.slane %v3325, 2
        %v3327 = vadd.f32 %v3325, %v3326
        %v3328 = vrot.slane %v3327, 1
        %v3329 = vadd.f32 %v3327, %v3328
        %v3330 = vrot.slane %v3309, 4
        %v3331 = vadd.f32 %v3309, %v3330
        %v3332 = vrot.slane %v3331, 2
        %v3333 = vadd.f32 %v3331, %v3332
        %v3334 = vrot.slane %v3333, 1
        %v3335 = vadd.f32 %v3333, %v3334
        %v3336 = vrot.slane %v3310, 4
        %v3337 = vadd.f32 %v3310, %v3336
        %v3338 = vrot.slane %v3337, 2
        %v3339 = vadd.f32 %v3337, %v3338
        %v3340 = vrot.slane %v3339, 1
        %v3341 = vadd.f32 %v3339, %v3340
        %v3342 = vrot.slane %v3311, 4
        %v3343 = vadd.f32 %v3311, %v3342
        %v3344 = vrot.slane %v3343, 2
        %v3345 = vadd.f32 %v3343, %v3344
        %v3346 = vrot.slane %v3345, 1
        %v3347 = vadd.f32 %v3345, %v3346
        %v3348 = vrot.slane %v3312, 4
        %v3349 = vadd.f32 %v3312, %v3348
        %v3350 = vrot.slane %v3349, 2
        %v3351 = vadd.f32 %v3349, %v3350
        %v3352 = vrot.slane %v3351, 1
        %v3353 = vadd.f32 %v3351, %v3352
        %v3354 = vrot.slane %v3313, 4
        %v3355 = vadd.f32 %v3313, %v3354
        %v3356 = vrot.slane %v3355, 2
        %v3357 = vadd.f32 %v3355, %v3356
        %v3358 = vrot.slane %v3357, 1
        %v3359 = vadd.f32 %v3357, %v3358
        %v3360 = vrot.slane %v3314, 4
        %v3361 = vadd.f32 %v3314, %v3360
        %v3362 = vrot.slane %v3361, 2
        %v3363 = vadd.f32 %v3361, %v3362
        %v3364 = vrot.slane %v3363, 1
        %v3365 = vadd.f32 %v3363, %v3364
        %v3366 = vrot.slane %v3315, 4
        %v3367 = vadd.f32 %v3315, %v3366
        %v3368 = vrot.slane %v3367, 2
        %v3369 = vadd.f32 %v3367, %v3368
        %v3370 = vrot.slane %v3369, 1
        %v3371 = vadd.f32 %v3369, %v3370
        %v3372 = vrot.slane %v3316, 4
        %v3373 = vadd.f32 %v3316, %v3372
        %v3374 = vrot.slane %v3373, 2
        %v3375 = vadd.f32 %v3373, %v3374
        %v3376 = vrot.slane %v3375, 1
        %v3377 = vadd.f32 %v3375, %v3376
        %v3378 = vrot.slane %v3317, 4
        %v3379 = vadd.f32 %v3317, %v3378
        %v3380 = vrot.slane %v3379, 2
        %v3381 = vadd.f32 %v3379, %v3380
        %v3382 = vrot.slane %v3381, 1
        %v3383 = vadd.f32 %v3381, %v3382
        %v3384 = vrot.slane %v3318, 4
        %v3385 = vadd.f32 %v3318, %v3384
        %v3386 = vrot.slane %v3385, 2
        %v3387 = vadd.f32 %v3385, %v3386
        %v3388 = vrot.slane %v3387, 1
        %v3389 = vadd.f32 %v3387, %v3388
        %v3390 = vrot.slane %v3319, 4
        %v3391 = vadd.f32 %v3319, %v3390
        %v3392 = vrot.slane %v3391, 2
        %v3393 = vadd.f32 %v3391, %v3392
        %v3394 = vrot.slane %v3393, 1
        %v3395 = vadd.f32 %v3393, %v3394
        %v3396 = vrot.slane %v3320, 4
        %v3397 = vadd.f32 %v3320, %v3396
        %v3398 = vrot.slane %v3397, 2
        %v3399 = vadd.f32 %v3397, %v3398
        %v3400 = vrot.slane %v3399, 1
        %v3401 = vadd.f32 %v3399, %v3400
        %v3402 = vrot.slane %v3321, 4
        %v3403 = vadd.f32 %v3321, %v3402
        %v3404 = vrot.slane %v3403, 2
        %v3405 = vadd.f32 %v3403, %v3404
        %v3406 = vrot.slane %v3405, 1
        %v3407 = vadd.f32 %v3405, %v3406
        %v3408 = vrot.slane %v3322, 4
        %v3409 = vadd.f32 %v3322, %v3408
        %v3410 = vrot.slane %v3409, 2
        %v3411 = vadd.f32 %v3409, %v3410
        %v3412 = vrot.slane %v3411, 1
        %v3413 = vadd.f32 %v3411, %v3412
        %v3414 = vrot.slane %v3323, 4
        %v3415 = vadd.f32 %v3323, %v3414
        %v3416 = vrot.slane %v3415, 2
        %v3417 = vadd.f32 %v3415, %v3416
        %v3418 = vrot.slane %v3417, 1
        %v3419 = vadd.f32 %v3417, %v3418
        %v3420 = vrcp.pop 8.0
        %v3421 = vmul.f32 %v3329, %v3420
        %v3422 = vmul.f32 %v3335, %v3420
        %v3423 = vmul.f32 %v3341, %v3420
        %v3424 = vmul.f32 %v3347, %v3420
        %v3425 = vmul.f32 %v3353, %v3420
        %v3426 = vmul.f32 %v3359, %v3420
        %v3427 = vmul.f32 %v3365, %v3420
        %v3428 = vmul.f32 %v3371, %v3420
        %v3429 = vmul.f32 %v3377, %v3420
        %v3430 = vmul.f32 %v3383, %v3420
        %v3431 = vmul.f32 %v3389, %v3420
        %v3432 = vmul.f32 %v3395, %v3420
        %v3433 = vmul.f32 %v3401, %v3420
        %v3434 = vmul.f32 %v3407, %v3420
        %v3435 = vmul.f32 %v3413, %v3420
        %v3436 = vmul.f32 %v3419, %v3420
        %vm3437 = vcmp.gt.f32.partialorder %v3421, 0.0
        %vm3438 = vcmp.gt.f32.partialorder %v3422, 0.0
        %vm3439 = vcmp.gt.f32.partialorder %v3423, 0.0
        %vm3440 = vcmp.gt.f32.partialorder %v3424, 0.0
        %vm3441 = vcmp.gt.f32.partialorder %v3425, 0.0
        %vm3442 = vcmp.gt.f32.partialorder %v3426, 0.0
        %vm3443 = vcmp.gt.f32.partialorder %v3427, 0.0
        %vm3444 = vcmp.gt.f32.partialorder %v3428, 0.0
        %vm3445 = vcmp.gt.f32.partialorder %v3429, 0.0
        %vm3446 = vcmp.gt.f32.partialorder %v3430, 0.0
        %vm3447 = vcmp.gt.f32.partialorder %v3431, 0.0
        %vm3448 = vcmp.gt.f32.partialorder %v3432, 0.0
        %vm3449 = vcmp.gt.f32.partialorder %v3433, 0.0
        %vm3450 = vcmp.gt.f32.partialorder %v3434, 0.0
        %vm3451 = vcmp.gt.f32.partialorder %v3435, 0.0
        %vm3452 = vcmp.gt.f32.partialorder %v3436, 0.0
        %v3453 = vmul.f32 %v3421, 0.01
        %v3454 = vmul.f32 %v3422, 0.01
        %v3455 = vmul.f32 %v3423, 0.01
        %v3456 = vmul.f32 %v3424, 0.01
        %v3457 = vmul.f32 %v3425, 0.01
        %v3458 = vmul.f32 %v3426, 0.01
        %v3459 = vmul.f32 %v3427, 0.01
        %v3460 = vmul.f32 %v3428, 0.01
        %v3461 = vmul.f32 %v3429, 0.01
        %v3462 = vmul.f32 %v3430, 0.01
        %v3463 = vmul.f32 %v3431, 0.01
        %v3464 = vmul.f32 %v3432, 0.01
        %v3465 = vmul.f32 %v3433, 0.01
        %v3466 = vmul.f32 %v3434, 0.01
        %v3467 = vmul.f32 %v3435, 0.01
        %v3468 = vmul.f32 %v3436, 0.01
        %v3469 = vsel %vm3437, %v3421, %v3453
        %v3470 = vsel %vm3438, %v3422, %v3454
        %v3471 = vsel %vm3439, %v3423, %v3455
        %v3472 = vsel %vm3440, %v3424, %v3456
        %v3473 = vsel %vm3441, %v3425, %v3457
        %v3474 = vsel %vm3442, %v3426, %v3458
        %v3475 = vsel %vm3443, %v3427, %v3459
        %v3476 = vsel %vm3444, %v3428, %v3460
        %v3477 = vsel %vm3445, %v3429, %v3461
        %v3478 = vsel %vm3446, %v3430, %v3462
        %v3479 = vsel %vm3447, %v3431, %v3463
        %v3480 = vsel %vm3448, %v3432, %v3464
        %v3481 = vsel %vm3449, %v3433, %v3465
        %v3482 = vsel %vm3450, %v3434, %v3466
        %v3483 = vsel %vm3451, %v3435, %v3467
        %v3484 = vsel %vm3452, %v3436, %v3468
        %vm3501 = vcmask 1041409
        %v3502 = vsel %vm3501, %v3470, %v3469
        %vm3503 = vcmask 1042434
        %v3504 = vsel %vm3503, %v3471, %v3502
        %vm3505 = vcmask 1043459
        %v3506 = vsel %vm3505, %v3472, %v3504
        %vm3507 = vcmask 1044484
        %v3508 = vsel %vm3507, %v3473, %v3506
        %vm3509 = vcmask 1045509
        %v3510 = vsel %vm3509, %v3474, %v3508
        %vm3511 = vcmask 1046534
        %v3512 = vsel %vm3511, %v3475, %v3510
        %vm3513 = vcmask 1047559
        %v3514 = vsel %vm3513, %v3476, %v3512
        %v3515 = vsel %vm3501, %v3478, %v3477
        %v3516 = vsel %vm3503, %v3479, %v3515
        %v3517 = vsel %vm3505, %v3480, %v3516
        %v3518 = vsel %vm3507, %v3481, %v3517
        %v3519 = vsel %vm3509, %v3482, %v3518
        %v3520 = vsel %vm3511, %v3483, %v3519
        %v3521 = vsel %vm3513, %v3484, %v3520
        %3524 = vst [vmem:[%s291] sm:$0xff] %v3514
        %3525 = vst [vmem:[%s291 + $0x8] sm:$0xff] %v3521
        %s3526 = sand.u32 %s166, 1
        %s3527 = scalar_lea.sflag [#allocation4], %s3526
        %s3528 = sand.u32 %s166, 1
        %s3529 = smul.addr %s3528, 16
        %s3530 = scalar_lea.vmem [#allocation7], %s3529
        // Predicated region
        $region53: #{tpu_custom_call.1} parent=43 // pred_check
          %p3531 = pneg %p176
        $region54: #{tpu_custom_call.1} parent=43 // pred_check_branch
          %3533 = sbr.rel (%p3531) target = $region56
        $region55: #{tpu_custom_call.1} parent=43 // pred_region
          %s3534 = smul.u32 2, %s22
          %s3536 = ssub.s32 256, 256
          %3537 = vsyncadd %s3527, %s3536
          %s3538 = smul.addr %s3534, 128
          %s3539 = scalar_lea.hbm %s6, %s3538
          %s3540 = sshll.u32 %s3530, 4
          %s3541 = int_to_ptr.vmem [resolvable:$true] %s3540
          %3546 = dma.vmem_to_hbm [thread:$0]  %s3541, 256, %s3539, %s3527, 128, 128, 8
        $region56: #{tpu_custom_call.1} parent=43 // pred_fallthru
          _
      $region44: #{tpu_custom_call.1} parent=5 // pred_fallthru
        _
      %p3547 = scmp.le.s32.totalorder 2, %s17
      // Predicated region
      $region57: #{tpu_custom_call.1} parent=5 // pred_check
        %p3548 = pneg %p3547
      $region58: #{tpu_custom_call.1} parent=5 // pred_check_branch
        %3550 = sbr.rel (%p3548) target = $region60
      $region59: #{tpu_custom_call.1} parent=5 // pred_region
        %s3551 = ssub.s32 %s17, 2
        // Predicated region
        $region61: #{tpu_custom_call.1} parent=59 // pred_check
          %p3552 = pneg %p182
        $region62: #{tpu_custom_call.1} parent=59 // pred_check_branch
          %3554 = sbr.rel (%p3552) target = $region64
        $region63: #{tpu_custom_call.1} parent=59 // pred_region
          %s3555 = sand.u32 %s167, 1
          %s3556 = scalar_lea.sflag [#allocation4], %s3555
          %s3557 = sand.u32 %s167, 1
          %s3558 = smul.addr %s3557, 16
          %s3559 = scalar_lea.vmem [#allocation7], %s3558
          %3560 = dma.done %s3556, 256
        $region64: #{tpu_custom_call.1} parent=59 // pred_fallthru
          _
      $region60: #{tpu_custom_call.1} parent=5 // pred_fallthru
        _
    $region6: #{tpu_custom_call.1} parent=1 // loop_footer
      %s21 = sadd.s32 1, %s17
    $region7: #{tpu_custom_call.1} parent=1 // loop_footer_branch
      %16 = sbr.rel target = $region3
    $region8: #{tpu_custom_call.1} parent=1 // loop_exit
      _
    %3561 = vsyncpa [#allocation3], 1
    %s3562 = scalar_lea.sflag [#allocation3], 1
    %3563 = vsyncpa %s3562, 1
    %3564 = vsyncpa [#allocation6], 1
    %3565 = vsyncpa [#allocation4], 1
    %s3566 = scalar_lea.sflag [#allocation4], 1
    %3567 = vsyncpa %s3566, 1

</llo_original>
